<compile_context>
chip_gen: v7x
topology: tpu7x:2x2x1
jax: 0.10.0
libtpu: 0.0.40
codegen_flags: <defaults>
</compile_context>

<pallas_src>
import numpy as np
import jax
import jax.numpy as jnp
from jax.experimental import pallas as pl
from jax.experimental.pallas import tpu as pltpu


# ----------------------------------------------------------------------------
# Host-side glue: wav2vec2-style span mask generation (mirrors
# _compute_mask_indices used by the torch module; done with NumPy there too).
# ----------------------------------------------------------------------------
def _compute_mask_indices(rng, shape, mask_prob, mask_length, min_masks=0):
    batch_size, sequence_length = shape
    mask = np.zeros(shape, dtype=bool)
    eff_len = min(mask_length, sequence_length)
    for b in range(batch_size):
        num_spans = int(mask_prob * sequence_length / eff_len + rng.random())
        num_spans = max(num_spans, min_masks)
        if num_spans * eff_len > sequence_length:
            num_spans = sequence_length // eff_len
        if num_spans <= 0:
            continue
        starts = rng.choice(sequence_length - eff_len + 1, size=num_spans,
                            replace=False)
        for s in starts:
            mask[b, s:s + eff_len] = True
    return mask


# ----------------------------------------------------------------------------
# Pallas kernel: per-(batch, L-tile) elementwise masking
# ----------------------------------------------------------------------------
def _specaugment_kernel(flags_ref, x_ref, tm_ref, fm_ref, emb_ref, o_ref):
    # flags_ref: (B, n_l_tiles) int32 in SMEM (scalar-prefetched):
    #   nonzero iff this tile contains any time-masked row or the batch has
    #   any feature-masked column.
    touched = flags_ref[pl.program_id(0), pl.program_id(1)] != 0

    @pl.when(touched)
    def _():
        x = x_ref[0]                 # (TL, D)   x.dtype
        tm = tm_ref[0] != 0          # (TL, 1)   bool, time mask
        fm = fm_ref[0] != 0          # (1,  D)   bool, feature mask
        out = jnp.where(tm, emb_ref[...], x)          # broadcast -> (TL, D)
        o_ref[0] = jnp.where(fm, jnp.zeros_like(out), out)

    @pl.when(jnp.logical_not(touched))
    def _():
        # Untouched tile: pure copy-through (skip the selects).
        o_ref[0] = x_ref[0]


def _choose_tile_l(L, D, itemsize):
    """~1 MiB (TL, D) blocks: double-buffered x+out ~= 4 MiB VMEM, safe on
    v5e (16 MiB scoped default), v6e (32 MiB) and v7x (64 MiB physical)."""
    target_bytes = 1 << 20
    tl = target_bytes // max(D * itemsize, 1)
    tl = max(8, min(tl, L, 2048))
    tl = (tl // 8) * 8                      # sublane-aligned
    # Prefer a tile that divides L so every block (and store) is full.
    t = tl
    while L % t != 0 and t > 8:
        t -= 8
    return t if L % t == 0 else tl


def specaugment_apply(x, time_mask, feature_mask, masked_spec_embed,
                      training=True, tile_l=None,
                      min_bytes_for_kernel=256 * 1024):
    """x: (B, L, D); time_mask: (B, L) bool; feature_mask: (B, D) bool.

    For best performance D should be a multiple of 128 (lane-dense stores)."""
    if not training:
        return x
    B, L, D = x.shape
    emb = masked_spec_embed.astype(x.dtype).reshape(1, D)
    tmask_b = time_mask.astype(bool)
    fmask_b = feature_mask.astype(bool)

    # Tiny inputs: a fused XLA elementwise beats kernel-launch + grid overhead.
    if x.size * x.dtype.itemsize < min_bytes_for_kernel:
        out = jnp.where(tmask_b[:, :, None], emb[None], x)
        return jnp.where(fmask_b[:, None, :], jnp.zeros((), x.dtype), out)

    TL = tile_l or _choose_tile_l(L, D, x.dtype.itemsize)
    n_t = pl.cdiv(L, TL)

    # Per-(batch, L-tile) "any mask touches this tile" flags (scalar prefetch).
    pad = n_t * TL - L
    tpad = jnp.pad(tmask_b, ((0, 0), (0, pad))) if pad else tmask_b
    tile_any = tpad.reshape(B, n_t, TL).any(axis=-1)          # (B, n_t)
    feat_any = fmask_b.any(axis=-1, keepdims=True)            # (B, 1)
    flags = (tile_any | feat_any).astype(jnp.int32)           # (B, n_t)

    # int8 masks: 4x fewer HBM bytes than f32, used directly as predicates.
    tmask = tmask_b.astype(jnp.int8).reshape(B, L, 1)
    fmask = fmask_b.astype(jnp.int8).reshape(B, 1, D)

    return pl.pallas_call(
        _specaugment_kernel,
        out_shape=jax.ShapeDtypeStruct((B, L, D), x.dtype),
        grid_spec=pltpu.PrefetchScalarGridSpec(
            num_scalar_prefetch=1,
            grid=(B, n_t),
            in_specs=[
                pl.BlockSpec((1, TL, D), lambda b, t, flags: (b, t, 0)),  # x
                pl.BlockSpec((1, TL, 1), lambda b, t, flags: (b, t, 0)),  # tm
                pl.BlockSpec((1, 1, D), lambda b, t, flags: (b, 0, 0)),   # fm
                pl.BlockSpec((1, D), lambda b, t, flags: (0, 0)),         # emb
            ],
            out_specs=pl.BlockSpec((1, TL, D), lambda b, t, flags: (b, t, 0)),
        ),
        compiler_params=pltpu.CompilerParams(
            dimension_semantics=("parallel", "parallel")),
    )(flags, x, tmask, fmask, emb)


if __name__ == "__main__":
    # Module hyper-parameters (from Specaugment.__init__)
    mask_time_length = 15
    mask_time_prob = 0.08
    observe_time_prob = 0.0
    mask_feature_length = 64
    mask_feature_prob = 0.05

    # Shapes: small but large enough to exercise the tiled Pallas path
    # (2 * 4096 * 256 * 4B = 8 MiB; TL=1024 -> grid (2, 4)).
    B, L, D = 2, 4096, 256

    key = jax.random.PRNGKey(0)
    kx, kp = jax.random.split(key)
    x = jax.random.normal(kx, (B, L, D), dtype=jnp.float32)
    # nn.Parameter(torch.FloatTensor(dim).uniform_()) -> deterministic uniform init
    masked_spec_embed = jax.random.uniform(kp, (D,), dtype=jnp.float32)

    # Deterministic host-side mask generation (as in the torch module).
    rng = np.random.default_rng(0)
    time_mask = _compute_mask_indices(rng, (B, L), mask_time_prob,
                                      mask_time_length, min_masks=2)
    flip_mask = rng.random((B, L)) > observe_time_prob   # always True (prob=0.0)
    time_mask = time_mask & flip_mask
    feature_mask = _compute_mask_indices(rng, (B, D), mask_feature_prob,
                                         mask_feature_length, min_masks=1)

    out = specaugment_apply(x, jnp.asarray(time_mask),
                            jnp.asarray(feature_mask), masked_spec_embed,
                            training=True)
    out = jax.block_until_ready(out)

    # Pure-JAX reference
    ref = jnp.where(jnp.asarray(time_mask)[:, :, None],
                    masked_spec_embed[None, None, :].astype(x.dtype), x)
    ref = jnp.where(jnp.asarray(feature_mask)[:, None, :], 0.0, ref)

    assert out.shape == x.shape and out.dtype == x.dtype
    np.testing.assert_allclose(np.asarray(out), np.asarray(ref),
                               rtol=1e-6, atol=1e-6)
    print("KERNEL_OK")
</pallas_src>

<mosaic_0001>
module attributes {stable_mosaic.version = 11 : i64} {
  func.func @_specaugment_kernel(%arg0: i32, %arg1: i32, %arg2: memref<2x4xi32, #tpu.memory_space<smem>>, %arg3: memref<1x1024x256xf32, #tpu.memory_space<vmem>>, %arg4: memref<1x1024x1xi8, #tpu.memory_space<vmem>>, %arg5: memref<1x1x256xi8, #tpu.memory_space<vmem>>, %arg6: memref<1x256xf32, #tpu.memory_space<vmem>>, %arg7: memref<1x1024x256xf32, #tpu.memory_space<vmem>>) attributes {dimension_semantics = [#tpu.dimension_semantics<parallel>, #tpu.dimension_semantics<parallel>], iteration_bounds = array<i64: 2, 4>, scalar_prefetch = 1 : i64, scratch_operands = 0 : i64, tpu.core_type = #tpu.core_type<tc>, window_params = [{transform_indices = @transform_0, window_bounds = array<i64: 1, 1024, 256>}, {transform_indices = @transform_1, window_bounds = array<i64: 1, 1024, 1>}, {transform_indices = @transform_2, window_bounds = array<i64: 1, 1, 256>}, {pipeline_mode = #tpu.pipeline_mode<synchronous>, transform_indices = @transform_3, window_bounds = array<i64: 1, 256>}, {transform_indices = @transform_4, window_bounds = array<i64: 1, 1024, 256>}]} {
    %0 = arith.index_cast %arg0 : i32 to index
    %1 = arith.index_cast %arg1 : i32 to index
    %2 = memref.load %arg2[%0, %1] : memref<2x4xi32, #tpu.memory_space<smem>>
    %c0_i32 = arith.constant 0 : i32
    %3 = arith.cmpi ne, %2, %c0_i32 : i32
    %4 = arith.extui %3 : i1 to i32
    %c0_i32_0 = arith.constant 0 : i32
    %5 = arith.cmpi ne, %4, %c0_i32_0 : i32
    scf.if %5 {
      %c0 = arith.constant 0 : index
      %c0_2 = arith.constant 0 : index
      %c0_3 = arith.constant 0 : index
      %9 = vector.load %arg3[%c0, %c0_2, %c0_3] : memref<1x1024x256xf32, #tpu.memory_space<vmem>>, vector<1x1024x256xf32>
      %10 = vector.shape_cast %9 : vector<1x1024x256xf32> to vector<1024x256xf32>
      %c0_4 = arith.constant 0 : index
      %c0_5 = arith.constant 0 : index
      %c0_6 = arith.constant 0 : index
      %11 = vector.load %arg4[%c0_4, %c0_5, %c0_6] : memref<1x1024x1xi8, #tpu.memory_space<vmem>>, vector<1x1024x1xi8>
      %12 = vector.shape_cast %11 : vector<1x1024x1xi8> to vector<1024x1xi8>
      %c0_i8 = arith.constant 0 : i8
      %13 = vector.broadcast %c0_i8 : i8 to vector<1024x1xi8>
      %14 = arith.cmpi ne, %12, %13 : vector<1024x1xi8>
      %c0_7 = arith.constant 0 : index
      %c0_8 = arith.constant 0 : index
      %c0_9 = arith.constant 0 : index
      %15 = vector.load %arg5[%c0_7, %c0_8, %c0_9] : memref<1x1x256xi8, #tpu.memory_space<vmem>>, vector<1x1x256xi8>
      %16 = vector.shape_cast %15 : vector<1x1x256xi8> to vector<1x256xi8>
      %c0_i8_10 = arith.constant 0 : i8
      %17 = vector.broadcast %c0_i8_10 : i8 to vector<1x256xi8>
      %18 = arith.cmpi ne, %16, %17 : vector<1x256xi8>
      %c0_11 = arith.constant 0 : index
      %c0_12 = arith.constant 0 : index
      %19 = vector.load %arg6[%c0_11, %c0_12] : memref<1x256xf32, #tpu.memory_space<vmem>>, vector<1x256xf32>
      %20 = vector.shape_cast %14 : vector<1024x1xi1> to vector<1024x1xi1>
      %21 = vector.broadcast %20 : vector<1024x1xi1> to vector<1024x256xi1>
      %22 = vector.shape_cast %19 : vector<1x256xf32> to vector<1x256xf32>
      %23 = vector.broadcast %22 : vector<1x256xf32> to vector<1024x256xf32>
      %24 = arith.select %21, %23, %10 : vector<1024x256xi1>, vector<1024x256xf32>
      %cst = arith.constant 0.000000e+00 : f32
      %25 = vector.broadcast %cst : f32 to vector<1024x256xf32>
      %26 = vector.shape_cast %18 : vector<1x256xi1> to vector<1x256xi1>
      %27 = vector.broadcast %26 : vector<1x256xi1> to vector<1024x256xi1>
      %28 = arith.select %27, %25, %24 : vector<1024x256xi1>, vector<1024x256xf32>
      %c0_13 = arith.constant 0 : index
      %c0_14 = arith.constant 0 : index
      %c0_15 = arith.constant 0 : index
      %29 = vector.load %arg7[%c0_13, %c0_14, %c0_15] : memref<1x1024x256xf32, #tpu.memory_space<vmem>>, vector<1x1024x256xf32>
      %30 = vector.shape_cast %29 : vector<1x1024x256xf32> to vector<1024x256xf32>
      %31 = vector.shape_cast %28 : vector<1024x256xf32> to vector<1x1024x256xf32>
      tpu.vector_store %arg7[%c0_13, %c0_14, %c0_15], %31 {strides = array<i32>} : memref<1x1024x256xf32, #tpu.memory_space<vmem>>, vector<1x1024x256xf32>,
    } else {
    }
    %true = arith.constant true
    %6 = arith.xori %3, %true : i1
    %7 = arith.extui %6 : i1 to i32
    %c0_i32_1 = arith.constant 0 : i32
    %8 = arith.cmpi ne, %7, %c0_i32_1 : i32
    scf.if %8 {
      %c0 = arith.constant 0 : index
      %c0_2 = arith.constant 0 : index
      %c0_3 = arith.constant 0 : index
      %9 = vector.load %arg3[%c0, %c0_2, %c0_3] : memref<1x1024x256xf32, #tpu.memory_space<vmem>>, vector<1x1024x256xf32>
      %10 = vector.shape_cast %9 : vector<1x1024x256xf32> to vector<1024x256xf32>
      %c0_4 = arith.constant 0 : index
      %c0_5 = arith.constant 0 : index
      %c0_6 = arith.constant 0 : index
      %11 = vector.load %arg7[%c0_4, %c0_5, %c0_6] : memref<1x1024x256xf32, #tpu.memory_space<vmem>>, vector<1x1024x256xf32>
      %12 = vector.shape_cast %11 : vector<1x1024x256xf32> to vector<1024x256xf32>
      %13 = vector.shape_cast %10 : vector<1024x256xf32> to vector<1x1024x256xf32>
      tpu.vector_store %arg7[%c0_4, %c0_5, %c0_6], %13 {strides = array<i32>} : memref<1x1024x256xf32, #tpu.memory_space<vmem>>, vector<1x1024x256xf32>,
    } else {
    }
    return
  }
  func.func @transform_0(%arg0: i32, %arg1: i32, %arg2: memref<2x4xi32, #tpu.memory_space<smem>>) -> (i32, i32, i32) {
    %c0_i32 = arith.constant 0 : i32
    %c0_i32_0 = arith.constant 0 : i32
    return %arg0, %arg1, %c0_i32 : i32, i32, i32
  }
  func.func @transform_1(%arg0: i32, %arg1: i32, %arg2: memref<2x4xi32, #tpu.memory_space<smem>>) -> (i32, i32, i32) {
    %c0_i32 = arith.constant 0 : i32
    %c0_i32_0 = arith.constant 0 : i32
    return %arg0, %arg1, %c0_i32 : i32, i32, i32
  }
  func.func @transform_2(%arg0: i32, %arg1: i32, %arg2: memref<2x4xi32, #tpu.memory_space<smem>>) -> (i32, i32, i32) {
    %c0_i32 = arith.constant 0 : i32
    %c0_i32_0 = arith.constant 0 : i32
    %c0_i32_1 = arith.constant 0 : i32
    return %arg0, %c0_i32, %c0_i32_0 : i32, i32, i32
  }
  func.func @transform_3(%arg0: i32, %arg1: i32, %arg2: memref<2x4xi32, #tpu.memory_space<smem>>) -> (i32, i32) {
    %c0_i32 = arith.constant 0 : i32
    %c0_i32_0 = arith.constant 0 : i32
    %c0_i32_1 = arith.constant 0 : i32
    return %c0_i32, %c0_i32_0 : i32, i32
  }
  func.func @transform_4(%arg0: i32, %arg1: i32, %arg2: memref<2x4xi32, #tpu.memory_space<smem>>) -> (i32, i32, i32) {
    %c0_i32 = arith.constant 0 : i32
    %c0_i32_0 = arith.constant 0 : i32
    return %arg0, %arg1, %c0_i32 : i32, i32, i32
  }
}

</mosaic_0001>

<llo_original>
// kernel: tpu_custom_call.1
$region0: #{tpu_custom_call.1}
  #allocation0 [shape = 'u32[]', space=smem, size = 0x4, offset = 0x4, fixed_abs, tag = 'smem constant byte address 0x4 - core index']
  #allocation1 [shape = 'u32[144,128]{1,0:T(1,128)}', space=vmem, size = 0x12000, scoped, tag = 'internal scratch']
  #allocation2 [shape = 's32[1]{0}', space=sflag, size = 0x4, scoped, tag = 'scoped memory for tpu_custom_call.1']
  #allocation3 [shape = 'u8[1024]{0}', space=smem, size = 0x400, scoped, tag = 'prefetched SMEM operand 0']
  %s0 = inlined_call_operand.hbm [shape: s32[2,4], index: 0, kind: input, shape index: {}]
  %s1 = inlined_call_operand.hbm [shape: f32[2,4096,256], index: 1, kind: input, shape index: {}]
  %s2 = inlined_call_operand.vmem [shape: s8[2,4096,1], index: 2, kind: input, shape index: {}]
  %s3 = inlined_call_operand.vmem [shape: s8[2,1,256], index: 3, kind: input, shape index: {}]
  %s4 = inlined_call_operand.hbm [shape: f32[1,256], index: 4, kind: input, shape index: {}]
  %s5 = inlined_call_operand.hbm [shape: f32[2,4096,256], index: 5, kind: output, shape index: {}]
  %s6 = sld [smem:[#allocation0]]
  $region65: #{tpu_custom_call.1} parent=0
    _
  %s8 = ssub.s32 1, %s6
  %s9 = scalar_select 0, %s8, %s6
  %11 = dma.hbm_to_smem %s0, 32, [#allocation3], [#allocation2]
  %12 = dma.done [#allocation2], 32
  %13 = sfence
  $region1: #{tpu_custom_call.1} parent=0
    #allocation4 [shape = 'u8[2097152]{0}', space=vmem, size = 0x200000, scoped, tag = 'input window, operand 1']
    #allocation5 [shape = 's32[2]{0}', space=sflag, size = 0x8, scoped, tag = 'scoped memory for tpu_custom_call.1']
    #allocation6 [shape = 's32[2]{0}', space=sflag, size = 0x8, scoped, tag = 'scoped memory for tpu_custom_call.1']
    #allocation7 [shape = 'u8[1024]{0}', space=vmem, size = 0x400, scoped, tag = 'input window, operand 4, single buffered']
    #allocation8 [shape = 's32[1]{0}', space=sflag, size = 0x4, scoped, tag = 'scoped memory for tpu_custom_call.1']
    #allocation9 [shape = 'u8[2097152]{0}', space=vmem, size = 0x200000, scoped, tag = 'output window, operand 0']
    %14 = vsyncpa [#allocation5], 0
    %s15 = scalar_lea.sflag [#allocation5], 1
    %16 = vsyncpa %s15, 0
    %17 = vsyncpa [#allocation8], 0
    %18 = vsyncpa [#allocation6], 0
    %s19 = scalar_lea.sflag [#allocation6], 1
    %20 = vsyncpa %s19, 0
    loop: start=0, step=1, limit=10
    $region2: #{tpu_custom_call.1} parent=1 // loop_pre_header
      _
    $region3: #{tpu_custom_call.1} parent=1 // loop_header
      %s22 = sphi 0, %s26
      %p23 = scmp.ge.s32.totalorder %s22, 10
      %s29 = sphi 0, %s41
      %s30 = sphi 0, %s37
      %s31 = sphi 0, %s29
      %s32 = sphi 0, %s30
      %s33 = sphi 0, %s31
      %s34 = sphi 0, %s32
      %s46 = sphi 0, %s48
      %s49 = sphi 0, %s46
      %s50 = sphi 0, %s49
      %s66 = sphi 0, %s50
      %s74 = sphi 0, %s76
      %s77 = sphi 0, %s74
      %s78 = sphi 0, %s77
      %s94 = sphi 0, %s78
      %s100 = sphi 0, %s102
      %s103 = sphi 0, %s100
      %s104 = sphi 0, %s103
      %s120 = sphi 0, %s104
      %s124 = sphi 0, %s124
      %s126 = sphi 0, %s124
      %s127 = sphi 0, %s126
      %s141 = sphi 0, %s127
      %s149 = sphi 0, %s151
      %s152 = sphi 0, %s149
      %s153 = sphi 0, %s152
      %s169 = sphi 0, %s153
    $region4: #{tpu_custom_call.1} parent=1 // loop_header_branch
      %25 = sbr.rel (%p23) target = $region8
    $region5: #{tpu_custom_call.1} parent=1 // loop_body
      %s27 = ssub.s32 %s22, 1
      %s28 = ssub.s32 %s22, 2
      %s35 = sadd.s32 1, %s30
      %p36 = scmp.ge.s32.totalorder %s35, 4
      %s37 = scalar_select %p36, 0, %s35
      %s38 = sadd.s32 1, %s29
      %s39 = scalar_select %p36, %s38, %s29
      %p40 = scmp.ge.s32.totalorder %s39, 2
      %s41 = scalar_select %p40, 0, %s39
      %s42 = ssub.s32 %s29, %s41
      %s43 = ssub.s32 %s30, %s37
      %s44 = sor.u32 %s42, %s43
      %p45 = scmp.eq.s32.totalorder %s44, 0
      %s47 = sadd.s32 %s46, 1
      %s48 = scalar_select %p45, %s46, %s47
      %p51 = pneg %p45
      %p52 = scmp.eq.s32.totalorder %s22, 7
      %p53 = por %p51, %p52
      %p54 = scmp.ne.s32.totalorder %s46, %s49
      %p55 = scmp.eq.s32.totalorder %s22, 0
      %p56 = por %p54, %p55
      %p57 = scmp.ne.s32.totalorder %s46, %s49
      %p58 = scmp.eq.s32.totalorder %s27, 7
      %p59 = por %p57, %p58
      %p60 = scmp.ne.s32.totalorder %s49, %s50
      %p61 = scmp.eq.s32.totalorder %s27, 0
      %p62 = por %p60, %p61
      %p63 = scmp.ne.s32.totalorder %s49, %s50
      %p64 = scmp.eq.s32.totalorder %s28, 7
      %p65 = por %p63, %p64
      %p67 = scmp.ne.s32.totalorder %s50, %s66
      %p68 = scmp.eq.s32.totalorder %s28, 0
      %p69 = por %p67, %p68
      %s70 = ssub.s32 %s29, %s41
      %s71 = ssub.s32 %s30, %s37
      %s72 = sor.u32 %s70, %s71
      %p73 = scmp.eq.s32.totalorder %s72, 0
      %s75 = sadd.s32 %s74, 1
      %s76 = scalar_select %p73, %s74, %s75
      %p79 = pneg %p73
      %p80 = scmp.eq.s32.totalorder %s22, 7
      %p81 = por %p79, %p80
      %p82 = scmp.ne.s32.totalorder %s74, %s77
      %p83 = scmp.eq.s32.totalorder %s22, 0
      %p84 = por %p82, %p83
      %p85 = scmp.ne.s32.totalorder %s74, %s77
      %p86 = scmp.eq.s32.totalorder %s27, 7
      %p87 = por %p85, %p86
      %p88 = scmp.ne.s32.totalorder %s77, %s78
      %p89 = scmp.eq.s32.totalorder %s27, 0
      %p90 = por %p88, %p89
      %p91 = scmp.ne.s32.totalorder %s77, %s78
      %p92 = scmp.eq.s32.totalorder %s28, 7
      %p93 = por %p91, %p92
      %p95 = scmp.ne.s32.totalorder %s78, %s94
      %p96 = scmp.eq.s32.totalorder %s28, 0
      %p97 = por %p95, %p96
      %s98 = ssub.s32 %s29, %s41
      %p99 = scmp.eq.s32.totalorder %s98, 0
      %s101 = sadd.s32 %s100, 1
      %s102 = scalar_select %p99, %s100, %s101
      %p105 = pneg %p99
      %p106 = scmp.eq.s32.totalorder %s22, 7
      %p107 = por %p105, %p106
      %p108 = scmp.ne.s32.totalorder %s100, %s103
      %p109 = scmp.eq.s32.totalorder %s22, 0
      %p110 = por %p108, %p109
      %p111 = scmp.ne.s32.totalorder %s100, %s103
      %p112 = scmp.eq.s32.totalorder %s27, 7
      %p113 = por %p111, %p112
      %p114 = scmp.ne.s32.totalorder %s103, %s104
      %p115 = scmp.eq.s32.totalorder %s27, 0
      %p116 = por %p114, %p115
      %p117 = scmp.ne.s32.totalorder %s103, %s104
      %p118 = scmp.eq.s32.totalorder %s28, 7
      %p119 = por %p117, %p118
      %p121 = scmp.ne.s32.totalorder %s104, %s120
      %p122 = scmp.eq.s32.totalorder %s28, 0
      %p123 = por %p121, %p122
      %s125 = sadd.s32 %s124, 1
      %p128 = scmp.eq.s32.totalorder %s22, 7
      %p129 = scmp.ne.s32.totalorder %s124, %s126
      %p130 = scmp.eq.s32.totalorder %s22, 0
      %p131 = por %p129, %p130
      %p132 = scmp.ne.s32.totalorder %s124, %s126
      %p133 = scmp.eq.s32.totalorder %s27, 7
      %p134 = por %p132, %p133
      %p135 = scmp.ne.s32.totalorder %s126, %s127
      %p136 = scmp.eq.s32.totalorder %s27, 0
      %p137 = por %p135, %p136
      %p138 = scmp.ne.s32.totalorder %s126, %s127
      %p139 = scmp.eq.s32.totalorder %s28, 7
      %p140 = por %p138, %p139
      %p142 = scmp.ne.s32.totalorder %s127, %s141
      %p143 = scmp.eq.s32.totalorder %s28, 0
      %p144 = por %p142, %p143
      %s145 = ssub.s32 %s29, %s41
      %s146 = ssub.s32 %s30, %s37
      %s147 = sor.u32 %s145, %s146
      %p148 = scmp.eq.s32.totalorder %s147, 0
      %s150 = sadd.s32 %s149, 1
      %s151 = scalar_select %p148, %s149, %s150
      %p154 = pneg %p148
      %p155 = scmp.eq.s32.totalorder %s22, 7
      %p156 = por %p154, %p155
      %p157 = scmp.ne.s32.totalorder %s149, %s152
      %p158 = scmp.eq.s32.totalorder %s22, 0
      %p159 = por %p157, %p158
      %p160 = scmp.ne.s32.totalorder %s149, %s152
      %p161 = scmp.eq.s32.totalorder %s27, 7
      %p162 = por %p160, %p161
      %p163 = scmp.ne.s32.totalorder %s152, %s153
      %p164 = scmp.eq.s32.totalorder %s27, 0
      %p165 = por %p163, %p164
      %p166 = scmp.ne.s32.totalorder %s152, %s153
      %p167 = scmp.eq.s32.totalorder %s28, 7
      %p168 = por %p166, %p167
      %p170 = scmp.ne.s32.totalorder %s153, %s169
      %p171 = scmp.eq.s32.totalorder %s28, 0
      %p172 = por %p170, %p171
      %p173 = scmp.le.s32.totalorder 1, %s22
      %p174 = scmp.lt.s32.totalorder %s22, 9
      %p175 = pnand %p173, %p174
      %p176 = pneg %p175
      // Predicated region
      $region9: #{tpu_custom_call.1} parent=5 // pred_check
        _
      $region10: #{tpu_custom_call.1} parent=5 // pred_check_branch
        %178 = sbr.rel (%p175) target = $region12
      $region11: #{tpu_custom_call.1} parent=5 // pred_region
        %s179 = ssub.s32 %s22, 1
        // Predicated region
        $region13: #{tpu_custom_call.1} parent=11 // pred_check
          %p180 = pneg %p137
        $region14: #{tpu_custom_call.1} parent=11 // pred_check_branch
          %182 = sbr.rel (%p180) target = $region16
        $region15: #{tpu_custom_call.1} parent=11 // pred_region
          %s184 = ssub.s32 32, 32
          %185 = vsyncadd [#allocation8], %s184
          %s187 = sshll.u32 [#allocation7], 4
          %s188 = int_to_ptr.vmem [resolvable:$true] %s187
          %190 = dma.hbm_to_vmem [thread:$0]  %s4, 32, %s188, [#allocation8]
        $region16: #{tpu_custom_call.1} parent=11 // pred_fallthru
          _
      $region12: #{tpu_custom_call.1} parent=5 // pred_fallthru
        _
      %p191 = scmp.lt.s32.totalorder %s22, 8
      // Predicated region
      $region17: #{tpu_custom_call.1} parent=5 // pred_check
        %p192 = pneg %p191
      $region18: #{tpu_custom_call.1} parent=5 // pred_check_branch
        %194 = sbr.rel (%p192) target = $region20
      $region19: #{tpu_custom_call.1} parent=5 // pred_region
        // Predicated region
        $region21: #{tpu_custom_call.1} parent=19 // pred_check
          %p195 = pneg %p56
        $region22: #{tpu_custom_call.1} parent=19 // pred_check_branch
          %197 = sbr.rel (%p195) target = $region24
        $region23: #{tpu_custom_call.1} parent=19 // pred_region
          %s198 = sand.u32 %s46, 1
          %s199 = scalar_lea.sflag [#allocation5], %s198
          %s200 = sand.u32 %s46, 1
          %s201 = smul.addr %s200, 2048
          %s202 = scalar_lea.vmem [#allocation4], %s201
          %s203 = smul.u32 128, %s30
          %s205 = ssub.s32 32768, 32768
          %206 = vsyncadd %s199, %s205
          %s207 = smul.addr %s203, 2
          %s208 = smul.addr %s29, 1024
          %s209 = sadd.s32 %s207, %s208
          %s210 = smul.addr %s209, 128
          %s211 = scalar_lea.hbm %s1, %s210
          %s212 = sshll.u32 %s202, 4
          %s213 = int_to_ptr.vmem [resolvable:$true] %s212
          %218 = dma.hbm_to_vmem [thread:$0]  %s211, 32768, %s213, %s199, 256, 256, 16
        $region24: #{tpu_custom_call.1} parent=19 // pred_fallthru
          _
        // Predicated region
        $region25: #{tpu_custom_call.1} parent=19 // pred_check
          %p219 = pneg %p84
        $region26: #{tpu_custom_call.1} parent=19 // pred_check_branch
          %221 = sbr.rel (%p219) target = $region28
        $region27: #{tpu_custom_call.1} parent=19 // pred_region
          %s222 = smul.u32 128, %s30
          %p223 = scmp.lt.s32.totalorder %s29, 1
          %s224 = scalar_select %p223, %s29, 1
          %p225 = scmp.lt.s32.totalorder %s222, 511
          %s226 = scalar_select %p225, %s222, 511
          %s227 = smul.addr %s224, 512
          %s228 = sadd.s32 %s226, %s227
          %s229 = smul.addr %s228, 2
          %s230 = scalar_lea.vmem %s2, %s229
          %s231 = smul.u32 128, %s30
        $region28: #{tpu_custom_call.1} parent=19 // pred_fallthru
          _
        // Predicated region
        $region29: #{tpu_custom_call.1} parent=19 // pred_check
          %p232 = pneg %p110
        $region30: #{tpu_custom_call.1} parent=19 // pred_check_branch
          %234 = sbr.rel (%p232) target = $region32
        $region31: #{tpu_custom_call.1} parent=19 // pred_region
          %p235 = scmp.lt.s32.totalorder %s29, 1
          %s236 = scalar_select %p235, %s29, 1
          %s237 = smul.addr %s236, 2
          %s238 = scalar_lea.vmem %s3, %s237
        $region32: #{tpu_custom_call.1} parent=19 // pred_fallthru
          _
      $region20: #{tpu_custom_call.1} parent=5 // pred_fallthru
        _
      %p239 = scmp.le.s32.totalorder 1, %s22
      %p240 = scmp.lt.s32.totalorder %s22, 9
      %p241 = pnand %p239, %p240
      %p242 = pneg %p241
      // Predicated region
      $region33: #{tpu_custom_call.1} parent=5 // pred_check
        _
      $region34: #{tpu_custom_call.1} parent=5 // pred_check_branch
        %244 = sbr.rel (%p241) target = $region36
      $region35: #{tpu_custom_call.1} parent=5 // pred_region
        %s245 = ssub.s32 %s22, 1
        %s246 = sand.u32 %s49, 1
        %s247 = scalar_lea.sflag [#allocation5], %s246
        %s248 = sand.u32 %s49, 1
        %s249 = smul.addr %s248, 2048
        %s250 = scalar_lea.vmem [#allocation4], %s249
        // Predicated region
        $region37: #{tpu_custom_call.1} parent=35 // pred_check
          %p251 = pneg %p62
        $region38: #{tpu_custom_call.1} parent=35 // pred_check_branch
          %253 = sbr.rel (%p251) target = $region40
        $region39: #{tpu_custom_call.1} parent=35 // pred_region
          %254 = dma.done %s247, 32768
        $region40: #{tpu_custom_call.1} parent=35 // pred_fallthru
          _
        // Predicated region
        $region41: #{tpu_custom_call.1} parent=35 // pred_check
          %p255 = pneg %p137
        $region42: #{tpu_custom_call.1} parent=35 // pred_check_branch
          %257 = sbr.rel (%p255) target = $region44
        $region43: #{tpu_custom_call.1} parent=35 // pred_region
          %258 = dma.done [#allocation8], 32
        $region44: #{tpu_custom_call.1} parent=35 // pred_fallthru
          _
        %s259 = sand.u32 %s49, 1
        %s260 = scalar_lea.sflag [#allocation5], %s259
        %s261 = sand.u32 %s49, 1
        %s262 = smul.addr %s261, 2048
        %s263 = scalar_lea.vmem [#allocation4], %s262
        %p264 = pneg %p62
        %p265 = pneg %p59
        %s266 = smul.u32 128, %s32
        %p267 = scmp.lt.s32.totalorder %s31, 1
        %s268 = scalar_select %p267, %s31, 1
        %p269 = scmp.lt.s32.totalorder %s266, 511
        %s270 = scalar_select %p269, %s266, 511
        %s271 = smul.addr %s268, 512
        %s272 = sadd.s32 %s270, %s271
        %s273 = smul.addr %s272, 2
        %s274 = scalar_lea.vmem %s2, %s273
        %p275 = pneg %p90
        %p276 = pneg %p87
        %p277 = scmp.lt.s32.totalorder %s31, 1
        %s278 = scalar_select %p277, %s31, 1
        %s279 = smul.addr %s278, 2
        %s280 = scalar_lea.vmem %s3, %s279
        %p281 = pneg %p116
        %p282 = pneg %p113
        %p283 = pneg %p137
        %p284 = pneg %p134
        %p285 = pneg %p165
        %p286 = pneg %p162
        %s287 = sand.u32 %s152, 1
        %s288 = scalar_lea.sflag [#allocation6], %s287
        %s289 = sand.u32 %s152, 1
        %s290 = smul.addr %s289, 2048
        %s291 = scalar_lea.vmem [#allocation9], %s290
        %s292 = smul.u32 128, %s32
        %s293 = smul.u32 128, %s32
        %p294 = scmp.lt.s32.totalorder %s31, 1
        %s295 = scalar_select %p294, %s31, 1
        %p296 = scmp.lt.s32.totalorder %s293, 511
        %s297 = scalar_select %p296, %s293, 511
        %s298 = smul.addr %s295, 512
        %s299 = sadd.s32 %s297, %s298
        %s300 = smul.addr %s299, 2
        %s301 = scalar_lea.vmem %s2, %s300
        %s302 = smul.u32 128, %s32
        %p303 = scmp.lt.s32.totalorder %s31, 1
        %s304 = scalar_select %p303, %s31, 1
        %s305 = smul.addr %s304, 2
        %s306 = scalar_lea.vmem %s3, %s305
        %s307 = smul.u32 128, %s32
        %s310 = sshra.s32 %s32, 7
        %s311 = sand.u32 %s32, 127
        %s312 = sadd.s32 %s310, %s31
        %s313 = smul.u32 %s312, 128
        %s314 = sshra.s32 %s32, 7
        %s315 = sand.u32 %s32, 127
        %s316 = sadd.s32 %s313, %s315
        %s317 = sld [smem:[#allocation3 + %s316]]
        %p318 = scmp.ne.s32.totalorder %s317, 0
        // Predicated region
        $region45: #{tpu_custom_call.1} parent=35 // pred_check
          %p319 = pneg %p318
        $region46: #{tpu_custom_call.1} parent=35 // pred_check_branch
          %321 = sbr.rel (%p319) target = $region48
        $region47: #{tpu_custom_call.1} parent=35 // pred_region
          %v322 = vld [vmem:[%s250] sm:$0xff]
          %v323 = vld [vmem:[%s250 + $0x8] sm:$0xff]
          %v324 = vld [vmem:[%s250 + $0x10] sm:$0xff]
          %v325 = vld [vmem:[%s250 + $0x18] sm:$0xff]
          %v326 = vld [vmem:[%s250 + $0x20] sm:$0xff]
          %v327 = vld [vmem:[%s250 + $0x28] sm:$0xff]
          %v328 = vld [vmem:[%s250 + $0x30] sm:$0xff]
          %v329 = vld [vmem:[%s250 + $0x38] sm:$0xff]
          %v330 = vld [vmem:[%s250 + $0x40] sm:$0xff]
          %v331 = vld [vmem:[%s250 + $0x48] sm:$0xff]
          %v332 = vld [vmem:[%s250 + $0x50] sm:$0xff]
          %v333 = vld [vmem:[%s250 + $0x58] sm:$0xff]
          %v334 = vld [vmem:[%s250 + $0x60] sm:$0xff]
          %v335 = vld [vmem:[%s250 + $0x68] sm:$0xff]
          %v336 = vld [vmem:[%s250 + $0x70] sm:$0xff]
          %v337 = vld [vmem:[%s250 + $0x78] sm:$0xff]
          %v338 = vld [vmem:[%s250 + $0x80] sm:$0xff]
          %v339 = vld [vmem:[%s250 + $0x88] sm:$0xff]
          %v340 = vld [vmem:[%s250 + $0x90] sm:$0xff]
          %v341 = vld [vmem:[%s250 + $0x98] sm:$0xff]
          %v342 = vld [vmem:[%s250 + $0xa0] sm:$0xff]
          %v343 = vld [vmem:[%s250 + $0xa8] sm:$0xff]
          %v344 = vld [vmem:[%s250 + $0xb0] sm:$0xff]
          %v345 = vld [vmem:[%s250 + $0xb8] sm:$0xff]
          %v346 = vld [vmem:[%s250 + $0xc0] sm:$0xff]
          %v347 = vld [vmem:[%s250 + $0xc8] sm:$0xff]
          %v348 = vld [vmem:[%s250 + $0xd0] sm:$0xff]
          %v349 = vld [vmem:[%s250 + $0xd8] sm:$0xff]
          %v350 = vld [vmem:[%s250 + $0xe0] sm:$0xff]
          %v351 = vld [vmem:[%s250 + $0xe8] sm:$0xff]
          %v352 = vld [vmem:[%s250 + $0xf0] sm:$0xff]
          %v353 = vld [vmem:[%s250 + $0xf8] sm:$0xff]
          %v354 = vld [vmem:[%s250 + $0x100] sm:$0xff]
          %v355 = vld [vmem:[%s250 + $0x108] sm:$0xff]
          %v356 = vld [vmem:[%s250 + $0x110] sm:$0xff]
          %v357 = vld [vmem:[%s250 + $0x118] sm:$0xff]
          %v358 = vld [vmem:[%s250 + $0x120] sm:$0xff]
          %v359 = vld [vmem:[%s250 + $0x128] sm:$0xff]
          %v360 = vld [vmem:[%s250 + $0x130] sm:$0xff]
          %v361 = vld [vmem:[%s250 + $0x138] sm:$0xff]
          %v362 = vld [vmem:[%s250 + $0x140] sm:$0xff]
          %v363 = vld [vmem:[%s250 + $0x148] sm:$0xff]
          %v364 = vld [vmem:[%s250 + $0x150] sm:$0xff]
          %v365 = vld [vmem:[%s250 + $0x158] sm:$0xff]
          %v366 = vld [vmem:[%s250 + $0x160] sm:$0xff]
          %v367 = vld [vmem:[%s250 + $0x168] sm:$0xff]
          %v368 = vld [vmem:[%s250 + $0x170] sm:$0xff]
          %v369 = vld [vmem:[%s250 + $0x178] sm:$0xff]
          %v370 = vld [vmem:[%s250 + $0x180] sm:$0xff]
          %v371 = vld [vmem:[%s250 + $0x188] sm:$0xff]
          %v372 = vld [vmem:[%s250 + $0x190] sm:$0xff]
          %v373 = vld [vmem:[%s250 + $0x198] sm:$0xff]
          %v374 = vld [vmem:[%s250 + $0x1a0] sm:$0xff]
          %v375 = vld [vmem:[%s250 + $0x1a8] sm:$0xff]
          %v376 = vld [vmem:[%s250 + $0x1b0] sm:$0xff]
          %v377 = vld [vmem:[%s250 + $0x1b8] sm:$0xff]
          %v378 = vld [vmem:[%s250 + $0x1c0] sm:$0xff]
          %v379 = vld [vmem:[%s250 + $0x1c8] sm:$0xff]
          %v380 = vld [vmem:[%s250 + $0x1d0] sm:$0xff]
          %v381 = vld [vmem:[%s250 + $0x1d8] sm:$0xff]
          %v382 = vld [vmem:[%s250 + $0x1e0] sm:$0xff]
          %v383 = vld [vmem:[%s250 + $0x1e8] sm:$0xff]
          %v384 = vld [vmem:[%s250 + $0x1f0] sm:$0xff]
          %v385 = vld [vmem:[%s250 + $0x1f8] sm:$0xff]
          %v386 = vld [vmem:[%s250 + $0x200] sm:$0xff]
          %v387 = vld [vmem:[%s250 + $0x208] sm:$0xff]
          %v388 = vld [vmem:[%s250 + $0x210] sm:$0xff]
          %v389 = vld [vmem:[%s250 + $0x218] sm:$0xff]
          %v390 = vld [vmem:[%s250 + $0x220] sm:$0xff]
          %v391 = vld [vmem:[%s250 + $0x228] sm:$0xff]
          %v392 = vld [vmem:[%s250 + $0x230] sm:$0xff]
          %v393 = vld [vmem:[%s250 + $0x238] sm:$0xff]
          %v394 = vld [vmem:[%s250 + $0x240] sm:$0xff]
          %v395 = vld [vmem:[%s250 + $0x248] sm:$0xff]
          %v396 = vld [vmem:[%s250 + $0x250] sm:$0xff]
          %v397 = vld [vmem:[%s250 + $0x258] sm:$0xff]
          %v398 = vld [vmem:[%s250 + $0x260] sm:$0xff]
          %v399 = vld [vmem:[%s250 + $0x268] sm:$0xff]
          %v400 = vld [vmem:[%s250 + $0x270] sm:$0xff]
          %v401 = vld [vmem:[%s250 + $0x278] sm:$0xff]
          %v402 = vld [vmem:[%s250 + $0x280] sm:$0xff]
          %v403 = vld [vmem:[%s250 + $0x288] sm:$0xff]
          %v404 = vld [vmem:[%s250 + $0x290] sm:$0xff]
          %v405 = vld [vmem:[%s250 + $0x298] sm:$0xff]
          %v406 = vld [vmem:[%s250 + $0x2a0] sm:$0xff]
          %v407 = vld [vmem:[%s250 + $0x2a8] sm:$0xff]
          %v408 = vld [vmem:[%s250 + $0x2b0] sm:$0xff]
          %v409 = vld [vmem:[%s250 + $0x2b8] sm:$0xff]
          %v410 = vld [vmem:[%s250 + $0x2c0] sm:$0xff]
          %v411 = vld [vmem:[%s250 + $0x2c8] sm:$0xff]
          %v412 = vld [vmem:[%s250 + $0x2d0] sm:$0xff]
          %v413 = vld [vmem:[%s250 + $0x2d8] sm:$0xff]
          %v414 = vld [vmem:[%s250 + $0x2e0] sm:$0xff]
          %v415 = vld [vmem:[%s250 + $0x2e8] sm:$0xff]
          %v416 = vld [vmem:[%s250 + $0x2f0] sm:$0xff]
          %v417 = vld [vmem:[%s250 + $0x2f8] sm:$0xff]
          %v418 = vld [vmem:[%s250 + $0x300] sm:$0xff]
          %v419 = vld [vmem:[%s250 + $0x308] sm:$0xff]
          %v420 = vld [vmem:[%s250 + $0x310] sm:$0xff]
          %v421 = vld [vmem:[%s250 + $0x318] sm:$0xff]
          %v422 = vld [vmem:[%s250 + $0x320] sm:$0xff]
          %v423 = vld [vmem:[%s250 + $0x328] sm:$0xff]
          %v424 = vld [vmem:[%s250 + $0x330] sm:$0xff]
          %v425 = vld [vmem:[%s250 + $0x338] sm:$0xff]
          %v426 = vld [vmem:[%s250 + $0x340] sm:$0xff]
          %v427 = vld [vmem:[%s250 + $0x348] sm:$0xff]
          %v428 = vld [vmem:[%s250 + $0x350] sm:$0xff]
          %v429 = vld [vmem:[%s250 + $0x358] sm:$0xff]
          %v430 = vld [vmem:[%s250 + $0x360] sm:$0xff]
          %v431 = vld [vmem:[%s250 + $0x368] sm:$0xff]
          %v432 = vld [vmem:[%s250 + $0x370] sm:$0xff]
          %v433 = vld [vmem:[%s250 + $0x378] sm:$0xff]
          %v434 = vld [vmem:[%s250 + $0x380] sm:$0xff]
          %v435 = vld [vmem:[%s250 + $0x388] sm:$0xff]
          %v436 = vld [vmem:[%s250 + $0x390] sm:$0xff]
          %v437 = vld [vmem:[%s250 + $0x398] sm:$0xff]
          %v438 = vld [vmem:[%s250 + $0x3a0] sm:$0xff]
          %v439 = vld [vmem:[%s250 + $0x3a8] sm:$0xff]
          %v440 = vld [vmem:[%s250 + $0x3b0] sm:$0xff]
          %v441 = vld [vmem:[%s250 + $0x3b8] sm:$0xff]
          %v442 = vld [vmem:[%s250 + $0x3c0] sm:$0xff]
          %v443 = vld [vmem:[%s250 + $0x3c8] sm:$0xff]
          %v444 = vld [vmem:[%s250 + $0x3d0] sm:$0xff]
          %v445 = vld [vmem:[%s250 + $0x3d8] sm:$0xff]
          %v446 = vld [vmem:[%s250 + $0x3e0] sm:$0xff]
          %v447 = vld [vmem:[%s250 + $0x3e8] sm:$0xff]
          %v448 = vld [vmem:[%s250 + $0x3f0] sm:$0xff]
          %v449 = vld [vmem:[%s250 + $0x3f8] sm:$0xff]
          %v450 = vld [vmem:[%s250 + $0x400] sm:$0xff]
          %v451 = vld [vmem:[%s250 + $0x408] sm:$0xff]
          %v452 = vld [vmem:[%s250 + $0x410] sm:$0xff]
          %v453 = vld [vmem:[%s250 + $0x418] sm:$0xff]
          %v454 = vld [vmem:[%s250 + $0x420] sm:$0xff]
          %v455 = vld [vmem:[%s250 + $0x428] sm:$0xff]
          %v456 = vld [vmem:[%s250 + $0x430] sm:$0xff]
          %v457 = vld [vmem:[%s250 + $0x438] sm:$0xff]
          %v458 = vld [vmem:[%s250 + $0x440] sm:$0xff]
          %v459 = vld [vmem:[%s250 + $0x448] sm:$0xff]
          %v460 = vld [vmem:[%s250 + $0x450] sm:$0xff]
          %v461 = vld [vmem:[%s250 + $0x458] sm:$0xff]
          %v462 = vld [vmem:[%s250 + $0x460] sm:$0xff]
          %v463 = vld [vmem:[%s250 + $0x468] sm:$0xff]
          %v464 = vld [vmem:[%s250 + $0x470] sm:$0xff]
          %v465 = vld [vmem:[%s250 + $0x478] sm:$0xff]
          %v466 = vld [vmem:[%s250 + $0x480] sm:$0xff]
          %v467 = vld [vmem:[%s250 + $0x488] sm:$0xff]
          %v468 = vld [vmem:[%s250 + $0x490] sm:$0xff]
          %v469 = vld [vmem:[%s250 + $0x498] sm:$0xff]
          %v470 = vld [vmem:[%s250 + $0x4a0] sm:$0xff]
          %v471 = vld [vmem:[%s250 + $0x4a8] sm:$0xff]
          %v472 = vld [vmem:[%s250 + $0x4b0] sm:$0xff]
          %v473 = vld [vmem:[%s250 + $0x4b8] sm:$0xff]
          %v474 = vld [vmem:[%s250 + $0x4c0] sm:$0xff]
          %v475 = vld [vmem:[%s250 + $0x4c8] sm:$0xff]
          %v476 = vld [vmem:[%s250 + $0x4d0] sm:$0xff]
          %v477 = vld [vmem:[%s250 + $0x4d8] sm:$0xff]
          %v478 = vld [vmem:[%s250 + $0x4e0] sm:$0xff]
          %v479 = vld [vmem:[%s250 + $0x4e8] sm:$0xff]
          %v480 = vld [vmem:[%s250 + $0x4f0] sm:$0xff]
          %v481 = vld [vmem:[%s250 + $0x4f8] sm:$0xff]
          %v482 = vld [vmem:[%s250 + $0x500] sm:$0xff]
          %v483 = vld [vmem:[%s250 + $0x508] sm:$0xff]
          %v484 = vld [vmem:[%s250 + $0x510] sm:$0xff]
          %v485 = vld [vmem:[%s250 + $0x518] sm:$0xff]
          %v486 = vld [vmem:[%s250 + $0x520] sm:$0xff]
          %v487 = vld [vmem:[%s250 + $0x528] sm:$0xff]
          %v488 = vld [vmem:[%s250 + $0x530] sm:$0xff]
          %v489 = vld [vmem:[%s250 + $0x538] sm:$0xff]
          %v490 = vld [vmem:[%s250 + $0x540] sm:$0xff]
          %v491 = vld [vmem:[%s250 + $0x548] sm:$0xff]
          %v492 = vld [vmem:[%s250 + $0x550] sm:$0xff]
          %v493 = vld [vmem:[%s250 + $0x558] sm:$0xff]
          %v494 = vld [vmem:[%s250 + $0x560] sm:$0xff]
          %v495 = vld [vmem:[%s250 + $0x568] sm:$0xff]
          %v496 = vld [vmem:[%s250 + $0x570] sm:$0xff]
          %v497 = vld [vmem:[%s250 + $0x578] sm:$0xff]
          %v498 = vld [vmem:[%s250 + $0x580] sm:$0xff]
          %v499 = vld [vmem:[%s250 + $0x588] sm:$0xff]
          %v500 = vld [vmem:[%s250 + $0x590] sm:$0xff]
          %v501 = vld [vmem:[%s250 + $0x598] sm:$0xff]
          %v502 = vld [vmem:[%s250 + $0x5a0] sm:$0xff]
          %v503 = vld [vmem:[%s250 + $0x5a8] sm:$0xff]
          %v504 = vld [vmem:[%s250 + $0x5b0] sm:$0xff]
          %v505 = vld [vmem:[%s250 + $0x5b8] sm:$0xff]
          %v506 = vld [vmem:[%s250 + $0x5c0] sm:$0xff]
          %v507 = vld [vmem:[%s250 + $0x5c8] sm:$0xff]
          %v508 = vld [vmem:[%s250 + $0x5d0] sm:$0xff]
          %v509 = vld [vmem:[%s250 + $0x5d8] sm:$0xff]
          %v510 = vld [vmem:[%s250 + $0x5e0] sm:$0xff]
          %v511 = vld [vmem:[%s250 + $0x5e8] sm:$0xff]
          %v512 = vld [vmem:[%s250 + $0x5f0] sm:$0xff]
          %v513 = vld [vmem:[%s250 + $0x5f8] sm:$0xff]
          %v514 = vld [vmem:[%s250 + $0x600] sm:$0xff]
          %v515 = vld [vmem:[%s250 + $0x608] sm:$0xff]
          %v516 = vld [vmem:[%s250 + $0x610] sm:$0xff]
          %v517 = vld [vmem:[%s250 + $0x618] sm:$0xff]
          %v518 = vld [vmem:[%s250 + $0x620] sm:$0xff]
          %v519 = vld [vmem:[%s250 + $0x628] sm:$0xff]
          %v520 = vld [vmem:[%s250 + $0x630] sm:$0xff]
          %v521 = vld [vmem:[%s250 + $0x638] sm:$0xff]
          %v522 = vld [vmem:[%s250 + $0x640] sm:$0xff]
          %v523 = vld [vmem:[%s250 + $0x648] sm:$0xff]
          %v524 = vld [vmem:[%s250 + $0x650] sm:$0xff]
          %v525 = vld [vmem:[%s250 + $0x658] sm:$0xff]
          %v526 = vld [vmem:[%s250 + $0x660] sm:$0xff]
          %v527 = vld [vmem:[%s250 + $0x668] sm:$0xff]
          %v528 = vld [vmem:[%s250 + $0x670] sm:$0xff]
          %v529 = vld [vmem:[%s250 + $0x678] sm:$0xff]
          %v530 = vld [vmem:[%s250 + $0x680] sm:$0xff]
          %v531 = vld [vmem:[%s250 + $0x688] sm:$0xff]
          %v532 = vld [vmem:[%s250 + $0x690] sm:$0xff]
          %v533 = vld [vmem:[%s250 + $0x698] sm:$0xff]
          %v534 = vld [vmem:[%s250 + $0x6a0] sm:$0xff]
          %v535 = vld [vmem:[%s250 + $0x6a8] sm:$0xff]
          %v536 = vld [vmem:[%s250 + $0x6b0] sm:$0xff]
          %v537 = vld [vmem:[%s250 + $0x6b8] sm:$0xff]
          %v538 = vld [vmem:[%s250 + $0x6c0] sm:$0xff]
          %v539 = vld [vmem:[%s250 + $0x6c8] sm:$0xff]
          %v540 = vld [vmem:[%s250 + $0x6d0] sm:$0xff]
          %v541 = vld [vmem:[%s250 + $0x6d8] sm:$0xff]
          %v542 = vld [vmem:[%s250 + $0x6e0] sm:$0xff]
          %v543 = vld [vmem:[%s250 + $0x6e8] sm:$0xff]
          %v544 = vld [vmem:[%s250 + $0x6f0] sm:$0xff]
          %v545 = vld [vmem:[%s250 + $0x6f8] sm:$0xff]
          %v546 = vld [vmem:[%s250 + $0x700] sm:$0xff]
          %v547 = vld [vmem:[%s250 + $0x708] sm:$0xff]
          %v548 = vld [vmem:[%s250 + $0x710] sm:$0xff]
          %v549 = vld [vmem:[%s250 + $0x718] sm:$0xff]
          %v550 = vld [vmem:[%s250 + $0x720] sm:$0xff]
          %v551 = vld [vmem:[%s250 + $0x728] sm:$0xff]
          %v552 = vld [vmem:[%s250 + $0x730] sm:$0xff]
          %v553 = vld [vmem:[%s250 + $0x738] sm:$0xff]
          %v554 = vld [vmem:[%s250 + $0x740] sm:$0xff]
          %v555 = vld [vmem:[%s250 + $0x748] sm:$0xff]
          %v556 = vld [vmem:[%s250 + $0x750] sm:$0xff]
          %v557 = vld [vmem:[%s250 + $0x758] sm:$0xff]
          %v558 = vld [vmem:[%s250 + $0x760] sm:$0xff]
          %v559 = vld [vmem:[%s250 + $0x768] sm:$0xff]
          %v560 = vld [vmem:[%s250 + $0x770] sm:$0xff]
          %v561 = vld [vmem:[%s250 + $0x778] sm:$0xff]
          %v562 = vld [vmem:[%s250 + $0x780] sm:$0xff]
          %v563 = vld [vmem:[%s250 + $0x788] sm:$0xff]
          %v564 = vld [vmem:[%s250 + $0x790] sm:$0xff]
          %v565 = vld [vmem:[%s250 + $0x798] sm:$0xff]
          %v566 = vld [vmem:[%s250 + $0x7a0] sm:$0xff]
          %v567 = vld [vmem:[%s250 + $0x7a8] sm:$0xff]
          %v568 = vld [vmem:[%s250 + $0x7b0] sm:$0xff]
          %v569 = vld [vmem:[%s250 + $0x7b8] sm:$0xff]
          %v570 = vld [vmem:[%s250 + $0x7c0] sm:$0xff]
          %v571 = vld [vmem:[%s250 + $0x7c8] sm:$0xff]
          %v572 = vld [vmem:[%s250 + $0x7d0] sm:$0xff]
          %v573 = vld [vmem:[%s250 + $0x7d8] sm:$0xff]
          %v574 = vld [vmem:[%s250 + $0x7e0] sm:$0xff]
          %v575 = vld [vmem:[%s250 + $0x7e8] sm:$0xff]
          %v576 = vld [vmem:[%s250 + $0x7f0] sm:$0xff]
          %v577 = vld [vmem:[%s250 + $0x7f8] sm:$0xff]
          %v578 = vld [vmem:[%s301] sm:$0x3]
          %v579 = vld [vmem:[%s301 + $0x2] sm:$0x3]
          %v580 = vld [vmem:[%s301 + $0x4] sm:$0x3]
          %v581 = vld [vmem:[%s301 + $0x6] sm:$0x3]
          %v582 = vld [vmem:[%s301 + $0x8] sm:$0x3]
          %v583 = vld [vmem:[%s301 + $0xa] sm:$0x3]
          %v584 = vld [vmem:[%s301 + $0xc] sm:$0x3]
          %v585 = vld [vmem:[%s301 + $0xe] sm:$0x3]
          %v586 = vld [vmem:[%s301 + $0x10] sm:$0x3]
          %v587 = vld [vmem:[%s301 + $0x12] sm:$0x3]
          %v588 = vld [vmem:[%s301 + $0x14] sm:$0x3]
          %v589 = vld [vmem:[%s301 + $0x16] sm:$0x3]
          %v590 = vld [vmem:[%s301 + $0x18] sm:$0x3]
          %v591 = vld [vmem:[%s301 + $0x1a] sm:$0x3]
          %v592 = vld [vmem:[%s301 + $0x1c] sm:$0x3]
          %v593 = vld [vmem:[%s301 + $0x1e] sm:$0x3]
          %v594 = vld [vmem:[%s301 + $0x20] sm:$0x3]
          %v595 = vld [vmem:[%s301 + $0x22] sm:$0x3]
          %v596 = vld [vmem:[%s301 + $0x24] sm:$0x3]
          %v597 = vld [vmem:[%s301 + $0x26] sm:$0x3]
          %v598 = vld [vmem:[%s301 + $0x28] sm:$0x3]
          %v599 = vld [vmem:[%s301 + $0x2a] sm:$0x3]
          %v600 = vld [vmem:[%s301 + $0x2c] sm:$0x3]
          %v601 = vld [vmem:[%s301 + $0x2e] sm:$0x3]
          %v602 = vld [vmem:[%s301 + $0x30] sm:$0x3]
          %v603 = vld [vmem:[%s301 + $0x32] sm:$0x3]
          %v604 = vld [vmem:[%s301 + $0x34] sm:$0x3]
          %v605 = vld [vmem:[%s301 + $0x36] sm:$0x3]
          %v606 = vld [vmem:[%s301 + $0x38] sm:$0x3]
          %v607 = vld [vmem:[%s301 + $0x3a] sm:$0x3]
          %v608 = vld [vmem:[%s301 + $0x3c] sm:$0x3]
          %v609 = vld [vmem:[%s301 + $0x3e] sm:$0x3]
          %v610 = vld [vmem:[%s301 + $0x40] sm:$0x3]
          %v611 = vld [vmem:[%s301 + $0x42] sm:$0x3]
          %v612 = vld [vmem:[%s301 + $0x44] sm:$0x3]
          %v613 = vld [vmem:[%s301 + $0x46] sm:$0x3]
          %v614 = vld [vmem:[%s301 + $0x48] sm:$0x3]
          %v615 = vld [vmem:[%s301 + $0x4a] sm:$0x3]
          %v616 = vld [vmem:[%s301 + $0x4c] sm:$0x3]
          %v617 = vld [vmem:[%s301 + $0x4e] sm:$0x3]
          %v618 = vld [vmem:[%s301 + $0x50] sm:$0x3]
          %v619 = vld [vmem:[%s301 + $0x52] sm:$0x3]
          %v620 = vld [vmem:[%s301 + $0x54] sm:$0x3]
          %v621 = vld [vmem:[%s301 + $0x56] sm:$0x3]
          %v622 = vld [vmem:[%s301 + $0x58] sm:$0x3]
          %v623 = vld [vmem:[%s301 + $0x5a] sm:$0x3]
          %v624 = vld [vmem:[%s301 + $0x5c] sm:$0x3]
          %v625 = vld [vmem:[%s301 + $0x5e] sm:$0x3]
          %v626 = vld [vmem:[%s301 + $0x60] sm:$0x3]
          %v627 = vld [vmem:[%s301 + $0x62] sm:$0x3]
          %v628 = vld [vmem:[%s301 + $0x64] sm:$0x3]
          %v629 = vld [vmem:[%s301 + $0x66] sm:$0x3]
          %v630 = vld [vmem:[%s301 + $0x68] sm:$0x3]
          %v631 = vld [vmem:[%s301 + $0x6a] sm:$0x3]
          %v632 = vld [vmem:[%s301 + $0x6c] sm:$0x3]
          %v633 = vld [vmem:[%s301 + $0x6e] sm:$0x3]
          %v634 = vld [vmem:[%s301 + $0x70] sm:$0x3]
          %v635 = vld [vmem:[%s301 + $0x72] sm:$0x3]
          %v636 = vld [vmem:[%s301 + $0x74] sm:$0x3]
          %v637 = vld [vmem:[%s301 + $0x76] sm:$0x3]
          %v638 = vld [vmem:[%s301 + $0x78] sm:$0x3]
          %v639 = vld [vmem:[%s301 + $0x7a] sm:$0x3]
          %v640 = vld [vmem:[%s301 + $0x7c] sm:$0x3]
          %v641 = vld [vmem:[%s301 + $0x7e] sm:$0x3]
          %v642 = vld [vmem:[%s301 + $0x80] sm:$0x3]
          %v643 = vld [vmem:[%s301 + $0x82] sm:$0x3]
          %v644 = vld [vmem:[%s301 + $0x84] sm:$0x3]
          %v645 = vld [vmem:[%s301 + $0x86] sm:$0x3]
          %v646 = vld [vmem:[%s301 + $0x88] sm:$0x3]
          %v647 = vld [vmem:[%s301 + $0x8a] sm:$0x3]
          %v648 = vld [vmem:[%s301 + $0x8c] sm:$0x3]
          %v649 = vld [vmem:[%s301 + $0x8e] sm:$0x3]
          %v650 = vld [vmem:[%s301 + $0x90] sm:$0x3]
          %v651 = vld [vmem:[%s301 + $0x92] sm:$0x3]
          %v652 = vld [vmem:[%s301 + $0x94] sm:$0x3]
          %v653 = vld [vmem:[%s301 + $0x96] sm:$0x3]
          %v654 = vld [vmem:[%s301 + $0x98] sm:$0x3]
          %v655 = vld [vmem:[%s301 + $0x9a] sm:$0x3]
          %v656 = vld [vmem:[%s301 + $0x9c] sm:$0x3]
          %v657 = vld [vmem:[%s301 + $0x9e] sm:$0x3]
          %v658 = vld [vmem:[%s301 + $0xa0] sm:$0x3]
          %v659 = vld [vmem:[%s301 + $0xa2] sm:$0x3]
          %v660 = vld [vmem:[%s301 + $0xa4] sm:$0x3]
          %v661 = vld [vmem:[%s301 + $0xa6] sm:$0x3]
          %v662 = vld [vmem:[%s301 + $0xa8] sm:$0x3]
          %v663 = vld [vmem:[%s301 + $0xaa] sm:$0x3]
          %v664 = vld [vmem:[%s301 + $0xac] sm:$0x3]
          %v665 = vld [vmem:[%s301 + $0xae] sm:$0x3]
          %v666 = vld [vmem:[%s301 + $0xb0] sm:$0x3]
          %v667 = vld [vmem:[%s301 + $0xb2] sm:$0x3]
          %v668 = vld [vmem:[%s301 + $0xb4] sm:$0x3]
          %v669 = vld [vmem:[%s301 + $0xb6] sm:$0x3]
          %v670 = vld [vmem:[%s301 + $0xb8] sm:$0x3]
          %v671 = vld [vmem:[%s301 + $0xba] sm:$0x3]
          %v672 = vld [vmem:[%s301 + $0xbc] sm:$0x3]
          %v673 = vld [vmem:[%s301 + $0xbe] sm:$0x3]
          %v674 = vld [vmem:[%s301 + $0xc0] sm:$0x3]
          %v675 = vld [vmem:[%s301 + $0xc2] sm:$0x3]
          %v676 = vld [vmem:[%s301 + $0xc4] sm:$0x3]
          %v677 = vld [vmem:[%s301 + $0xc6] sm:$0x3]
          %v678 = vld [vmem:[%s301 + $0xc8] sm:$0x3]
          %v679 = vld [vmem:[%s301 + $0xca] sm:$0x3]
          %v680 = vld [vmem:[%s301 + $0xcc] sm:$0x3]
          %v681 = vld [vmem:[%s301 + $0xce] sm:$0x3]
          %v682 = vld [vmem:[%s301 + $0xd0] sm:$0x3]
          %v683 = vld [vmem:[%s301 + $0xd2] sm:$0x3]
          %v684 = vld [vmem:[%s301 + $0xd4] sm:$0x3]
          %v685 = vld [vmem:[%s301 + $0xd6] sm:$0x3]
          %v686 = vld [vmem:[%s301 + $0xd8] sm:$0x3]
          %v687 = vld [vmem:[%s301 + $0xda] sm:$0x3]
          %v688 = vld [vmem:[%s301 + $0xdc] sm:$0x3]
          %v689 = vld [vmem:[%s301 + $0xde] sm:$0x3]
          %v690 = vld [vmem:[%s301 + $0xe0] sm:$0x3]
          %v691 = vld [vmem:[%s301 + $0xe2] sm:$0x3]
          %v692 = vld [vmem:[%s301 + $0xe4] sm:$0x3]
          %v693 = vld [vmem:[%s301 + $0xe6] sm:$0x3]
          %v694 = vld [vmem:[%s301 + $0xe8] sm:$0x3]
          %v695 = vld [vmem:[%s301 + $0xea] sm:$0x3]
          %v696 = vld [vmem:[%s301 + $0xec] sm:$0x3]
          %v697 = vld [vmem:[%s301 + $0xee] sm:$0x3]
          %v698 = vld [vmem:[%s301 + $0xf0] sm:$0x3]
          %v699 = vld [vmem:[%s301 + $0xf2] sm:$0x3]
          %v700 = vld [vmem:[%s301 + $0xf4] sm:$0x3]
          %v701 = vld [vmem:[%s301 + $0xf6] sm:$0x3]
          %v702 = vld [vmem:[%s301 + $0xf8] sm:$0x3]
          %v703 = vld [vmem:[%s301 + $0xfa] sm:$0x3]
          %v704 = vld [vmem:[%s301 + $0xfc] sm:$0x3]
          %v705 = vld [vmem:[%s301 + $0xfe] sm:$0x3]
          %vm706 = vnez %v578
          %vm707 = vnez %v579
          %vm708 = vnez %v580
          %vm709 = vnez %v581
          %vm710 = vnez %v582
          %vm711 = vnez %v583
          %vm712 = vnez %v584
          %vm713 = vnez %v585
          %vm714 = vnez %v586
          %vm715 = vnez %v587
          %vm716 = vnez %v588
          %vm717 = vnez %v589
          %vm718 = vnez %v590
          %vm719 = vnez %v591
          %vm720 = vnez %v592
          %vm721 = vnez %v593
          %vm722 = vnez %v594
          %vm723 = vnez %v595
          %vm724 = vnez %v596
          %vm725 = vnez %v597
          %vm726 = vnez %v598
          %vm727 = vnez %v599
          %vm728 = vnez %v600
          %vm729 = vnez %v601
          %vm730 = vnez %v602
          %vm731 = vnez %v603
          %vm732 = vnez %v604
          %vm733 = vnez %v605
          %vm734 = vnez %v606
          %vm735 = vnez %v607
          %vm736 = vnez %v608
          %vm737 = vnez %v609
          %vm738 = vnez %v610
          %vm739 = vnez %v611
          %vm740 = vnez %v612
          %vm741 = vnez %v613
          %vm742 = vnez %v614
          %vm743 = vnez %v615
          %vm744 = vnez %v616
          %vm745 = vnez %v617
          %vm746 = vnez %v618
          %vm747 = vnez %v619
          %vm748 = vnez %v620
          %vm749 = vnez %v621
          %vm750 = vnez %v622
          %vm751 = vnez %v623
          %vm752 = vnez %v624
          %vm753 = vnez %v625
          %vm754 = vnez %v626
          %vm755 = vnez %v627
          %vm756 = vnez %v628
          %vm757 = vnez %v629
          %vm758 = vnez %v630
          %vm759 = vnez %v631
          %vm760 = vnez %v632
          %vm761 = vnez %v633
          %vm762 = vnez %v634
          %vm763 = vnez %v635
          %vm764 = vnez %v636
          %vm765 = vnez %v637
          %vm766 = vnez %v638
          %vm767 = vnez %v639
          %vm768 = vnez %v640
          %vm769 = vnez %v641
          %vm770 = vnez %v642
          %vm771 = vnez %v643
          %vm772 = vnez %v644
          %vm773 = vnez %v645
          %vm774 = vnez %v646
          %vm775 = vnez %v647
          %vm776 = vnez %v648
          %vm777 = vnez %v649
          %vm778 = vnez %v650
          %vm779 = vnez %v651
          %vm780 = vnez %v652
          %vm781 = vnez %v653
          %vm782 = vnez %v654
          %vm783 = vnez %v655
          %vm784 = vnez %v656
          %vm785 = vnez %v657
          %vm786 = vnez %v658
          %vm787 = vnez %v659
          %vm788 = vnez %v660
          %vm789 = vnez %v661
          %vm790 = vnez %v662
          %vm791 = vnez %v663
          %vm792 = vnez %v664
          %vm793 = vnez %v665
          %vm794 = vnez %v666
          %vm795 = vnez %v667
          %vm796 = vnez %v668
          %vm797 = vnez %v669
          %vm798 = vnez %v670
          %vm799 = vnez %v671
          %vm800 = vnez %v672
          %vm801 = vnez %v673
          %vm802 = vnez %v674
          %vm803 = vnez %v675
          %vm804 = vnez %v676
          %vm805 = vnez %v677
          %vm806 = vnez %v678
          %vm807 = vnez %v679
          %vm808 = vnez %v680
          %vm809 = vnez %v681
          %vm810 = vnez %v682
          %vm811 = vnez %v683
          %vm812 = vnez %v684
          %vm813 = vnez %v685
          %vm814 = vnez %v686
          %vm815 = vnez %v687
          %vm816 = vnez %v688
          %vm817 = vnez %v689
          %vm818 = vnez %v690
          %vm819 = vnez %v691
          %vm820 = vnez %v692
          %vm821 = vnez %v693
          %vm822 = vnez %v694
          %vm823 = vnez %v695
          %vm824 = vnez %v696
          %vm825 = vnez %v697
          %vm826 = vnez %v698
          %vm827 = vnez %v699
          %vm828 = vnez %v700
          %vm829 = vnez %v701
          %vm830 = vnez %v702
          %vm831 = vnez %v703
          %vm832 = vnez %v704
          %vm833 = vnez %v705
          %v834 = vld [vmem:[%s306] sm:$0x3]
          %vm835 = vnez %v834
          %v836 = vld [vmem:[#allocation7] sm:$0x3]
          %v837 = vsel %vm706, 16843009, 0
          %v838 = vsel %vm707, 16843009, 0
          %v839 = vsel %vm708, 16843009, 0
          %v840 = vsel %vm709, 16843009, 0
          %v841 = vsel %vm710, 16843009, 0
          %v842 = vsel %vm711, 16843009, 0
          %v843 = vsel %vm712, 16843009, 0
          %v844 = vsel %vm713, 16843009, 0
          %v845 = vsel %vm714, 16843009, 0
          %v846 = vsel %vm715, 16843009, 0
          %v847 = vsel %vm716, 16843009, 0
          %v848 = vsel %vm717, 16843009, 0
          %v849 = vsel %vm718, 16843009, 0
          %v850 = vsel %vm719, 16843009, 0
          %v851 = vsel %vm720, 16843009, 0
          %v852 = vsel %vm721, 16843009, 0
          %v853 = vsel %vm722, 16843009, 0
          %v854 = vsel %vm723, 16843009, 0
          %v855 = vsel %vm724, 16843009, 0
          %v856 = vsel %vm725, 16843009, 0
          %v857 = vsel %vm726, 16843009, 0
          %v858 = vsel %vm727, 16843009, 0
          %v859 = vsel %vm728, 16843009, 0
          %v860 = vsel %vm729, 16843009, 0
          %v861 = vsel %vm730, 16843009, 0
          %v862 = vsel %vm731, 16843009, 0
          %v863 = vsel %vm732, 16843009, 0
          %v864 = vsel %vm733, 16843009, 0
          %v865 = vsel %vm734, 16843009, 0
          %v866 = vsel %vm735, 16843009, 0
          %v867 = vsel %vm736, 16843009, 0
          %v868 = vsel %vm737, 16843009, 0
          %v869 = vsel %vm738, 16843009, 0
          %v870 = vsel %vm739, 16843009, 0
          %v871 = vsel %vm740, 16843009, 0
          %v872 = vsel %vm741, 16843009, 0
          %v873 = vsel %vm742, 16843009, 0
          %v874 = vsel %vm743, 16843009, 0
          %v875 = vsel %vm744, 16843009, 0
          %v876 = vsel %vm745, 16843009, 0
          %v877 = vsel %vm746, 16843009, 0
          %v878 = vsel %vm747, 16843009, 0
          %v879 = vsel %vm748, 16843009, 0
          %v880 = vsel %vm749, 16843009, 0
          %v881 = vsel %vm750, 16843009, 0
          %v882 = vsel %vm751, 16843009, 0
          %v883 = vsel %vm752, 16843009, 0
          %v884 = vsel %vm753, 16843009, 0
          %v885 = vsel %vm754, 16843009, 0
          %v886 = vsel %vm755, 16843009, 0
          %v887 = vsel %vm756, 16843009, 0
          %v888 = vsel %vm757, 16843009, 0
          %v889 = vsel %vm758, 16843009, 0
          %v890 = vsel %vm759, 16843009, 0
          %v891 = vsel %vm760, 16843009, 0
          %v892 = vsel %vm761, 16843009, 0
          %v893 = vsel %vm762, 16843009, 0
          %v894 = vsel %vm763, 16843009, 0
          %v895 = vsel %vm764, 16843009, 0
          %v896 = vsel %vm765, 16843009, 0
          %v897 = vsel %vm766, 16843009, 0
          %v898 = vsel %vm767, 16843009, 0
          %v899 = vsel %vm768, 16843009, 0
          %v900 = vsel %vm769, 16843009, 0
          %v901 = vsel %vm770, 16843009, 0
          %v902 = vsel %vm771, 16843009, 0
          %v903 = vsel %vm772, 16843009, 0
          %v904 = vsel %vm773, 16843009, 0
          %v905 = vsel %vm774, 16843009, 0
          %v906 = vsel %vm775, 16843009, 0
          %v907 = vsel %vm776, 16843009, 0
          %v908 = vsel %vm777, 16843009, 0
          %v909 = vsel %vm778, 16843009, 0
          %v910 = vsel %vm779, 16843009, 0
          %v911 = vsel %vm780, 16843009, 0
          %v912 = vsel %vm781, 16843009, 0
          %v913 = vsel %vm782, 16843009, 0
          %v914 = vsel %vm783, 16843009, 0
          %v915 = vsel %vm784, 16843009, 0
          %v916 = vsel %vm785, 16843009, 0
          %v917 = vsel %vm786, 16843009, 0
          %v918 = vsel %vm787, 16843009, 0
          %v919 = vsel %vm788, 16843009, 0
          %v920 = vsel %vm789, 16843009, 0
          %v921 = vsel %vm790, 16843009, 0
          %v922 = vsel %vm791, 16843009, 0
          %v923 = vsel %vm792, 16843009, 0
          %v924 = vsel %vm793, 16843009, 0
          %v925 = vsel %vm794, 16843009, 0
          %v926 = vsel %vm795, 16843009, 0
          %v927 = vsel %vm796, 16843009, 0
          %v928 = vsel %vm797, 16843009, 0
          %v929 = vsel %vm798, 16843009, 0
          %v930 = vsel %vm799, 16843009, 0
          %v931 = vsel %vm800, 16843009, 0
          %v932 = vsel %vm801, 16843009, 0
          %v933 = vsel %vm802, 16843009, 0
          %v934 = vsel %vm803, 16843009, 0
          %v935 = vsel %vm804, 16843009, 0
          %v936 = vsel %vm805, 16843009, 0
          %v937 = vsel %vm806, 16843009, 0
          %v938 = vsel %vm807, 16843009, 0
          %v939 = vsel %vm808, 16843009, 0
          %v940 = vsel %vm809, 16843009, 0
          %v941 = vsel %vm810, 16843009, 0
          %v942 = vsel %vm811, 16843009, 0
          %v943 = vsel %vm812, 16843009, 0
          %v944 = vsel %vm813, 16843009, 0
          %v945 = vsel %vm814, 16843009, 0
          %v946 = vsel %vm815, 16843009, 0
          %v947 = vsel %vm816, 16843009, 0
          %v948 = vsel %vm817, 16843009, 0
          %v949 = vsel %vm818, 16843009, 0
          %v950 = vsel %vm819, 16843009, 0
          %v951 = vsel %vm820, 16843009, 0
          %v952 = vsel %vm821, 16843009, 0
          %v953 = vsel %vm822, 16843009, 0
          %v954 = vsel %vm823, 16843009, 0
          %v955 = vsel %vm824, 16843009, 0
          %v956 = vsel %vm825, 16843009, 0
          %v957 = vsel %vm826, 16843009, 0
          %v958 = vsel %vm827, 16843009, 0
          %v959 = vsel %vm828, 16843009, 0
          %v960 = vsel %vm829, 16843009, 0
          %v961 = vsel %vm830, 16843009, 0
          %v962 = vsel %vm831, 16843009, 0
          %v963 = vsel %vm832, 16843009, 0
          %v964 = vsel %vm833, 16843009, 0
          %v965 = vunpack.c.0.s8 %v837
          %v966 = vunpack.c.0.s8 %v838
          %v967 = vunpack.c.0.s8 %v839
          %v968 = vunpack.c.0.s8 %v840
          %v969 = vunpack.c.0.s8 %v841
          %v970 = vunpack.c.0.s8 %v842
          %v971 = vunpack.c.0.s8 %v843
          %v972 = vunpack.c.0.s8 %v844
          %v973 = vunpack.c.0.s8 %v845
          %v974 = vunpack.c.0.s8 %v846
          %v975 = vunpack.c.0.s8 %v847
          %v976 = vunpack.c.0.s8 %v848
          %v977 = vunpack.c.0.s8 %v849
          %v978 = vunpack.c.0.s8 %v850
          %v979 = vunpack.c.0.s8 %v851
          %v980 = vunpack.c.0.s8 %v852
          %v981 = vunpack.c.0.s8 %v853
          %v982 = vunpack.c.0.s8 %v854
          %v983 = vunpack.c.0.s8 %v855
          %v984 = vunpack.c.0.s8 %v856
          %v985 = vunpack.c.0.s8 %v857
          %v986 = vunpack.c.0.s8 %v858
          %v987 = vunpack.c.0.s8 %v859
          %v988 = vunpack.c.0.s8 %v860
          %v989 = vunpack.c.0.s8 %v861
          %v990 = vunpack.c.0.s8 %v862
          %v991 = vunpack.c.0.s8 %v863
          %v992 = vunpack.c.0.s8 %v864
          %v993 = vunpack.c.0.s8 %v865
          %v994 = vunpack.c.0.s8 %v866
          %v995 = vunpack.c.0.s8 %v867
          %v996 = vunpack.c.0.s8 %v868
          %v997 = vunpack.c.0.s8 %v869
          %v998 = vunpack.c.0.s8 %v870
          %v999 = vunpack.c.0.s8 %v871
          %v1000 = vunpack.c.0.s8 %v872
          %v1001 = vunpack.c.0.s8 %v873
          %v1002 = vunpack.c.0.s8 %v874
          %v1003 = vunpack.c.0.s8 %v875
          %v1004 = vunpack.c.0.s8 %v876
          %v1005 = vunpack.c.0.s8 %v877
          %v1006 = vunpack.c.0.s8 %v878
          %v1007 = vunpack.c.0.s8 %v879
          %v1008 = vunpack.c.0.s8 %v880
          %v1009 = vunpack.c.0.s8 %v881
          %v1010 = vunpack.c.0.s8 %v882
          %v1011 = vunpack.c.0.s8 %v883
          %v1012 = vunpack.c.0.s8 %v884
          %v1013 = vunpack.c.0.s8 %v885
          %v1014 = vunpack.c.0.s8 %v886
          %v1015 = vunpack.c.0.s8 %v887
          %v1016 = vunpack.c.0.s8 %v888
          %v1017 = vunpack.c.0.s8 %v889
          %v1018 = vunpack.c.0.s8 %v890
          %v1019 = vunpack.c.0.s8 %v891
          %v1020 = vunpack.c.0.s8 %v892
          %v1021 = vunpack.c.0.s8 %v893
          %v1022 = vunpack.c.0.s8 %v894
          %v1023 = vunpack.c.0.s8 %v895
          %v1024 = vunpack.c.0.s8 %v896
          %v1025 = vunpack.c.0.s8 %v897
          %v1026 = vunpack.c.0.s8 %v898
          %v1027 = vunpack.c.0.s8 %v899
          %v1028 = vunpack.c.0.s8 %v900
          %v1029 = vunpack.c.0.s8 %v901
          %v1030 = vunpack.c.0.s8 %v902
          %v1031 = vunpack.c.0.s8 %v903
          %v1032 = vunpack.c.0.s8 %v904
          %v1033 = vunpack.c.0.s8 %v905
          %v1034 = vunpack.c.0.s8 %v906
          %v1035 = vunpack.c.0.s8 %v907
          %v1036 = vunpack.c.0.s8 %v908
          %v1037 = vunpack.c.0.s8 %v909
          %v1038 = vunpack.c.0.s8 %v910
          %v1039 = vunpack.c.0.s8 %v911
          %v1040 = vunpack.c.0.s8 %v912
          %v1041 = vunpack.c.0.s8 %v913
          %v1042 = vunpack.c.0.s8 %v914
          %v1043 = vunpack.c.0.s8 %v915
          %v1044 = vunpack.c.0.s8 %v916
          %v1045 = vunpack.c.0.s8 %v917
          %v1046 = vunpack.c.0.s8 %v918
          %v1047 = vunpack.c.0.s8 %v919
          %v1048 = vunpack.c.0.s8 %v920
          %v1049 = vunpack.c.0.s8 %v921
          %v1050 = vunpack.c.0.s8 %v922
          %v1051 = vunpack.c.0.s8 %v923
          %v1052 = vunpack.c.0.s8 %v924
          %v1053 = vunpack.c.0.s8 %v925
          %v1054 = vunpack.c.0.s8 %v926
          %v1055 = vunpack.c.0.s8 %v927
          %v1056 = vunpack.c.0.s8 %v928
          %v1057 = vunpack.c.0.s8 %v929
          %v1058 = vunpack.c.0.s8 %v930
          %v1059 = vunpack.c.0.s8 %v931
          %v1060 = vunpack.c.0.s8 %v932
          %v1061 = vunpack.c.0.s8 %v933
          %v1062 = vunpack.c.0.s8 %v934
          %v1063 = vunpack.c.0.s8 %v935
          %v1064 = vunpack.c.0.s8 %v936
          %v1065 = vunpack.c.0.s8 %v937
          %v1066 = vunpack.c.0.s8 %v938
          %v1067 = vunpack.c.0.s8 %v939
          %v1068 = vunpack.c.0.s8 %v940
          %v1069 = vunpack.c.0.s8 %v941
          %v1070 = vunpack.c.0.s8 %v942
          %v1071 = vunpack.c.0.s8 %v943
          %v1072 = vunpack.c.0.s8 %v944
          %v1073 = vunpack.c.0.s8 %v945
          %v1074 = vunpack.c.0.s8 %v946
          %v1075 = vunpack.c.0.s8 %v947
          %v1076 = vunpack.c.0.s8 %v948
          %v1077 = vunpack.c.0.s8 %v949
          %v1078 = vunpack.c.0.s8 %v950
          %v1079 = vunpack.c.0.s8 %v951
          %v1080 = vunpack.c.0.s8 %v952
          %v1081 = vunpack.c.0.s8 %v953
          %v1082 = vunpack.c.0.s8 %v954
          %v1083 = vunpack.c.0.s8 %v955
          %v1084 = vunpack.c.0.s8 %v956
          %v1085 = vunpack.c.0.s8 %v957
          %v1086 = vunpack.c.0.s8 %v958
          %v1087 = vunpack.c.0.s8 %v959
          %v1088 = vunpack.c.0.s8 %v960
          %v1089 = vunpack.c.0.s8 %v961
          %v1090 = vunpack.c.0.s8 %v962
          %v1091 = vunpack.c.0.s8 %v963
          %v1092 = vunpack.c.0.s8 %v964
          %vm1093 = vcmp.ne.s32.totalorder %v965, 0
          %vm1094 = vcmp.ne.s32.totalorder %v966, 0
          %vm1095 = vcmp.ne.s32.totalorder %v967, 0
          %vm1096 = vcmp.ne.s32.totalorder %v968, 0
          %vm1097 = vcmp.ne.s32.totalorder %v969, 0
          %vm1098 = vcmp.ne.s32.totalorder %v970, 0
          %vm1099 = vcmp.ne.s32.totalorder %v971, 0
          %vm1100 = vcmp.ne.s32.totalorder %v972, 0
          %vm1101 = vcmp.ne.s32.totalorder %v973, 0
          %vm1102 = vcmp.ne.s32.totalorder %v974, 0
          %vm1103 = vcmp.ne.s32.totalorder %v975, 0
          %vm1104 = vcmp.ne.s32.totalorder %v976, 0
          %vm1105 = vcmp.ne.s32.totalorder %v977, 0
          %vm1106 = vcmp.ne.s32.totalorder %v978, 0
          %vm1107 = vcmp.ne.s32.totalorder %v979, 0
          %vm1108 = vcmp.ne.s32.totalorder %v980, 0
          %vm1109 = vcmp.ne.s32.totalorder %v981, 0
          %vm1110 = vcmp.ne.s32.totalorder %v982, 0
          %vm1111 = vcmp.ne.s32.totalorder %v983, 0
          %vm1112 = vcmp.ne.s32.totalorder %v984, 0
          %vm1113 = vcmp.ne.s32.totalorder %v985, 0
          %vm1114 = vcmp.ne.s32.totalorder %v986, 0
          %vm1115 = vcmp.ne.s32.totalorder %v987, 0
          %vm1116 = vcmp.ne.s32.totalorder %v988, 0
          %vm1117 = vcmp.ne.s32.totalorder %v989, 0
          %vm1118 = vcmp.ne.s32.totalorder %v990, 0
          %vm1119 = vcmp.ne.s32.totalorder %v991, 0
          %vm1120 = vcmp.ne.s32.totalorder %v992, 0
          %vm1121 = vcmp.ne.s32.totalorder %v993, 0
          %vm1122 = vcmp.ne.s32.totalorder %v994, 0
          %vm1123 = vcmp.ne.s32.totalorder %v995, 0
          %vm1124 = vcmp.ne.s32.totalorder %v996, 0
          %vm1125 = vcmp.ne.s32.totalorder %v997, 0
          %vm1126 = vcmp.ne.s32.totalorder %v998, 0
          %vm1127 = vcmp.ne.s32.totalorder %v999, 0
          %vm1128 = vcmp.ne.s32.totalorder %v1000, 0
          %vm1129 = vcmp.ne.s32.totalorder %v1001, 0
          %vm1130 = vcmp.ne.s32.totalorder %v1002, 0
          %vm1131 = vcmp.ne.s32.totalorder %v1003, 0
          %vm1132 = vcmp.ne.s32.totalorder %v1004, 0
          %vm1133 = vcmp.ne.s32.totalorder %v1005, 0
          %vm1134 = vcmp.ne.s32.totalorder %v1006, 0
          %vm1135 = vcmp.ne.s32.totalorder %v1007, 0
          %vm1136 = vcmp.ne.s32.totalorder %v1008, 0
          %vm1137 = vcmp.ne.s32.totalorder %v1009, 0
          %vm1138 = vcmp.ne.s32.totalorder %v1010, 0
          %vm1139 = vcmp.ne.s32.totalorder %v1011, 0
          %vm1140 = vcmp.ne.s32.totalorder %v1012, 0
          %vm1141 = vcmp.ne.s32.totalorder %v1013, 0
          %vm1142 = vcmp.ne.s32.totalorder %v1014, 0
          %vm1143 = vcmp.ne.s32.totalorder %v1015, 0
          %vm1144 = vcmp.ne.s32.totalorder %v1016, 0
          %vm1145 = vcmp.ne.s32.totalorder %v1017, 0
          %vm1146 = vcmp.ne.s32.totalorder %v1018, 0
          %vm1147 = vcmp.ne.s32.totalorder %v1019, 0
          %vm1148 = vcmp.ne.s32.totalorder %v1020, 0
          %vm1149 = vcmp.ne.s32.totalorder %v1021, 0
          %vm1150 = vcmp.ne.s32.totalorder %v1022, 0
          %vm1151 = vcmp.ne.s32.totalorder %v1023, 0
          %vm1152 = vcmp.ne.s32.totalorder %v1024, 0
          %vm1153 = vcmp.ne.s32.totalorder %v1025, 0
          %vm1154 = vcmp.ne.s32.totalorder %v1026, 0
          %vm1155 = vcmp.ne.s32.totalorder %v1027, 0
          %vm1156 = vcmp.ne.s32.totalorder %v1028, 0
          %vm1157 = vcmp.ne.s32.totalorder %v1029, 0
          %vm1158 = vcmp.ne.s32.totalorder %v1030, 0
          %vm1159 = vcmp.ne.s32.totalorder %v1031, 0
          %vm1160 = vcmp.ne.s32.totalorder %v1032, 0
          %vm1161 = vcmp.ne.s32.totalorder %v1033, 0
          %vm1162 = vcmp.ne.s32.totalorder %v1034, 0
          %vm1163 = vcmp.ne.s32.totalorder %v1035, 0
          %vm1164 = vcmp.ne.s32.totalorder %v1036, 0
          %vm1165 = vcmp.ne.s32.totalorder %v1037, 0
          %vm1166 = vcmp.ne.s32.totalorder %v1038, 0
          %vm1167 = vcmp.ne.s32.totalorder %v1039, 0
          %vm1168 = vcmp.ne.s32.totalorder %v1040, 0
          %vm1169 = vcmp.ne.s32.totalorder %v1041, 0
          %vm1170 = vcmp.ne.s32.totalorder %v1042, 0
          %vm1171 = vcmp.ne.s32.totalorder %v1043, 0
          %vm1172 = vcmp.ne.s32.totalorder %v1044, 0
          %vm1173 = vcmp.ne.s32.totalorder %v1045, 0
          %vm1174 = vcmp.ne.s32.totalorder %v1046, 0
          %vm1175 = vcmp.ne.s32.totalorder %v1047, 0
          %vm1176 = vcmp.ne.s32.totalorder %v1048, 0
          %vm1177 = vcmp.ne.s32.totalorder %v1049, 0
          %vm1178 = vcmp.ne.s32.totalorder %v1050, 0
          %vm1179 = vcmp.ne.s32.totalorder %v1051, 0
          %vm1180 = vcmp.ne.s32.totalorder %v1052, 0
          %vm1181 = vcmp.ne.s32.totalorder %v1053, 0
          %vm1182 = vcmp.ne.s32.totalorder %v1054, 0
          %vm1183 = vcmp.ne.s32.totalorder %v1055, 0
          %vm1184 = vcmp.ne.s32.totalorder %v1056, 0
          %vm1185 = vcmp.ne.s32.totalorder %v1057, 0
          %vm1186 = vcmp.ne.s32.totalorder %v1058, 0
          %vm1187 = vcmp.ne.s32.totalorder %v1059, 0
          %vm1188 = vcmp.ne.s32.totalorder %v1060, 0
          %vm1189 = vcmp.ne.s32.totalorder %v1061, 0
          %vm1190 = vcmp.ne.s32.totalorder %v1062, 0
          %vm1191 = vcmp.ne.s32.totalorder %v1063, 0
          %vm1192 = vcmp.ne.s32.totalorder %v1064, 0
          %vm1193 = vcmp.ne.s32.totalorder %v1065, 0
          %vm1194 = vcmp.ne.s32.totalorder %v1066, 0
          %vm1195 = vcmp.ne.s32.totalorder %v1067, 0
          %vm1196 = vcmp.ne.s32.totalorder %v1068, 0
          %vm1197 = vcmp.ne.s32.totalorder %v1069, 0
          %vm1198 = vcmp.ne.s32.totalorder %v1070, 0
          %vm1199 = vcmp.ne.s32.totalorder %v1071, 0
          %vm1200 = vcmp.ne.s32.totalorder %v1072, 0
          %vm1201 = vcmp.ne.s32.totalorder %v1073, 0
          %vm1202 = vcmp.ne.s32.totalorder %v1074, 0
          %vm1203 = vcmp.ne.s32.totalorder %v1075, 0
          %vm1204 = vcmp.ne.s32.totalorder %v1076, 0
          %vm1205 = vcmp.ne.s32.totalorder %v1077, 0
          %vm1206 = vcmp.ne.s32.totalorder %v1078, 0
          %vm1207 = vcmp.ne.s32.totalorder %v1079, 0
          %vm1208 = vcmp.ne.s32.totalorder %v1080, 0
          %vm1209 = vcmp.ne.s32.totalorder %v1081, 0
          %vm1210 = vcmp.ne.s32.totalorder %v1082, 0
          %vm1211 = vcmp.ne.s32.totalorder %v1083, 0
          %vm1212 = vcmp.ne.s32.totalorder %v1084, 0
          %vm1213 = vcmp.ne.s32.totalorder %v1085, 0
          %vm1214 = vcmp.ne.s32.totalorder %v1086, 0
          %vm1215 = vcmp.ne.s32.totalorder %v1087, 0
          %vm1216 = vcmp.ne.s32.totalorder %v1088, 0
          %vm1217 = vcmp.ne.s32.totalorder %v1089, 0
          %vm1218 = vcmp.ne.s32.totalorder %v1090, 0
          %vm1219 = vcmp.ne.s32.totalorder %v1091, 0
          %vm1220 = vcmp.ne.s32.totalorder %v1092, 0
          %v1221 = vsel %vm1093, 1, 0
          %v1222 = vsel %vm1094, 1, 0
          %v1223 = vsel %vm1095, 1, 0
          %v1224 = vsel %vm1096, 1, 0
          %v1225 = vsel %vm1097, 1, 0
          %v1226 = vsel %vm1098, 1, 0
          %v1227 = vsel %vm1099, 1, 0
          %v1228 = vsel %vm1100, 1, 0
          %v1229 = vsel %vm1101, 1, 0
          %v1230 = vsel %vm1102, 1, 0
          %v1231 = vsel %vm1103, 1, 0
          %v1232 = vsel %vm1104, 1, 0
          %v1233 = vsel %vm1105, 1, 0
          %v1234 = vsel %vm1106, 1, 0
          %v1235 = vsel %vm1107, 1, 0
          %v1236 = vsel %vm1108, 1, 0
          %v1237 = vsel %vm1109, 1, 0
          %v1238 = vsel %vm1110, 1, 0
          %v1239 = vsel %vm1111, 1, 0
          %v1240 = vsel %vm1112, 1, 0
          %v1241 = vsel %vm1113, 1, 0
          %v1242 = vsel %vm1114, 1, 0
          %v1243 = vsel %vm1115, 1, 0
          %v1244 = vsel %vm1116, 1, 0
          %v1245 = vsel %vm1117, 1, 0
          %v1246 = vsel %vm1118, 1, 0
          %v1247 = vsel %vm1119, 1, 0
          %v1248 = vsel %vm1120, 1, 0
          %v1249 = vsel %vm1121, 1, 0
          %v1250 = vsel %vm1122, 1, 0
          %v1251 = vsel %vm1123, 1, 0
          %v1252 = vsel %vm1124, 1, 0
          %v1253 = vsel %vm1125, 1, 0
          %v1254 = vsel %vm1126, 1, 0
          %v1255 = vsel %vm1127, 1, 0
          %v1256 = vsel %vm1128, 1, 0
          %v1257 = vsel %vm1129, 1, 0
          %v1258 = vsel %vm1130, 1, 0
          %v1259 = vsel %vm1131, 1, 0
          %v1260 = vsel %vm1132, 1, 0
          %v1261 = vsel %vm1133, 1, 0
          %v1262 = vsel %vm1134, 1, 0
          %v1263 = vsel %vm1135, 1, 0
          %v1264 = vsel %vm1136, 1, 0
          %v1265 = vsel %vm1137, 1, 0
          %v1266 = vsel %vm1138, 1, 0
          %v1267 = vsel %vm1139, 1, 0
          %v1268 = vsel %vm1140, 1, 0
          %v1269 = vsel %vm1141, 1, 0
          %v1270 = vsel %vm1142, 1, 0
          %v1271 = vsel %vm1143, 1, 0
          %v1272 = vsel %vm1144, 1, 0
          %v1273 = vsel %vm1145, 1, 0
          %v1274 = vsel %vm1146, 1, 0
          %v1275 = vsel %vm1147, 1, 0
          %v1276 = vsel %vm1148, 1, 0
          %v1277 = vsel %vm1149, 1, 0
          %v1278 = vsel %vm1150, 1, 0
          %v1279 = vsel %vm1151, 1, 0
          %v1280 = vsel %vm1152, 1, 0
          %v1281 = vsel %vm1153, 1, 0
          %v1282 = vsel %vm1154, 1, 0
          %v1283 = vsel %vm1155, 1, 0
          %v1284 = vsel %vm1156, 1, 0
          %v1285 = vsel %vm1157, 1, 0
          %v1286 = vsel %vm1158, 1, 0
          %v1287 = vsel %vm1159, 1, 0
          %v1288 = vsel %vm1160, 1, 0
          %v1289 = vsel %vm1161, 1, 0
          %v1290 = vsel %vm1162, 1, 0
          %v1291 = vsel %vm1163, 1, 0
          %v1292 = vsel %vm1164, 1, 0
          %v1293 = vsel %vm1165, 1, 0
          %v1294 = vsel %vm1166, 1, 0
          %v1295 = vsel %vm1167, 1, 0
          %v1296 = vsel %vm1168, 1, 0
          %v1297 = vsel %vm1169, 1, 0
          %v1298 = vsel %vm1170, 1, 0
          %v1299 = vsel %vm1171, 1, 0
          %v1300 = vsel %vm1172, 1, 0
          %v1301 = vsel %vm1173, 1, 0
          %v1302 = vsel %vm1174, 1, 0
          %v1303 = vsel %vm1175, 1, 0
          %v1304 = vsel %vm1176, 1, 0
          %v1305 = vsel %vm1177, 1, 0
          %v1306 = vsel %vm1178, 1, 0
          %v1307 = vsel %vm1179, 1, 0
          %v1308 = vsel %vm1180, 1, 0
          %v1309 = vsel %vm1181, 1, 0
          %v1310 = vsel %vm1182, 1, 0
          %v1311 = vsel %vm1183, 1, 0
          %v1312 = vsel %vm1184, 1, 0
          %v1313 = vsel %vm1185, 1, 0
          %v1314 = vsel %vm1186, 1, 0
          %v1315 = vsel %vm1187, 1, 0
          %v1316 = vsel %vm1188, 1, 0
          %v1317 = vsel %vm1189, 1, 0
          %v1318 = vsel %vm1190, 1, 0
          %v1319 = vsel %vm1191, 1, 0
          %v1320 = vsel %vm1192, 1, 0
          %v1321 = vsel %vm1193, 1, 0
          %v1322 = vsel %vm1194, 1, 0
          %v1323 = vsel %vm1195, 1, 0
          %v1324 = vsel %vm1196, 1, 0
          %v1325 = vsel %vm1197, 1, 0
          %v1326 = vsel %vm1198, 1, 0
          %v1327 = vsel %vm1199, 1, 0
          %v1328 = vsel %vm1200, 1, 0
          %v1329 = vsel %vm1201, 1, 0
          %v1330 = vsel %vm1202, 1, 0
          %v1331 = vsel %vm1203, 1, 0
          %v1332 = vsel %vm1204, 1, 0
          %v1333 = vsel %vm1205, 1, 0
          %v1334 = vsel %vm1206, 1, 0
          %v1335 = vsel %vm1207, 1, 0
          %v1336 = vsel %vm1208, 1, 0
          %v1337 = vsel %vm1209, 1, 0
          %v1338 = vsel %vm1210, 1, 0
          %v1339 = vsel %vm1211, 1, 0
          %v1340 = vsel %vm1212, 1, 0
          %v1341 = vsel %vm1213, 1, 0
          %v1342 = vsel %vm1214, 1, 0
          %v1343 = vsel %vm1215, 1, 0
          %v1344 = vsel %vm1216, 1, 0
          %v1345 = vsel %vm1217, 1, 0
          %v1346 = vsel %vm1218, 1, 0
          %v1347 = vsel %vm1219, 1, 0
          %v1348 = vsel %vm1220, 1, 0
          %1349 = vset.pattern.permute.xlu0 0
          %1350 = vperm.xlu0 %1349, %v1221
          %v1351 = vpop.permute.xlu0 %1350
          %1352 = vset.pattern.permute.xlu0 0
          %1353 = vperm.xlu0 %1352, %v1222
          %v1354 = vpop.permute.xlu0 %1353
          %1355 = vset.pattern.permute.xlu0 0
          %1356 = vperm.xlu0 %1355, %v1223
          %v1357 = vpop.permute.xlu0 %1356
          %1358 = vset.pattern.permute.xlu0 0
          %1359 = vperm.xlu0 %1358, %v1224
          %v1360 = vpop.permute.xlu0 %1359
          %1361 = vset.pattern.permute.xlu0 0
          %1362 = vperm.xlu0 %1361, %v1225
          %v1363 = vpop.permute.xlu0 %1362
          %1364 = vset.pattern.permute.xlu0 0
          %1365 = vperm.xlu0 %1364, %v1226
          %v1366 = vpop.permute.xlu0 %1365
          %1367 = vset.pattern.permute.xlu0 0
          %1368 = vperm.xlu0 %1367, %v1227
          %v1369 = vpop.permute.xlu0 %1368
          %1370 = vset.pattern.permute.xlu0 0
          %1371 = vperm.xlu0 %1370, %v1228
          %v1372 = vpop.permute.xlu0 %1371
          %1373 = vset.pattern.permute.xlu0 0
          %1374 = vperm.xlu0 %1373, %v1229
          %v1375 = vpop.permute.xlu0 %1374
          %1376 = vset.pattern.permute.xlu0 0
          %1377 = vperm.xlu0 %1376, %v1230
          %v1378 = vpop.permute.xlu0 %1377
          %1379 = vset.pattern.permute.xlu0 0
          %1380 = vperm.xlu0 %1379, %v1231
          %v1381 = vpop.permute.xlu0 %1380
          %1382 = vset.pattern.permute.xlu0 0
          %1383 = vperm.xlu0 %1382, %v1232
          %v1384 = vpop.permute.xlu0 %1383
          %1385 = vset.pattern.permute.xlu0 0
          %1386 = vperm.xlu0 %1385, %v1233
          %v1387 = vpop.permute.xlu0 %1386
          %1388 = vset.pattern.permute.xlu0 0
          %1389 = vperm.xlu0 %1388, %v1234
          %v1390 = vpop.permute.xlu0 %1389
          %1391 = vset.pattern.permute.xlu0 0
          %1392 = vperm.xlu0 %1391, %v1235
          %v1393 = vpop.permute.xlu0 %1392
          %1394 = vset.pattern.permute.xlu0 0
          %1395 = vperm.xlu0 %1394, %v1236
          %v1396 = vpop.permute.xlu0 %1395
          %1397 = vset.pattern.permute.xlu0 0
          %1398 = vperm.xlu0 %1397, %v1237
          %v1399 = vpop.permute.xlu0 %1398
          %1400 = vset.pattern.permute.xlu0 0
          %1401 = vperm.xlu0 %1400, %v1238
          %v1402 = vpop.permute.xlu0 %1401
          %1403 = vset.pattern.permute.xlu0 0
          %1404 = vperm.xlu0 %1403, %v1239
          %v1405 = vpop.permute.xlu0 %1404
          %1406 = vset.pattern.permute.xlu0 0
          %1407 = vperm.xlu0 %1406, %v1240
          %v1408 = vpop.permute.xlu0 %1407
          %1409 = vset.pattern.permute.xlu0 0
          %1410 = vperm.xlu0 %1409, %v1241
          %v1411 = vpop.permute.xlu0 %1410
          %1412 = vset.pattern.permute.xlu0 0
          %1413 = vperm.xlu0 %1412, %v1242
          %v1414 = vpop.permute.xlu0 %1413
          %1415 = vset.pattern.permute.xlu0 0
          %1416 = vperm.xlu0 %1415, %v1243
          %v1417 = vpop.permute.xlu0 %1416
          %1418 = vset.pattern.permute.xlu0 0
          %1419 = vperm.xlu0 %1418, %v1244
          %v1420 = vpop.permute.xlu0 %1419
          %1421 = vset.pattern.permute.xlu0 0
          %1422 = vperm.xlu0 %1421, %v1245
          %v1423 = vpop.permute.xlu0 %1422
          %1424 = vset.pattern.permute.xlu0 0
          %1425 = vperm.xlu0 %1424, %v1246
          %v1426 = vpop.permute.xlu0 %1425
          %1427 = vset.pattern.permute.xlu0 0
          %1428 = vperm.xlu0 %1427, %v1247
          %v1429 = vpop.permute.xlu0 %1428
          %1430 = vset.pattern.permute.xlu0 0
          %1431 = vperm.xlu0 %1430, %v1248
          %v1432 = vpop.permute.xlu0 %1431
          %1433 = vset.pattern.permute.xlu0 0
          %1434 = vperm.xlu0 %1433, %v1249
          %v1435 = vpop.permute.xlu0 %1434
          %1436 = vset.pattern.permute.xlu0 0
          %1437 = vperm.xlu0 %1436, %v1250
          %v1438 = vpop.permute.xlu0 %1437
          %1439 = vset.pattern.permute.xlu0 0
          %1440 = vperm.xlu0 %1439, %v1251
          %v1441 = vpop.permute.xlu0 %1440
          %1442 = vset.pattern.permute.xlu0 0
          %1443 = vperm.xlu0 %1442, %v1252
          %v1444 = vpop.permute.xlu0 %1443
          %1445 = vset.pattern.permute.xlu0 0
          %1446 = vperm.xlu0 %1445, %v1253
          %v1447 = vpop.permute.xlu0 %1446
          %1448 = vset.pattern.permute.xlu0 0
          %1449 = vperm.xlu0 %1448, %v1254
          %v1450 = vpop.permute.xlu0 %1449
          %1451 = vset.pattern.permute.xlu0 0
          %1452 = vperm.xlu0 %1451, %v1255
          %v1453 = vpop.permute.xlu0 %1452
          %1454 = vset.pattern.permute.xlu0 0
          %1455 = vperm.xlu0 %1454, %v1256
          %v1456 = vpop.permute.xlu0 %1455
          %1457 = vset.pattern.permute.xlu0 0
          %1458 = vperm.xlu0 %1457, %v1257
          %v1459 = vpop.permute.xlu0 %1458
          %1460 = vset.pattern.permute.xlu0 0
          %1461 = vperm.xlu0 %1460, %v1258
          %v1462 = vpop.permute.xlu0 %1461
          %1463 = vset.pattern.permute.xlu0 0
          %1464 = vperm.xlu0 %1463, %v1259
          %v1465 = vpop.permute.xlu0 %1464
          %1466 = vset.pattern.permute.xlu0 0
          %1467 = vperm.xlu0 %1466, %v1260
          %v1468 = vpop.permute.xlu0 %1467
          %1469 = vset.pattern.permute.xlu0 0
          %1470 = vperm.xlu0 %1469, %v1261
          %v1471 = vpop.permute.xlu0 %1470
          %1472 = vset.pattern.permute.xlu0 0
          %1473 = vperm.xlu0 %1472, %v1262
          %v1474 = vpop.permute.xlu0 %1473
          %1475 = vset.pattern.permute.xlu0 0
          %1476 = vperm.xlu0 %1475, %v1263
          %v1477 = vpop.permute.xlu0 %1476
          %1478 = vset.pattern.permute.xlu0 0
          %1479 = vperm.xlu0 %1478, %v1264
          %v1480 = vpop.permute.xlu0 %1479
          %1481 = vset.pattern.permute.xlu0 0
          %1482 = vperm.xlu0 %1481, %v1265
          %v1483 = vpop.permute.xlu0 %1482
          %1484 = vset.pattern.permute.xlu0 0
          %1485 = vperm.xlu0 %1484, %v1266
          %v1486 = vpop.permute.xlu0 %1485
          %1487 = vset.pattern.permute.xlu0 0
          %1488 = vperm.xlu0 %1487, %v1267
          %v1489 = vpop.permute.xlu0 %1488
          %1490 = vset.pattern.permute.xlu0 0
          %1491 = vperm.xlu0 %1490, %v1268
          %v1492 = vpop.permute.xlu0 %1491
          %1493 = vset.pattern.permute.xlu0 0
          %1494 = vperm.xlu0 %1493, %v1269
          %v1495 = vpop.permute.xlu0 %1494
          %1496 = vset.pattern.permute.xlu0 0
          %1497 = vperm.xlu0 %1496, %v1270
          %v1498 = vpop.permute.xlu0 %1497
          %1499 = vset.pattern.permute.xlu0 0
          %1500 = vperm.xlu0 %1499, %v1271
          %v1501 = vpop.permute.xlu0 %1500
          %1502 = vset.pattern.permute.xlu0 0
          %1503 = vperm.xlu0 %1502, %v1272
          %v1504 = vpop.permute.xlu0 %1503
          %1505 = vset.pattern.permute.xlu0 0
          %1506 = vperm.xlu0 %1505, %v1273
          %v1507 = vpop.permute.xlu0 %1506
          %1508 = vset.pattern.permute.xlu0 0
          %1509 = vperm.xlu0 %1508, %v1274
          %v1510 = vpop.permute.xlu0 %1509
          %1511 = vset.pattern.permute.xlu0 0
          %1512 = vperm.xlu0 %1511, %v1275
          %v1513 = vpop.permute.xlu0 %1512
          %1514 = vset.pattern.permute.xlu0 0
          %1515 = vperm.xlu0 %1514, %v1276
          %v1516 = vpop.permute.xlu0 %1515
          %1517 = vset.pattern.permute.xlu0 0
          %1518 = vperm.xlu0 %1517, %v1277
          %v1519 = vpop.permute.xlu0 %1518
          %1520 = vset.pattern.permute.xlu0 0
          %1521 = vperm.xlu0 %1520, %v1278
          %v1522 = vpop.permute.xlu0 %1521
          %1523 = vset.pattern.permute.xlu0 0
          %1524 = vperm.xlu0 %1523, %v1279
          %v1525 = vpop.permute.xlu0 %1524
          %1526 = vset.pattern.permute.xlu0 0
          %1527 = vperm.xlu0 %1526, %v1280
          %v1528 = vpop.permute.xlu0 %1527
          %1529 = vset.pattern.permute.xlu0 0
          %1530 = vperm.xlu0 %1529, %v1281
          %v1531 = vpop.permute.xlu0 %1530
          %1532 = vset.pattern.permute.xlu0 0
          %1533 = vperm.xlu0 %1532, %v1282
          %v1534 = vpop.permute.xlu0 %1533
          %1535 = vset.pattern.permute.xlu0 0
          %1536 = vperm.xlu0 %1535, %v1283
          %v1537 = vpop.permute.xlu0 %1536
          %1538 = vset.pattern.permute.xlu0 0
          %1539 = vperm.xlu0 %1538, %v1284
          %v1540 = vpop.permute.xlu0 %1539
          %1541 = vset.pattern.permute.xlu0 0
          %1542 = vperm.xlu0 %1541, %v1285
          %v1543 = vpop.permute.xlu0 %1542
          %1544 = vset.pattern.permute.xlu0 0
          %1545 = vperm.xlu0 %1544, %v1286
          %v1546 = vpop.permute.xlu0 %1545
          %1547 = vset.pattern.permute.xlu0 0
          %1548 = vperm.xlu0 %1547, %v1287
          %v1549 = vpop.permute.xlu0 %1548
          %1550 = vset.pattern.permute.xlu0 0
          %1551 = vperm.xlu0 %1550, %v1288
          %v1552 = vpop.permute.xlu0 %1551
          %1553 = vset.pattern.permute.xlu0 0
          %1554 = vperm.xlu0 %1553, %v1289
          %v1555 = vpop.permute.xlu0 %1554
          %1556 = vset.pattern.permute.xlu0 0
          %1557 = vperm.xlu0 %1556, %v1290
          %v1558 = vpop.permute.xlu0 %1557
          %1559 = vset.pattern.permute.xlu0 0
          %1560 = vperm.xlu0 %1559, %v1291
          %v1561 = vpop.permute.xlu0 %1560
          %1562 = vset.pattern.permute.xlu0 0
          %1563 = vperm.xlu0 %1562, %v1292
          %v1564 = vpop.permute.xlu0 %1563
          %1565 = vset.pattern.permute.xlu0 0
          %1566 = vperm.xlu0 %1565, %v1293
          %v1567 = vpop.permute.xlu0 %1566
          %1568 = vset.pattern.permute.xlu0 0
          %1569 = vperm.xlu0 %1568, %v1294
          %v1570 = vpop.permute.xlu0 %1569
          %1571 = vset.pattern.permute.xlu0 0
          %1572 = vperm.xlu0 %1571, %v1295
          %v1573 = vpop.permute.xlu0 %1572
          %1574 = vset.pattern.permute.xlu0 0
          %1575 = vperm.xlu0 %1574, %v1296
          %v1576 = vpop.permute.xlu0 %1575
          %1577 = vset.pattern.permute.xlu0 0
          %1578 = vperm.xlu0 %1577, %v1297
          %v1579 = vpop.permute.xlu0 %1578
          %1580 = vset.pattern.permute.xlu0 0
          %1581 = vperm.xlu0 %1580, %v1298
          %v1582 = vpop.permute.xlu0 %1581
          %1583 = vset.pattern.permute.xlu0 0
          %1584 = vperm.xlu0 %1583, %v1299
          %v1585 = vpop.permute.xlu0 %1584
          %1586 = vset.pattern.permute.xlu0 0
          %1587 = vperm.xlu0 %1586, %v1300
          %v1588 = vpop.permute.xlu0 %1587
          %1589 = vset.pattern.permute.xlu0 0
          %1590 = vperm.xlu0 %1589, %v1301
          %v1591 = vpop.permute.xlu0 %1590
          %1592 = vset.pattern.permute.xlu0 0
          %1593 = vperm.xlu0 %1592, %v1302
          %v1594 = vpop.permute.xlu0 %1593
          %1595 = vset.pattern.permute.xlu0 0
          %1596 = vperm.xlu0 %1595, %v1303
          %v1597 = vpop.permute.xlu0 %1596
          %1598 = vset.pattern.permute.xlu0 0
          %1599 = vperm.xlu0 %1598, %v1304
          %v1600 = vpop.permute.xlu0 %1599
          %1601 = vset.pattern.permute.xlu0 0
          %1602 = vperm.xlu0 %1601, %v1305
          %v1603 = vpop.permute.xlu0 %1602
          %1604 = vset.pattern.permute.xlu0 0
          %1605 = vperm.xlu0 %1604, %v1306
          %v1606 = vpop.permute.xlu0 %1605
          %1607 = vset.pattern.permute.xlu0 0
          %1608 = vperm.xlu0 %1607, %v1307
          %v1609 = vpop.permute.xlu0 %1608
          %1610 = vset.pattern.permute.xlu0 0
          %1611 = vperm.xlu0 %1610, %v1308
          %v1612 = vpop.permute.xlu0 %1611
          %1613 = vset.pattern.permute.xlu0 0
          %1614 = vperm.xlu0 %1613, %v1309
          %v1615 = vpop.permute.xlu0 %1614
          %1616 = vset.pattern.permute.xlu0 0
          %1617 = vperm.xlu0 %1616, %v1310
          %v1618 = vpop.permute.xlu0 %1617
          %1619 = vset.pattern.permute.xlu0 0
          %1620 = vperm.xlu0 %1619, %v1311
          %v1621 = vpop.permute.xlu0 %1620
          %1622 = vset.pattern.permute.xlu0 0
          %1623 = vperm.xlu0 %1622, %v1312
          %v1624 = vpop.permute.xlu0 %1623
          %1625 = vset.pattern.permute.xlu0 0
          %1626 = vperm.xlu0 %1625, %v1313
          %v1627 = vpop.permute.xlu0 %1626
          %1628 = vset.pattern.permute.xlu0 0
          %1629 = vperm.xlu0 %1628, %v1314
          %v1630 = vpop.permute.xlu0 %1629
          %1631 = vset.pattern.permute.xlu0 0
          %1632 = vperm.xlu0 %1631, %v1315
          %v1633 = vpop.permute.xlu0 %1632
          %1634 = vset.pattern.permute.xlu0 0
          %1635 = vperm.xlu0 %1634, %v1316
          %v1636 = vpop.permute.xlu0 %1635
          %1637 = vset.pattern.permute.xlu0 0
          %1638 = vperm.xlu0 %1637, %v1317
          %v1639 = vpop.permute.xlu0 %1638
          %1640 = vset.pattern.permute.xlu0 0
          %1641 = vperm.xlu0 %1640, %v1318
          %v1642 = vpop.permute.xlu0 %1641
          %1643 = vset.pattern.permute.xlu0 0
          %1644 = vperm.xlu0 %1643, %v1319
          %v1645 = vpop.permute.xlu0 %1644
          %1646 = vset.pattern.permute.xlu0 0
          %1647 = vperm.xlu0 %1646, %v1320
          %v1648 = vpop.permute.xlu0 %1647
          %1649 = vset.pattern.permute.xlu0 0
          %1650 = vperm.xlu0 %1649, %v1321
          %v1651 = vpop.permute.xlu0 %1650
          %1652 = vset.pattern.permute.xlu0 0
          %1653 = vperm.xlu0 %1652, %v1322
          %v1654 = vpop.permute.xlu0 %1653
          %1655 = vset.pattern.permute.xlu0 0
          %1656 = vperm.xlu0 %1655, %v1323
          %v1657 = vpop.permute.xlu0 %1656
          %1658 = vset.pattern.permute.xlu0 0
          %1659 = vperm.xlu0 %1658, %v1324
          %v1660 = vpop.permute.xlu0 %1659
          %1661 = vset.pattern.permute.xlu0 0
          %1662 = vperm.xlu0 %1661, %v1325
          %v1663 = vpop.permute.xlu0 %1662
          %1664 = vset.pattern.permute.xlu0 0
          %1665 = vperm.xlu0 %1664, %v1326
          %v1666 = vpop.permute.xlu0 %1665
          %1667 = vset.pattern.permute.xlu0 0
          %1668 = vperm.xlu0 %1667, %v1327
          %v1669 = vpop.permute.xlu0 %1668
          %1670 = vset.pattern.permute.xlu0 0
          %1671 = vperm.xlu0 %1670, %v1328
          %v1672 = vpop.permute.xlu0 %1671
          %1673 = vset.pattern.permute.xlu0 0
          %1674 = vperm.xlu0 %1673, %v1329
          %v1675 = vpop.permute.xlu0 %1674
          %1676 = vset.pattern.permute.xlu0 0
          %1677 = vperm.xlu0 %1676, %v1330
          %v1678 = vpop.permute.xlu0 %1677
          %1679 = vset.pattern.permute.xlu0 0
          %1680 = vperm.xlu0 %1679, %v1331
          %v1681 = vpop.permute.xlu0 %1680
          %1682 = vset.pattern.permute.xlu0 0
          %1683 = vperm.xlu0 %1682, %v1332
          %v1684 = vpop.permute.xlu0 %1683
          %1685 = vset.pattern.permute.xlu0 0
          %1686 = vperm.xlu0 %1685, %v1333
          %v1687 = vpop.permute.xlu0 %1686
          %1688 = vset.pattern.permute.xlu0 0
          %1689 = vperm.xlu0 %1688, %v1334
          %v1690 = vpop.permute.xlu0 %1689
          %1691 = vset.pattern.permute.xlu0 0
          %1692 = vperm.xlu0 %1691, %v1335
          %v1693 = vpop.permute.xlu0 %1692
          %1694 = vset.pattern.permute.xlu0 0
          %1695 = vperm.xlu0 %1694, %v1336
          %v1696 = vpop.permute.xlu0 %1695
          %1697 = vset.pattern.permute.xlu0 0
          %1698 = vperm.xlu0 %1697, %v1337
          %v1699 = vpop.permute.xlu0 %1698
          %1700 = vset.pattern.permute.xlu0 0
          %1701 = vperm.xlu0 %1700, %v1338
          %v1702 = vpop.permute.xlu0 %1701
          %1703 = vset.pattern.permute.xlu0 0
          %1704 = vperm.xlu0 %1703, %v1339
          %v1705 = vpop.permute.xlu0 %1704
          %1706 = vset.pattern.permute.xlu0 0
          %1707 = vperm.xlu0 %1706, %v1340
          %v1708 = vpop.permute.xlu0 %1707
          %1709 = vset.pattern.permute.xlu0 0
          %1710 = vperm.xlu0 %1709, %v1341
          %v1711 = vpop.permute.xlu0 %1710
          %1712 = vset.pattern.permute.xlu0 0
          %1713 = vperm.xlu0 %1712, %v1342
          %v1714 = vpop.permute.xlu0 %1713
          %1715 = vset.pattern.permute.xlu0 0
          %1716 = vperm.xlu0 %1715, %v1343
          %v1717 = vpop.permute.xlu0 %1716
          %1718 = vset.pattern.permute.xlu0 0
          %1719 = vperm.xlu0 %1718, %v1344
          %v1720 = vpop.permute.xlu0 %1719
          %1721 = vset.pattern.permute.xlu0 0
          %1722 = vperm.xlu0 %1721, %v1345
          %v1723 = vpop.permute.xlu0 %1722
          %1724 = vset.pattern.permute.xlu0 0
          %1725 = vperm.xlu0 %1724, %v1346
          %v1726 = vpop.permute.xlu0 %1725
          %1727 = vset.pattern.permute.xlu0 0
          %1728 = vperm.xlu0 %1727, %v1347
          %v1729 = vpop.permute.xlu0 %1728
          %1730 = vset.pattern.permute.xlu0 0
          %1731 = vperm.xlu0 %1730, %v1348
          %v1732 = vpop.permute.xlu0 %1731
          %vm1733 = vcmp.eq.s32.totalorder %v1351, 1
          %vm1734 = vcmp.eq.s32.totalorder %v1354, 1
          %vm1735 = vcmp.eq.s32.totalorder %v1357, 1
          %vm1736 = vcmp.eq.s32.totalorder %v1360, 1
          %vm1737 = vcmp.eq.s32.totalorder %v1363, 1
          %vm1738 = vcmp.eq.s32.totalorder %v1366, 1
          %vm1739 = vcmp.eq.s32.totalorder %v1369, 1
          %vm1740 = vcmp.eq.s32.totalorder %v1372, 1
          %vm1741 = vcmp.eq.s32.totalorder %v1375, 1
          %vm1742 = vcmp.eq.s32.totalorder %v1378, 1
          %vm1743 = vcmp.eq.s32.totalorder %v1381, 1
          %vm1744 = vcmp.eq.s32.totalorder %v1384, 1
          %vm1745 = vcmp.eq.s32.totalorder %v1387, 1
          %vm1746 = vcmp.eq.s32.totalorder %v1390, 1
          %vm1747 = vcmp.eq.s32.totalorder %v1393, 1
          %vm1748 = vcmp.eq.s32.totalorder %v1396, 1
          %vm1749 = vcmp.eq.s32.totalorder %v1399, 1
          %vm1750 = vcmp.eq.s32.totalorder %v1402, 1
          %vm1751 = vcmp.eq.s32.totalorder %v1405, 1
          %vm1752 = vcmp.eq.s32.totalorder %v1408, 1
          %vm1753 = vcmp.eq.s32.totalorder %v1411, 1
          %vm1754 = vcmp.eq.s32.totalorder %v1414, 1
          %vm1755 = vcmp.eq.s32.totalorder %v1417, 1
          %vm1756 = vcmp.eq.s32.totalorder %v1420, 1
          %vm1757 = vcmp.eq.s32.totalorder %v1423, 1
          %vm1758 = vcmp.eq.s32.totalorder %v1426, 1
          %vm1759 = vcmp.eq.s32.totalorder %v1429, 1
          %vm1760 = vcmp.eq.s32.totalorder %v1432, 1
          %vm1761 = vcmp.eq.s32.totalorder %v1435, 1
          %vm1762 = vcmp.eq.s32.totalorder %v1438, 1
          %vm1763 = vcmp.eq.s32.totalorder %v1441, 1
          %vm1764 = vcmp.eq.s32.totalorder %v1444, 1
          %vm1765 = vcmp.eq.s32.totalorder %v1447, 1
          %vm1766 = vcmp.eq.s32.totalorder %v1450, 1
          %vm1767 = vcmp.eq.s32.totalorder %v1453, 1
          %vm1768 = vcmp.eq.s32.totalorder %v1456, 1
          %vm1769 = vcmp.eq.s32.totalorder %v1459, 1
          %vm1770 = vcmp.eq.s32.totalorder %v1462, 1
          %vm1771 = vcmp.eq.s32.totalorder %v1465, 1
          %vm1772 = vcmp.eq.s32.totalorder %v1468, 1
          %vm1773 = vcmp.eq.s32.totalorder %v1471, 1
          %vm1774 = vcmp.eq.s32.totalorder %v1474, 1
          %vm1775 = vcmp.eq.s32.totalorder %v1477, 1
          %vm1776 = vcmp.eq.s32.totalorder %v1480, 1
          %vm1777 = vcmp.eq.s32.totalorder %v1483, 1
          %vm1778 = vcmp.eq.s32.totalorder %v1486, 1
          %vm1779 = vcmp.eq.s32.totalorder %v1489, 1
          %vm1780 = vcmp.eq.s32.totalorder %v1492, 1
          %vm1781 = vcmp.eq.s32.totalorder %v1495, 1
          %vm1782 = vcmp.eq.s32.totalorder %v1498, 1
          %vm1783 = vcmp.eq.s32.totalorder %v1501, 1
          %vm1784 = vcmp.eq.s32.totalorder %v1504, 1
          %vm1785 = vcmp.eq.s32.totalorder %v1507, 1
          %vm1786 = vcmp.eq.s32.totalorder %v1510, 1
          %vm1787 = vcmp.eq.s32.totalorder %v1513, 1
          %vm1788 = vcmp.eq.s32.totalorder %v1516, 1
          %vm1789 = vcmp.eq.s32.totalorder %v1519, 1
          %vm1790 = vcmp.eq.s32.totalorder %v1522, 1
          %vm1791 = vcmp.eq.s32.totalorder %v1525, 1
          %vm1792 = vcmp.eq.s32.totalorder %v1528, 1
          %vm1793 = vcmp.eq.s32.totalorder %v1531, 1
          %vm1794 = vcmp.eq.s32.totalorder %v1534, 1
          %vm1795 = vcmp.eq.s32.totalorder %v1537, 1
          %vm1796 = vcmp.eq.s32.totalorder %v1540, 1
          %vm1797 = vcmp.eq.s32.totalorder %v1543, 1
          %vm1798 = vcmp.eq.s32.totalorder %v1546, 1
          %vm1799 = vcmp.eq.s32.totalorder %v1549, 1
          %vm1800 = vcmp.eq.s32.totalorder %v1552, 1
          %vm1801 = vcmp.eq.s32.totalorder %v1555, 1
          %vm1802 = vcmp.eq.s32.totalorder %v1558, 1
          %vm1803 = vcmp.eq.s32.totalorder %v1561, 1
          %vm1804 = vcmp.eq.s32.totalorder %v1564, 1
          %vm1805 = vcmp.eq.s32.totalorder %v1567, 1
          %vm1806 = vcmp.eq.s32.totalorder %v1570, 1
          %vm1807 = vcmp.eq.s32.totalorder %v1573, 1
          %vm1808 = vcmp.eq.s32.totalorder %v1576, 1
          %vm1809 = vcmp.eq.s32.totalorder %v1579, 1
          %vm1810 = vcmp.eq.s32.totalorder %v1582, 1
          %vm1811 = vcmp.eq.s32.totalorder %v1585, 1
          %vm1812 = vcmp.eq.s32.totalorder %v1588, 1
          %vm1813 = vcmp.eq.s32.totalorder %v1591, 1
          %vm1814 = vcmp.eq.s32.totalorder %v1594, 1
          %vm1815 = vcmp.eq.s32.totalorder %v1597, 1
          %vm1816 = vcmp.eq.s32.totalorder %v1600, 1
          %vm1817 = vcmp.eq.s32.totalorder %v1603, 1
          %vm1818 = vcmp.eq.s32.totalorder %v1606, 1
          %vm1819 = vcmp.eq.s32.totalorder %v1609, 1
          %vm1820 = vcmp.eq.s32.totalorder %v1612, 1
          %vm1821 = vcmp.eq.s32.totalorder %v1615, 1
          %vm1822 = vcmp.eq.s32.totalorder %v1618, 1
          %vm1823 = vcmp.eq.s32.totalorder %v1621, 1
          %vm1824 = vcmp.eq.s32.totalorder %v1624, 1
          %vm1825 = vcmp.eq.s32.totalorder %v1627, 1
          %vm1826 = vcmp.eq.s32.totalorder %v1630, 1
          %vm1827 = vcmp.eq.s32.totalorder %v1633, 1
          %vm1828 = vcmp.eq.s32.totalorder %v1636, 1
          %vm1829 = vcmp.eq.s32.totalorder %v1639, 1
          %vm1830 = vcmp.eq.s32.totalorder %v1642, 1
          %vm1831 = vcmp.eq.s32.totalorder %v1645, 1
          %vm1832 = vcmp.eq.s32.totalorder %v1648, 1
          %vm1833 = vcmp.eq.s32.totalorder %v1651, 1
          %vm1834 = vcmp.eq.s32.totalorder %v1654, 1
          %vm1835 = vcmp.eq.s32.totalorder %v1657, 1
          %vm1836 = vcmp.eq.s32.totalorder %v1660, 1
          %vm1837 = vcmp.eq.s32.totalorder %v1663, 1
          %vm1838 = vcmp.eq.s32.totalorder %v1666, 1
          %vm1839 = vcmp.eq.s32.totalorder %v1669, 1
          %vm1840 = vcmp.eq.s32.totalorder %v1672, 1
          %vm1841 = vcmp.eq.s32.totalorder %v1675, 1
          %vm1842 = vcmp.eq.s32.totalorder %v1678, 1
          %vm1843 = vcmp.eq.s32.totalorder %v1681, 1
          %vm1844 = vcmp.eq.s32.totalorder %v1684, 1
          %vm1845 = vcmp.eq.s32.totalorder %v1687, 1
          %vm1846 = vcmp.eq.s32.totalorder %v1690, 1
          %vm1847 = vcmp.eq.s32.totalorder %v1693, 1
          %vm1848 = vcmp.eq.s32.totalorder %v1696, 1
          %vm1849 = vcmp.eq.s32.totalorder %v1699, 1
          %vm1850 = vcmp.eq.s32.totalorder %v1702, 1
          %vm1851 = vcmp.eq.s32.totalorder %v1705, 1
          %vm1852 = vcmp.eq.s32.totalorder %v1708, 1
          %vm1853 = vcmp.eq.s32.totalorder %v1711, 1
          %vm1854 = vcmp.eq.s32.totalorder %v1714, 1
          %vm1855 = vcmp.eq.s32.totalorder %v1717, 1
          %vm1856 = vcmp.eq.s32.totalorder %v1720, 1
          %vm1857 = vcmp.eq.s32.totalorder %v1723, 1
          %vm1858 = vcmp.eq.s32.totalorder %v1726, 1
          %vm1859 = vcmp.eq.s32.totalorder %v1729, 1
          %vm1860 = vcmp.eq.s32.totalorder %v1732, 1
          %v1862 = vlaneseq
          %v1863 = vshrl.u32 %v1862, 7
          %v1864 = vsub.s32 0, %v1863
          %v1865 = vrot.slane %v836, %v1864
          %v1866 = vlaneseq
          %v1867 = vshrl.u32 %v1866, 7
          %v1868 = vsub.s32 1, %v1867
          %v1869 = vrot.slane %v836, %v1868
          %v1872 = vsel %vm1733, %v1865, %v322
          %v1873 = vsel %vm1733, %v1869, %v323
          %v1874 = vsel %vm1734, %v1865, %v324
          %v1875 = vsel %vm1734, %v1869, %v325
          %v1876 = vsel %vm1735, %v1865, %v326
          %v1877 = vsel %vm1735, %v1869, %v327
          %v1878 = vsel %vm1736, %v1865, %v328
          %v1879 = vsel %vm1736, %v1869, %v329
          %v1880 = vsel %vm1737, %v1865, %v330
          %v1881 = vsel %vm1737, %v1869, %v331
          %v1882 = vsel %vm1738, %v1865, %v332
          %v1883 = vsel %vm1738, %v1869, %v333
          %v1884 = vsel %vm1739, %v1865, %v334
          %v1885 = vsel %vm1739, %v1869, %v335
          %v1886 = vsel %vm1740, %v1865, %v336
          %v1887 = vsel %vm1740, %v1869, %v337
          %v1888 = vsel %vm1741, %v1865, %v338
          %v1889 = vsel %vm1741, %v1869, %v339
          %v1890 = vsel %vm1742, %v1865, %v340
          %v1891 = vsel %vm1742, %v1869, %v341
          %v1892 = vsel %vm1743, %v1865, %v342
          %v1893 = vsel %vm1743, %v1869, %v343
          %v1894 = vsel %vm1744, %v1865, %v344
          %v1895 = vsel %vm1744, %v1869, %v345
          %v1896 = vsel %vm1745, %v1865, %v346
          %v1897 = vsel %vm1745, %v1869, %v347
          %v1898 = vsel %vm1746, %v1865, %v348
          %v1899 = vsel %vm1746, %v1869, %v349
          %v1900 = vsel %vm1747, %v1865, %v350
          %v1901 = vsel %vm1747, %v1869, %v351
          %v1902 = vsel %vm1748, %v1865, %v352
          %v1903 = vsel %vm1748, %v1869, %v353
          %v1904 = vsel %vm1749, %v1865, %v354
          %v1905 = vsel %vm1749, %v1869, %v355
          %v1906 = vsel %vm1750, %v1865, %v356
          %v1907 = vsel %vm1750, %v1869, %v357
          %v1908 = vsel %vm1751, %v1865, %v358
          %v1909 = vsel %vm1751, %v1869, %v359
          %v1910 = vsel %vm1752, %v1865, %v360
          %v1911 = vsel %vm1752, %v1869, %v361
          %v1912 = vsel %vm1753, %v1865, %v362
          %v1913 = vsel %vm1753, %v1869, %v363
          %v1914 = vsel %vm1754, %v1865, %v364
          %v1915 = vsel %vm1754, %v1869, %v365
          %v1916 = vsel %vm1755, %v1865, %v366
          %v1917 = vsel %vm1755, %v1869, %v367
          %v1918 = vsel %vm1756, %v1865, %v368
          %v1919 = vsel %vm1756, %v1869, %v369
          %v1920 = vsel %vm1757, %v1865, %v370
          %v1921 = vsel %vm1757, %v1869, %v371
          %v1922 = vsel %vm1758, %v1865, %v372
          %v1923 = vsel %vm1758, %v1869, %v373
          %v1924 = vsel %vm1759, %v1865, %v374
          %v1925 = vsel %vm1759, %v1869, %v375
          %v1926 = vsel %vm1760, %v1865, %v376
          %v1927 = vsel %vm1760, %v1869, %v377
          %v1928 = vsel %vm1761, %v1865, %v378
          %v1929 = vsel %vm1761, %v1869, %v379
          %v1930 = vsel %vm1762, %v1865, %v380
          %v1931 = vsel %vm1762, %v1869, %v381
          %v1932 = vsel %vm1763, %v1865, %v382
          %v1933 = vsel %vm1763, %v1869, %v383
          %v1934 = vsel %vm1764, %v1865, %v384
          %v1935 = vsel %vm1764, %v1869, %v385
          %v1936 = vsel %vm1765, %v1865, %v386
          %v1937 = vsel %vm1765, %v1869, %v387
          %v1938 = vsel %vm1766, %v1865, %v388
          %v1939 = vsel %vm1766, %v1869, %v389
          %v1940 = vsel %vm1767, %v1865, %v390
          %v1941 = vsel %vm1767, %v1869, %v391
          %v1942 = vsel %vm1768, %v1865, %v392
          %v1943 = vsel %vm1768, %v1869, %v393
          %v1944 = vsel %vm1769, %v1865, %v394
          %v1945 = vsel %vm1769, %v1869, %v395
          %v1946 = vsel %vm1770, %v1865, %v396
          %v1947 = vsel %vm1770, %v1869, %v397
          %v1948 = vsel %vm1771, %v1865, %v398
          %v1949 = vsel %vm1771, %v1869, %v399
          %v1950 = vsel %vm1772, %v1865, %v400
          %v1951 = vsel %vm1772, %v1869, %v401
          %v1952 = vsel %vm1773, %v1865, %v402
          %v1953 = vsel %vm1773, %v1869, %v403
          %v1954 = vsel %vm1774, %v1865, %v404
          %v1955 = vsel %vm1774, %v1869, %v405
          %v1956 = vsel %vm1775, %v1865, %v406
          %v1957 = vsel %vm1775, %v1869, %v407
          %v1958 = vsel %vm1776, %v1865, %v408
          %v1959 = vsel %vm1776, %v1869, %v409
          %v1960 = vsel %vm1777, %v1865, %v410
          %v1961 = vsel %vm1777, %v1869, %v411
          %v1962 = vsel %vm1778, %v1865, %v412
          %v1963 = vsel %vm1778, %v1869, %v413
          %v1964 = vsel %vm1779, %v1865, %v414
          %v1965 = vsel %vm1779, %v1869, %v415
          %v1966 = vsel %vm1780, %v1865, %v416
          %v1967 = vsel %vm1780, %v1869, %v417
          %v1968 = vsel %vm1781, %v1865, %v418
          %v1969 = vsel %vm1781, %v1869, %v419
          %v1970 = vsel %vm1782, %v1865, %v420
          %v1971 = vsel %vm1782, %v1869, %v421
          %v1972 = vsel %vm1783, %v1865, %v422
          %v1973 = vsel %vm1783, %v1869, %v423
          %v1974 = vsel %vm1784, %v1865, %v424
          %v1975 = vsel %vm1784, %v1869, %v425
          %v1976 = vsel %vm1785, %v1865, %v426
          %v1977 = vsel %vm1785, %v1869, %v427
          %v1978 = vsel %vm1786, %v1865, %v428
          %v1979 = vsel %vm1786, %v1869, %v429
          %v1980 = vsel %vm1787, %v1865, %v430
          %v1981 = vsel %vm1787, %v1869, %v431
          %v1982 = vsel %vm1788, %v1865, %v432
          %v1983 = vsel %vm1788, %v1869, %v433
          %v1984 = vsel %vm1789, %v1865, %v434
          %v1985 = vsel %vm1789, %v1869, %v435
          %v1986 = vsel %vm1790, %v1865, %v436
          %v1987 = vsel %vm1790, %v1869, %v437
          %v1988 = vsel %vm1791, %v1865, %v438
          %v1989 = vsel %vm1791, %v1869, %v439
          %v1990 = vsel %vm1792, %v1865, %v440
          %v1991 = vsel %vm1792, %v1869, %v441
          %v1992 = vsel %vm1793, %v1865, %v442
          %v1993 = vsel %vm1793, %v1869, %v443
          %v1994 = vsel %vm1794, %v1865, %v444
          %v1995 = vsel %vm1794, %v1869, %v445
          %v1996 = vsel %vm1795, %v1865, %v446
          %v1997 = vsel %vm1795, %v1869, %v447
          %v1998 = vsel %vm1796, %v1865, %v448
          %v1999 = vsel %vm1796, %v1869, %v449
          %v2000 = vsel %vm1797, %v1865, %v450
          %v2001 = vsel %vm1797, %v1869, %v451
          %v2002 = vsel %vm1798, %v1865, %v452
          %v2003 = vsel %vm1798, %v1869, %v453
          %v2004 = vsel %vm1799, %v1865, %v454
          %v2005 = vsel %vm1799, %v1869, %v455
          %v2006 = vsel %vm1800, %v1865, %v456
          %v2007 = vsel %vm1800, %v1869, %v457
          %v2008 = vsel %vm1801, %v1865, %v458
          %v2009 = vsel %vm1801, %v1869, %v459
          %v2010 = vsel %vm1802, %v1865, %v460
          %v2011 = vsel %vm1802, %v1869, %v461
          %v2012 = vsel %vm1803, %v1865, %v462
          %v2013 = vsel %vm1803, %v1869, %v463
          %v2014 = vsel %vm1804, %v1865, %v464
          %v2015 = vsel %vm1804, %v1869, %v465
          %v2016 = vsel %vm1805, %v1865, %v466
          %v2017 = vsel %vm1805, %v1869, %v467
          %v2018 = vsel %vm1806, %v1865, %v468
          %v2019 = vsel %vm1806, %v1869, %v469
          %v2020 = vsel %vm1807, %v1865, %v470
          %v2021 = vsel %vm1807, %v1869, %v471
          %v2022 = vsel %vm1808, %v1865, %v472
          %v2023 = vsel %vm1808, %v1869, %v473
          %v2024 = vsel %vm1809, %v1865, %v474
          %v2025 = vsel %vm1809, %v1869, %v475
          %v2026 = vsel %vm1810, %v1865, %v476
          %v2027 = vsel %vm1810, %v1869, %v477
          %v2028 = vsel %vm1811, %v1865, %v478
          %v2029 = vsel %vm1811, %v1869, %v479
          %v2030 = vsel %vm1812, %v1865, %v480
          %v2031 = vsel %vm1812, %v1869, %v481
          %v2032 = vsel %vm1813, %v1865, %v482
          %v2033 = vsel %vm1813, %v1869, %v483
          %v2034 = vsel %vm1814, %v1865, %v484
          %v2035 = vsel %vm1814, %v1869, %v485
          %v2036 = vsel %vm1815, %v1865, %v486
          %v2037 = vsel %vm1815, %v1869, %v487
          %v2038 = vsel %vm1816, %v1865, %v488
          %v2039 = vsel %vm1816, %v1869, %v489
          %v2040 = vsel %vm1817, %v1865, %v490
          %v2041 = vsel %vm1817, %v1869, %v491
          %v2042 = vsel %vm1818, %v1865, %v492
          %v2043 = vsel %vm1818, %v1869, %v493
          %v2044 = vsel %vm1819, %v1865, %v494
          %v2045 = vsel %vm1819, %v1869, %v495
          %v2046 = vsel %vm1820, %v1865, %v496
          %v2047 = vsel %vm1820, %v1869, %v497
          %v2048 = vsel %vm1821, %v1865, %v498
          %v2049 = vsel %vm1821, %v1869, %v499
          %v2050 = vsel %vm1822, %v1865, %v500
          %v2051 = vsel %vm1822, %v1869, %v501
          %v2052 = vsel %vm1823, %v1865, %v502
          %v2053 = vsel %vm1823, %v1869, %v503
          %v2054 = vsel %vm1824, %v1865, %v504
          %v2055 = vsel %vm1824, %v1869, %v505
          %v2056 = vsel %vm1825, %v1865, %v506
          %v2057 = vsel %vm1825, %v1869, %v507
          %v2058 = vsel %vm1826, %v1865, %v508
          %v2059 = vsel %vm1826, %v1869, %v509
          %v2060 = vsel %vm1827, %v1865, %v510
          %v2061 = vsel %vm1827, %v1869, %v511
          %v2062 = vsel %vm1828, %v1865, %v512
          %v2063 = vsel %vm1828, %v1869, %v513
          %v2064 = vsel %vm1829, %v1865, %v514
          %v2065 = vsel %vm1829, %v1869, %v515
          %v2066 = vsel %vm1830, %v1865, %v516
          %v2067 = vsel %vm1830, %v1869, %v517
          %v2068 = vsel %vm1831, %v1865, %v518
          %v2069 = vsel %vm1831, %v1869, %v519
          %v2070 = vsel %vm1832, %v1865, %v520
          %v2071 = vsel %vm1832, %v1869, %v521
          %v2072 = vsel %vm1833, %v1865, %v522
          %v2073 = vsel %vm1833, %v1869, %v523
          %v2074 = vsel %vm1834, %v1865, %v524
          %v2075 = vsel %vm1834, %v1869, %v525
          %v2076 = vsel %vm1835, %v1865, %v526
          %v2077 = vsel %vm1835, %v1869, %v527
          %v2078 = vsel %vm1836, %v1865, %v528
          %v2079 = vsel %vm1836, %v1869, %v529
          %v2080 = vsel %vm1837, %v1865, %v530
          %v2081 = vsel %vm1837, %v1869, %v531
          %v2082 = vsel %vm1838, %v1865, %v532
          %v2083 = vsel %vm1838, %v1869, %v533
          %v2084 = vsel %vm1839, %v1865, %v534
          %v2085 = vsel %vm1839, %v1869, %v535
          %v2086 = vsel %vm1840, %v1865, %v536
          %v2087 = vsel %vm1840, %v1869, %v537
          %v2088 = vsel %vm1841, %v1865, %v538
          %v2089 = vsel %vm1841, %v1869, %v539
          %v2090 = vsel %vm1842, %v1865, %v540
          %v2091 = vsel %vm1842, %v1869, %v541
          %v2092 = vsel %vm1843, %v1865, %v542
          %v2093 = vsel %vm1843, %v1869, %v543
          %v2094 = vsel %vm1844, %v1865, %v544
          %v2095 = vsel %vm1844, %v1869, %v545
          %v2096 = vsel %vm1845, %v1865, %v546
          %v2097 = vsel %vm1845, %v1869, %v547
          %v2098 = vsel %vm1846, %v1865, %v548
          %v2099 = vsel %vm1846, %v1869, %v549
          %v2100 = vsel %vm1847, %v1865, %v550
          %v2101 = vsel %vm1847, %v1869, %v551
          %v2102 = vsel %vm1848, %v1865, %v552
          %v2103 = vsel %vm1848, %v1869, %v553
          %v2104 = vsel %vm1849, %v1865, %v554
          %v2105 = vsel %vm1849, %v1869, %v555
          %v2106 = vsel %vm1850, %v1865, %v556
          %v2107 = vsel %vm1850, %v1869, %v557
          %v2108 = vsel %vm1851, %v1865, %v558
          %v2109 = vsel %vm1851, %v1869, %v559
          %v2110 = vsel %vm1852, %v1865, %v560
          %v2111 = vsel %vm1852, %v1869, %v561
          %v2112 = vsel %vm1853, %v1865, %v562
          %v2113 = vsel %vm1853, %v1869, %v563
          %v2114 = vsel %vm1854, %v1865, %v564
          %v2115 = vsel %vm1854, %v1869, %v565
          %v2116 = vsel %vm1855, %v1865, %v566
          %v2117 = vsel %vm1855, %v1869, %v567
          %v2118 = vsel %vm1856, %v1865, %v568
          %v2119 = vsel %vm1856, %v1869, %v569
          %v2120 = vsel %vm1857, %v1865, %v570
          %v2121 = vsel %vm1857, %v1869, %v571
          %v2122 = vsel %vm1858, %v1865, %v572
          %v2123 = vsel %vm1858, %v1869, %v573
          %v2124 = vsel %vm1859, %v1865, %v574
          %v2125 = vsel %vm1859, %v1869, %v575
          %v2126 = vsel %vm1860, %v1865, %v576
          %v2127 = vsel %vm1860, %v1869, %v577
          %v2128 = vsel %vm835, 16843009, 0
          %v2129 = vunpack.c.0.s8 %v2128
          %vm2130 = vcmp.ne.s32.totalorder %v2129, 0
          %v2131 = vsel %vm2130, 1, 0
          %v2132 = vlaneseq
          %v2133 = vshrl.u32 %v2132, 7
          %v2134 = vsub.s32 0, %v2133
          %v2135 = vrot.slane %v2131, %v2134
          %v2136 = vlaneseq
          %v2137 = vshrl.u32 %v2136, 7
          %v2138 = vsub.s32 4, %v2137
          %v2139 = vrot.slane %v2131, %v2138
          %vm2140 = vcmp.ne.s32.totalorder %v2135, 0
          %vm2141 = vcmp.ne.s32.totalorder %v2139, 0
          %v2142 = vsel %vm2140, 1, 0
          %v2143 = vsel %vm2141, 1, 0
          %v2144 = vlaneseq
          %v2145 = vshrl.u32 %v2144, 7
          %v2146 = vsub.s32 0, %v2145
          %v2147 = vrot.slane %v2142, %v2146
          %v2148 = vlaneseq
          %v2149 = vshrl.u32 %v2148, 7
          %v2150 = vsub.s32 0, %v2149
          %v2151 = vrot.slane %v2143, %v2150
          %vm2152 = vcmp.eq.s32.totalorder %v2147, 1
          %vm2153 = vcmp.eq.s32.totalorder %v2151, 1
          %v2154 = vsel %vm2152, 0.0, %v1872
          %v2155 = vsel %vm2153, 0.0, %v1873
          %v2156 = vsel %vm2152, 0.0, %v1874
          %v2157 = vsel %vm2153, 0.0, %v1875
          %v2158 = vsel %vm2152, 0.0, %v1876
          %v2159 = vsel %vm2153, 0.0, %v1877
          %v2160 = vsel %vm2152, 0.0, %v1878
          %v2161 = vsel %vm2153, 0.0, %v1879
          %v2162 = vsel %vm2152, 0.0, %v1880
          %v2163 = vsel %vm2153, 0.0, %v1881
          %v2164 = vsel %vm2152, 0.0, %v1882
          %v2165 = vsel %vm2153, 0.0, %v1883
          %v2166 = vsel %vm2152, 0.0, %v1884
          %v2167 = vsel %vm2153, 0.0, %v1885
          %v2168 = vsel %vm2152, 0.0, %v1886
          %v2169 = vsel %vm2153, 0.0, %v1887
          %v2170 = vsel %vm2152, 0.0, %v1888
          %v2171 = vsel %vm2153, 0.0, %v1889
          %v2172 = vsel %vm2152, 0.0, %v1890
          %v2173 = vsel %vm2153, 0.0, %v1891
          %v2174 = vsel %vm2152, 0.0, %v1892
          %v2175 = vsel %vm2153, 0.0, %v1893
          %v2176 = vsel %vm2152, 0.0, %v1894
          %v2177 = vsel %vm2153, 0.0, %v1895
          %v2178 = vsel %vm2152, 0.0, %v1896
          %v2179 = vsel %vm2153, 0.0, %v1897
          %v2180 = vsel %vm2152, 0.0, %v1898
          %v2181 = vsel %vm2153, 0.0, %v1899
          %v2182 = vsel %vm2152, 0.0, %v1900
          %v2183 = vsel %vm2153, 0.0, %v1901
          %v2184 = vsel %vm2152, 0.0, %v1902
          %v2185 = vsel %vm2153, 0.0, %v1903
          %v2186 = vsel %vm2152, 0.0, %v1904
          %v2187 = vsel %vm2153, 0.0, %v1905
          %v2188 = vsel %vm2152, 0.0, %v1906
          %v2189 = vsel %vm2153, 0.0, %v1907
          %v2190 = vsel %vm2152, 0.0, %v1908
          %v2191 = vsel %vm2153, 0.0, %v1909
          %v2192 = vsel %vm2152, 0.0, %v1910
          %v2193 = vsel %vm2153, 0.0, %v1911
          %v2194 = vsel %vm2152, 0.0, %v1912
          %v2195 = vsel %vm2153, 0.0, %v1913
          %v2196 = vsel %vm2152, 0.0, %v1914
          %v2197 = vsel %vm2153, 0.0, %v1915
          %v2198 = vsel %vm2152, 0.0, %v1916
          %v2199 = vsel %vm2153, 0.0, %v1917
          %v2200 = vsel %vm2152, 0.0, %v1918
          %v2201 = vsel %vm2153, 0.0, %v1919
          %v2202 = vsel %vm2152, 0.0, %v1920
          %v2203 = vsel %vm2153, 0.0, %v1921
          %v2204 = vsel %vm2152, 0.0, %v1922
          %v2205 = vsel %vm2153, 0.0, %v1923
          %v2206 = vsel %vm2152, 0.0, %v1924
          %v2207 = vsel %vm2153, 0.0, %v1925
          %v2208 = vsel %vm2152, 0.0, %v1926
          %v2209 = vsel %vm2153, 0.0, %v1927
          %v2210 = vsel %vm2152, 0.0, %v1928
          %v2211 = vsel %vm2153, 0.0, %v1929
          %v2212 = vsel %vm2152, 0.0, %v1930
          %v2213 = vsel %vm2153, 0.0, %v1931
          %v2214 = vsel %vm2152, 0.0, %v1932
          %v2215 = vsel %vm2153, 0.0, %v1933
          %v2216 = vsel %vm2152, 0.0, %v1934
          %v2217 = vsel %vm2153, 0.0, %v1935
          %v2218 = vsel %vm2152, 0.0, %v1936
          %v2219 = vsel %vm2153, 0.0, %v1937
          %v2220 = vsel %vm2152, 0.0, %v1938
          %v2221 = vsel %vm2153, 0.0, %v1939
          %v2222 = vsel %vm2152, 0.0, %v1940
          %v2223 = vsel %vm2153, 0.0, %v1941
          %v2224 = vsel %vm2152, 0.0, %v1942
          %v2225 = vsel %vm2153, 0.0, %v1943
          %v2226 = vsel %vm2152, 0.0, %v1944
          %v2227 = vsel %vm2153, 0.0, %v1945
          %v2228 = vsel %vm2152, 0.0, %v1946
          %v2229 = vsel %vm2153, 0.0, %v1947
          %v2230 = vsel %vm2152, 0.0, %v1948
          %v2231 = vsel %vm2153, 0.0, %v1949
          %v2232 = vsel %vm2152, 0.0, %v1950
          %v2233 = vsel %vm2153, 0.0, %v1951
          %v2234 = vsel %vm2152, 0.0, %v1952
          %v2235 = vsel %vm2153, 0.0, %v1953
          %v2236 = vsel %vm2152, 0.0, %v1954
          %v2237 = vsel %vm2153, 0.0, %v1955
          %v2238 = vsel %vm2152, 0.0, %v1956
          %v2239 = vsel %vm2153, 0.0, %v1957
          %v2240 = vsel %vm2152, 0.0, %v1958
          %v2241 = vsel %vm2153, 0.0, %v1959
          %v2242 = vsel %vm2152, 0.0, %v1960
          %v2243 = vsel %vm2153, 0.0, %v1961
          %v2244 = vsel %vm2152, 0.0, %v1962
          %v2245 = vsel %vm2153, 0.0, %v1963
          %v2246 = vsel %vm2152, 0.0, %v1964
          %v2247 = vsel %vm2153, 0.0, %v1965
          %v2248 = vsel %vm2152, 0.0, %v1966
          %v2249 = vsel %vm2153, 0.0, %v1967
          %v2250 = vsel %vm2152, 0.0, %v1968
          %v2251 = vsel %vm2153, 0.0, %v1969
          %v2252 = vsel %vm2152, 0.0, %v1970
          %v2253 = vsel %vm2153, 0.0, %v1971
          %v2254 = vsel %vm2152, 0.0, %v1972
          %v2255 = vsel %vm2153, 0.0, %v1973
          %v2256 = vsel %vm2152, 0.0, %v1974
          %v2257 = vsel %vm2153, 0.0, %v1975
          %v2258 = vsel %vm2152, 0.0, %v1976
          %v2259 = vsel %vm2153, 0.0, %v1977
          %v2260 = vsel %vm2152, 0.0, %v1978
          %v2261 = vsel %vm2153, 0.0, %v1979
          %v2262 = vsel %vm2152, 0.0, %v1980
          %v2263 = vsel %vm2153, 0.0, %v1981
          %v2264 = vsel %vm2152, 0.0, %v1982
          %v2265 = vsel %vm2153, 0.0, %v1983
          %v2266 = vsel %vm2152, 0.0, %v1984
          %v2267 = vsel %vm2153, 0.0, %v1985
          %v2268 = vsel %vm2152, 0.0, %v1986
          %v2269 = vsel %vm2153, 0.0, %v1987
          %v2270 = vsel %vm2152, 0.0, %v1988
          %v2271 = vsel %vm2153, 0.0, %v1989
          %v2272 = vsel %vm2152, 0.0, %v1990
          %v2273 = vsel %vm2153, 0.0, %v1991
          %v2274 = vsel %vm2152, 0.0, %v1992
          %v2275 = vsel %vm2153, 0.0, %v1993
          %v2276 = vsel %vm2152, 0.0, %v1994
          %v2277 = vsel %vm2153, 0.0, %v1995
          %v2278 = vsel %vm2152, 0.0, %v1996
          %v2279 = vsel %vm2153, 0.0, %v1997
          %v2280 = vsel %vm2152, 0.0, %v1998
          %v2281 = vsel %vm2153, 0.0, %v1999
          %v2282 = vsel %vm2152, 0.0, %v2000
          %v2283 = vsel %vm2153, 0.0, %v2001
          %v2284 = vsel %vm2152, 0.0, %v2002
          %v2285 = vsel %vm2153, 0.0, %v2003
          %v2286 = vsel %vm2152, 0.0, %v2004
          %v2287 = vsel %vm2153, 0.0, %v2005
          %v2288 = vsel %vm2152, 0.0, %v2006
          %v2289 = vsel %vm2153, 0.0, %v2007
          %v2290 = vsel %vm2152, 0.0, %v2008
          %v2291 = vsel %vm2153, 0.0, %v2009
          %v2292 = vsel %vm2152, 0.0, %v2010
          %v2293 = vsel %vm2153, 0.0, %v2011
          %v2294 = vsel %vm2152, 0.0, %v2012
          %v2295 = vsel %vm2153, 0.0, %v2013
          %v2296 = vsel %vm2152, 0.0, %v2014
          %v2297 = vsel %vm2153, 0.0, %v2015
          %v2298 = vsel %vm2152, 0.0, %v2016
          %v2299 = vsel %vm2153, 0.0, %v2017
          %v2300 = vsel %vm2152, 0.0, %v2018
          %v2301 = vsel %vm2153, 0.0, %v2019
          %v2302 = vsel %vm2152, 0.0, %v2020
          %v2303 = vsel %vm2153, 0.0, %v2021
          %v2304 = vsel %vm2152, 0.0, %v2022
          %v2305 = vsel %vm2153, 0.0, %v2023
          %v2306 = vsel %vm2152, 0.0, %v2024
          %v2307 = vsel %vm2153, 0.0, %v2025
          %v2308 = vsel %vm2152, 0.0, %v2026
          %v2309 = vsel %vm2153, 0.0, %v2027
          %v2310 = vsel %vm2152, 0.0, %v2028
          %v2311 = vsel %vm2153, 0.0, %v2029
          %v2312 = vsel %vm2152, 0.0, %v2030
          %v2313 = vsel %vm2153, 0.0, %v2031
          %v2314 = vsel %vm2152, 0.0, %v2032
          %v2315 = vsel %vm2153, 0.0, %v2033
          %v2316 = vsel %vm2152, 0.0, %v2034
          %v2317 = vsel %vm2153, 0.0, %v2035
          %v2318 = vsel %vm2152, 0.0, %v2036
          %v2319 = vsel %vm2153, 0.0, %v2037
          %v2320 = vsel %vm2152, 0.0, %v2038
          %v2321 = vsel %vm2153, 0.0, %v2039
          %v2322 = vsel %vm2152, 0.0, %v2040
          %v2323 = vsel %vm2153, 0.0, %v2041
          %v2324 = vsel %vm2152, 0.0, %v2042
          %v2325 = vsel %vm2153, 0.0, %v2043
          %v2326 = vsel %vm2152, 0.0, %v2044
          %v2327 = vsel %vm2153, 0.0, %v2045
          %v2328 = vsel %vm2152, 0.0, %v2046
          %v2329 = vsel %vm2153, 0.0, %v2047
          %v2330 = vsel %vm2152, 0.0, %v2048
          %v2331 = vsel %vm2153, 0.0, %v2049
          %v2332 = vsel %vm2152, 0.0, %v2050
          %v2333 = vsel %vm2153, 0.0, %v2051
          %v2334 = vsel %vm2152, 0.0, %v2052
          %v2335 = vsel %vm2153, 0.0, %v2053
          %v2336 = vsel %vm2152, 0.0, %v2054
          %v2337 = vsel %vm2153, 0.0, %v2055
          %v2338 = vsel %vm2152, 0.0, %v2056
          %v2339 = vsel %vm2153, 0.0, %v2057
          %v2340 = vsel %vm2152, 0.0, %v2058
          %v2341 = vsel %vm2153, 0.0, %v2059
          %v2342 = vsel %vm2152, 0.0, %v2060
          %v2343 = vsel %vm2153, 0.0, %v2061
          %v2344 = vsel %vm2152, 0.0, %v2062
          %v2345 = vsel %vm2153, 0.0, %v2063
          %v2346 = vsel %vm2152, 0.0, %v2064
          %v2347 = vsel %vm2153, 0.0, %v2065
          %v2348 = vsel %vm2152, 0.0, %v2066
          %v2349 = vsel %vm2153, 0.0, %v2067
          %v2350 = vsel %vm2152, 0.0, %v2068
          %v2351 = vsel %vm2153, 0.0, %v2069
          %v2352 = vsel %vm2152, 0.0, %v2070
          %v2353 = vsel %vm2153, 0.0, %v2071
          %v2354 = vsel %vm2152, 0.0, %v2072
          %v2355 = vsel %vm2153, 0.0, %v2073
          %v2356 = vsel %vm2152, 0.0, %v2074
          %v2357 = vsel %vm2153, 0.0, %v2075
          %v2358 = vsel %vm2152, 0.0, %v2076
          %v2359 = vsel %vm2153, 0.0, %v2077
          %v2360 = vsel %vm2152, 0.0, %v2078
          %v2361 = vsel %vm2153, 0.0, %v2079
          %v2362 = vsel %vm2152, 0.0, %v2080
          %v2363 = vsel %vm2153, 0.0, %v2081
          %v2364 = vsel %vm2152, 0.0, %v2082
          %v2365 = vsel %vm2153, 0.0, %v2083
          %v2366 = vsel %vm2152, 0.0, %v2084
          %v2367 = vsel %vm2153, 0.0, %v2085
          %v2368 = vsel %vm2152, 0.0, %v2086
          %v2369 = vsel %vm2153, 0.0, %v2087
          %v2370 = vsel %vm2152, 0.0, %v2088
          %v2371 = vsel %vm2153, 0.0, %v2089
          %v2372 = vsel %vm2152, 0.0, %v2090
          %v2373 = vsel %vm2153, 0.0, %v2091
          %v2374 = vsel %vm2152, 0.0, %v2092
          %v2375 = vsel %vm2153, 0.0, %v2093
          %v2376 = vsel %vm2152, 0.0, %v2094
          %v2377 = vsel %vm2153, 0.0, %v2095
          %v2378 = vsel %vm2152, 0.0, %v2096
          %v2379 = vsel %vm2153, 0.0, %v2097
          %v2380 = vsel %vm2152, 0.0, %v2098
          %v2381 = vsel %vm2153, 0.0, %v2099
          %v2382 = vsel %vm2152, 0.0, %v2100
          %v2383 = vsel %vm2153, 0.0, %v2101
          %v2384 = vsel %vm2152, 0.0, %v2102
          %v2385 = vsel %vm2153, 0.0, %v2103
          %v2386 = vsel %vm2152, 0.0, %v2104
          %v2387 = vsel %vm2153, 0.0, %v2105
          %v2388 = vsel %vm2152, 0.0, %v2106
          %v2389 = vsel %vm2153, 0.0, %v2107
          %v2390 = vsel %vm2152, 0.0, %v2108
          %v2391 = vsel %vm2153, 0.0, %v2109
          %v2392 = vsel %vm2152, 0.0, %v2110
          %v2393 = vsel %vm2153, 0.0, %v2111
          %v2394 = vsel %vm2152, 0.0, %v2112
          %v2395 = vsel %vm2153, 0.0, %v2113
          %v2396 = vsel %vm2152, 0.0, %v2114
          %v2397 = vsel %vm2153, 0.0, %v2115
          %v2398 = vsel %vm2152, 0.0, %v2116
          %v2399 = vsel %vm2153, 0.0, %v2117
          %v2400 = vsel %vm2152, 0.0, %v2118
          %v2401 = vsel %vm2153, 0.0, %v2119
          %v2402 = vsel %vm2152, 0.0, %v2120
          %v2403 = vsel %vm2153, 0.0, %v2121
          %v2404 = vsel %vm2152, 0.0, %v2122
          %v2405 = vsel %vm2153, 0.0, %v2123
          %v2406 = vsel %vm2152, 0.0, %v2124
          %v2407 = vsel %vm2153, 0.0, %v2125
          %v2408 = vsel %vm2152, 0.0, %v2126
          %v2409 = vsel %vm2153, 0.0, %v2127
          %2410 = vst [vmem:[%s291] sm:$0xff] %v2154
          %2411 = vst [vmem:[%s291 + $0x8] sm:$0xff] %v2155
          %2412 = vst [vmem:[%s291 + $0x10] sm:$0xff] %v2156
          %2413 = vst [vmem:[%s291 + $0x18] sm:$0xff] %v2157
          %2414 = vst [vmem:[%s291 + $0x20] sm:$0xff] %v2158
          %2415 = vst [vmem:[%s291 + $0x28] sm:$0xff] %v2159
          %2416 = vst [vmem:[%s291 + $0x30] sm:$0xff] %v2160
          %2417 = vst [vmem:[%s291 + $0x38] sm:$0xff] %v2161
          %2418 = vst [vmem:[%s291 + $0x40] sm:$0xff] %v2162
          %2419 = vst [vmem:[%s291 + $0x48] sm:$0xff] %v2163
          %2420 = vst [vmem:[%s291 + $0x50] sm:$0xff] %v2164
          %2421 = vst [vmem:[%s291 + $0x58] sm:$0xff] %v2165
          %2422 = vst [vmem:[%s291 + $0x60] sm:$0xff] %v2166
          %2423 = vst [vmem:[%s291 + $0x68] sm:$0xff] %v2167
          %2424 = vst [vmem:[%s291 + $0x70] sm:$0xff] %v2168
          %2425 = vst [vmem:[%s291 + $0x78] sm:$0xff] %v2169
          %2426 = vst [vmem:[%s291 + $0x80] sm:$0xff] %v2170
          %2427 = vst [vmem:[%s291 + $0x88] sm:$0xff] %v2171
          %2428 = vst [vmem:[%s291 + $0x90] sm:$0xff] %v2172
          %2429 = vst [vmem:[%s291 + $0x98] sm:$0xff] %v2173
          %2430 = vst [vmem:[%s291 + $0xa0] sm:$0xff] %v2174
          %2431 = vst [vmem:[%s291 + $0xa8] sm:$0xff] %v2175
          %2432 = vst [vmem:[%s291 + $0xb0] sm:$0xff] %v2176
          %2433 = vst [vmem:[%s291 + $0xb8] sm:$0xff] %v2177
          %2434 = vst [vmem:[%s291 + $0xc0] sm:$0xff] %v2178
          %2435 = vst [vmem:[%s291 + $0xc8] sm:$0xff] %v2179
          %2436 = vst [vmem:[%s291 + $0xd0] sm:$0xff] %v2180
          %2437 = vst [vmem:[%s291 + $0xd8] sm:$0xff] %v2181
          %2438 = vst [vmem:[%s291 + $0xe0] sm:$0xff] %v2182
          %2439 = vst [vmem:[%s291 + $0xe8] sm:$0xff] %v2183
          %2440 = vst [vmem:[%s291 + $0xf0] sm:$0xff] %v2184
          %2441 = vst [vmem:[%s291 + $0xf8] sm:$0xff] %v2185
          %2442 = vst [vmem:[%s291 + $0x100] sm:$0xff] %v2186
          %2443 = vst [vmem:[%s291 + $0x108] sm:$0xff] %v2187
          %2444 = vst [vmem:[%s291 + $0x110] sm:$0xff] %v2188
          %2445 = vst [vmem:[%s291 + $0x118] sm:$0xff] %v2189
          %2446 = vst [vmem:[%s291 + $0x120] sm:$0xff] %v2190
          %2447 = vst [vmem:[%s291 + $0x128] sm:$0xff] %v2191
          %2448 = vst [vmem:[%s291 + $0x130] sm:$0xff] %v2192
          %2449 = vst [vmem:[%s291 + $0x138] sm:$0xff] %v2193
          %2450 = vst [vmem:[%s291 + $0x140] sm:$0xff] %v2194
          %2451 = vst [vmem:[%s291 + $0x148] sm:$0xff] %v2195
          %2452 = vst [vmem:[%s291 + $0x150] sm:$0xff] %v2196
          %2453 = vst [vmem:[%s291 + $0x158] sm:$0xff] %v2197
          %2454 = vst [vmem:[%s291 + $0x160] sm:$0xff] %v2198
          %2455 = vst [vmem:[%s291 + $0x168] sm:$0xff] %v2199
          %2456 = vst [vmem:[%s291 + $0x170] sm:$0xff] %v2200
          %2457 = vst [vmem:[%s291 + $0x178] sm:$0xff] %v2201
          %2458 = vst [vmem:[%s291 + $0x180] sm:$0xff] %v2202
          %2459 = vst [vmem:[%s291 + $0x188] sm:$0xff] %v2203
          %2460 = vst [vmem:[%s291 + $0x190] sm:$0xff] %v2204
          %2461 = vst [vmem:[%s291 + $0x198] sm:$0xff] %v2205
          %2462 = vst [vmem:[%s291 + $0x1a0] sm:$0xff] %v2206
          %2463 = vst [vmem:[%s291 + $0x1a8] sm:$0xff] %v2207
          %2464 = vst [vmem:[%s291 + $0x1b0] sm:$0xff] %v2208
          %2465 = vst [vmem:[%s291 + $0x1b8] sm:$0xff] %v2209
          %2466 = vst [vmem:[%s291 + $0x1c0] sm:$0xff] %v2210
          %2467 = vst [vmem:[%s291 + $0x1c8] sm:$0xff] %v2211
          %2468 = vst [vmem:[%s291 + $0x1d0] sm:$0xff] %v2212
          %2469 = vst [vmem:[%s291 + $0x1d8] sm:$0xff] %v2213
          %2470 = vst [vmem:[%s291 + $0x1e0] sm:$0xff] %v2214
          %2471 = vst [vmem:[%s291 + $0x1e8] sm:$0xff] %v2215
          %2472 = vst [vmem:[%s291 + $0x1f0] sm:$0xff] %v2216
          %2473 = vst [vmem:[%s291 + $0x1f8] sm:$0xff] %v2217
          %2474 = vst [vmem:[%s291 + $0x200] sm:$0xff] %v2218
          %2475 = vst [vmem:[%s291 + $0x208] sm:$0xff] %v2219
          %2476 = vst [vmem:[%s291 + $0x210] sm:$0xff] %v2220
          %2477 = vst [vmem:[%s291 + $0x218] sm:$0xff] %v2221
          %2478 = vst [vmem:[%s291 + $0x220] sm:$0xff] %v2222
          %2479 = vst [vmem:[%s291 + $0x228] sm:$0xff] %v2223
          %2480 = vst [vmem:[%s291 + $0x230] sm:$0xff] %v2224
          %2481 = vst [vmem:[%s291 + $0x238] sm:$0xff] %v2225
          %2482 = vst [vmem:[%s291 + $0x240] sm:$0xff] %v2226
          %2483 = vst [vmem:[%s291 + $0x248] sm:$0xff] %v2227
          %2484 = vst [vmem:[%s291 + $0x250] sm:$0xff] %v2228
          %2485 = vst [vmem:[%s291 + $0x258] sm:$0xff] %v2229
          %2486 = vst [vmem:[%s291 + $0x260] sm:$0xff] %v2230
          %2487 = vst [vmem:[%s291 + $0x268] sm:$0xff] %v2231
          %2488 = vst [vmem:[%s291 + $0x270] sm:$0xff] %v2232
          %2489 = vst [vmem:[%s291 + $0x278] sm:$0xff] %v2233
          %2490 = vst [vmem:[%s291 + $0x280] sm:$0xff] %v2234
          %2491 = vst [vmem:[%s291 + $0x288] sm:$0xff] %v2235
          %2492 = vst [vmem:[%s291 + $0x290] sm:$0xff] %v2236
          %2493 = vst [vmem:[%s291 + $0x298] sm:$0xff] %v2237
          %2494 = vst [vmem:[%s291 + $0x2a0] sm:$0xff] %v2238
          %2495 = vst [vmem:[%s291 + $0x2a8] sm:$0xff] %v2239
          %2496 = vst [vmem:[%s291 + $0x2b0] sm:$0xff] %v2240
          %2497 = vst [vmem:[%s291 + $0x2b8] sm:$0xff] %v2241
          %2498 = vst [vmem:[%s291 + $0x2c0] sm:$0xff] %v2242
          %2499 = vst [vmem:[%s291 + $0x2c8] sm:$0xff] %v2243
          %2500 = vst [vmem:[%s291 + $0x2d0] sm:$0xff] %v2244
          %2501 = vst [vmem:[%s291 + $0x2d8] sm:$0xff] %v2245
          %2502 = vst [vmem:[%s291 + $0x2e0] sm:$0xff] %v2246
          %2503 = vst [vmem:[%s291 + $0x2e8] sm:$0xff] %v2247
          %2504 = vst [vmem:[%s291 + $0x2f0] sm:$0xff] %v2248
          %2505 = vst [vmem:[%s291 + $0x2f8] sm:$0xff] %v2249
          %2506 = vst [vmem:[%s291 + $0x300] sm:$0xff] %v2250
          %2507 = vst [vmem:[%s291 + $0x308] sm:$0xff] %v2251
          %2508 = vst [vmem:[%s291 + $0x310] sm:$0xff] %v2252
          %2509 = vst [vmem:[%s291 + $0x318] sm:$0xff] %v2253
          %2510 = vst [vmem:[%s291 + $0x320] sm:$0xff] %v2254
          %2511 = vst [vmem:[%s291 + $0x328] sm:$0xff] %v2255
          %2512 = vst [vmem:[%s291 + $0x330] sm:$0xff] %v2256
          %2513 = vst [vmem:[%s291 + $0x338] sm:$0xff] %v2257
          %2514 = vst [vmem:[%s291 + $0x340] sm:$0xff] %v2258
          %2515 = vst [vmem:[%s291 + $0x348] sm:$0xff] %v2259
          %2516 = vst [vmem:[%s291 + $0x350] sm:$0xff] %v2260
          %2517 = vst [vmem:[%s291 + $0x358] sm:$0xff] %v2261
          %2518 = vst [vmem:[%s291 + $0x360] sm:$0xff] %v2262
          %2519 = vst [vmem:[%s291 + $0x368] sm:$0xff] %v2263
          %2520 = vst [vmem:[%s291 + $0x370] sm:$0xff] %v2264
          %2521 = vst [vmem:[%s291 + $0x378] sm:$0xff] %v2265
          %2522 = vst [vmem:[%s291 + $0x380] sm:$0xff] %v2266
          %2523 = vst [vmem:[%s291 + $0x388] sm:$0xff] %v2267
          %2524 = vst [vmem:[%s291 + $0x390] sm:$0xff] %v2268
          %2525 = vst [vmem:[%s291 + $0x398] sm:$0xff] %v2269
          %2526 = vst [vmem:[%s291 + $0x3a0] sm:$0xff] %v2270
          %2527 = vst [vmem:[%s291 + $0x3a8] sm:$0xff] %v2271
          %2528 = vst [vmem:[%s291 + $0x3b0] sm:$0xff] %v2272
          %2529 = vst [vmem:[%s291 + $0x3b8] sm:$0xff] %v2273
          %2530 = vst [vmem:[%s291 + $0x3c0] sm:$0xff] %v2274
          %2531 = vst [vmem:[%s291 + $0x3c8] sm:$0xff] %v2275
          %2532 = vst [vmem:[%s291 + $0x3d0] sm:$0xff] %v2276
          %2533 = vst [vmem:[%s291 + $0x3d8] sm:$0xff] %v2277
          %2534 = vst [vmem:[%s291 + $0x3e0] sm:$0xff] %v2278
          %2535 = vst [vmem:[%s291 + $0x3e8] sm:$0xff] %v2279
          %2536 = vst [vmem:[%s291 + $0x3f0] sm:$0xff] %v2280
          %2537 = vst [vmem:[%s291 + $0x3f8] sm:$0xff] %v2281
          %2538 = vst [vmem:[%s291 + $0x400] sm:$0xff] %v2282
          %2539 = vst [vmem:[%s291 + $0x408] sm:$0xff] %v2283
          %2540 = vst [vmem:[%s291 + $0x410] sm:$0xff] %v2284
          %2541 = vst [vmem:[%s291 + $0x418] sm:$0xff] %v2285
          %2542 = vst [vmem:[%s291 + $0x420] sm:$0xff] %v2286
          %2543 = vst [vmem:[%s291 + $0x428] sm:$0xff] %v2287
          %2544 = vst [vmem:[%s291 + $0x430] sm:$0xff] %v2288
          %2545 = vst [vmem:[%s291 + $0x438] sm:$0xff] %v2289
          %2546 = vst [vmem:[%s291 + $0x440] sm:$0xff] %v2290
          %2547 = vst [vmem:[%s291 + $0x448] sm:$0xff] %v2291
          %2548 = vst [vmem:[%s291 + $0x450] sm:$0xff] %v2292
          %2549 = vst [vmem:[%s291 + $0x458] sm:$0xff] %v2293
          %2550 = vst [vmem:[%s291 + $0x460] sm:$0xff] %v2294
          %2551 = vst [vmem:[%s291 + $0x468] sm:$0xff] %v2295
          %2552 = vst [vmem:[%s291 + $0x470] sm:$0xff] %v2296
          %2553 = vst [vmem:[%s291 + $0x478] sm:$0xff] %v2297
          %2554 = vst [vmem:[%s291 + $0x480] sm:$0xff] %v2298
          %2555 = vst [vmem:[%s291 + $0x488] sm:$0xff] %v2299
          %2556 = vst [vmem:[%s291 + $0x490] sm:$0xff] %v2300
          %2557 = vst [vmem:[%s291 + $0x498] sm:$0xff] %v2301
          %2558 = vst [vmem:[%s291 + $0x4a0] sm:$0xff] %v2302
          %2559 = vst [vmem:[%s291 + $0x4a8] sm:$0xff] %v2303
          %2560 = vst [vmem:[%s291 + $0x4b0] sm:$0xff] %v2304
          %2561 = vst [vmem:[%s291 + $0x4b8] sm:$0xff] %v2305
          %2562 = vst [vmem:[%s291 + $0x4c0] sm:$0xff] %v2306
          %2563 = vst [vmem:[%s291 + $0x4c8] sm:$0xff] %v2307
          %2564 = vst [vmem:[%s291 + $0x4d0] sm:$0xff] %v2308
          %2565 = vst [vmem:[%s291 + $0x4d8] sm:$0xff] %v2309
          %2566 = vst [vmem:[%s291 + $0x4e0] sm:$0xff] %v2310
          %2567 = vst [vmem:[%s291 + $0x4e8] sm:$0xff] %v2311
          %2568 = vst [vmem:[%s291 + $0x4f0] sm:$0xff] %v2312
          %2569 = vst [vmem:[%s291 + $0x4f8] sm:$0xff] %v2313
          %2570 = vst [vmem:[%s291 + $0x500] sm:$0xff] %v2314
          %2571 = vst [vmem:[%s291 + $0x508] sm:$0xff] %v2315
          %2572 = vst [vmem:[%s291 + $0x510] sm:$0xff] %v2316
          %2573 = vst [vmem:[%s291 + $0x518] sm:$0xff] %v2317
          %2574 = vst [vmem:[%s291 + $0x520] sm:$0xff] %v2318
          %2575 = vst [vmem:[%s291 + $0x528] sm:$0xff] %v2319
          %2576 = vst [vmem:[%s291 + $0x530] sm:$0xff] %v2320
          %2577 = vst [vmem:[%s291 + $0x538] sm:$0xff] %v2321
          %2578 = vst [vmem:[%s291 + $0x540] sm:$0xff] %v2322
          %2579 = vst [vmem:[%s291 + $0x548] sm:$0xff] %v2323
          %2580 = vst [vmem:[%s291 + $0x550] sm:$0xff] %v2324
          %2581 = vst [vmem:[%s291 + $0x558] sm:$0xff] %v2325
          %2582 = vst [vmem:[%s291 + $0x560] sm:$0xff] %v2326
          %2583 = vst [vmem:[%s291 + $0x568] sm:$0xff] %v2327
          %2584 = vst [vmem:[%s291 + $0x570] sm:$0xff] %v2328
          %2585 = vst [vmem:[%s291 + $0x578] sm:$0xff] %v2329
          %2586 = vst [vmem:[%s291 + $0x580] sm:$0xff] %v2330
          %2587 = vst [vmem:[%s291 + $0x588] sm:$0xff] %v2331
          %2588 = vst [vmem:[%s291 + $0x590] sm:$0xff] %v2332
          %2589 = vst [vmem:[%s291 + $0x598] sm:$0xff] %v2333
          %2590 = vst [vmem:[%s291 + $0x5a0] sm:$0xff] %v2334
          %2591 = vst [vmem:[%s291 + $0x5a8] sm:$0xff] %v2335
          %2592 = vst [vmem:[%s291 + $0x5b0] sm:$0xff] %v2336
          %2593 = vst [vmem:[%s291 + $0x5b8] sm:$0xff] %v2337
          %2594 = vst [vmem:[%s291 + $0x5c0] sm:$0xff] %v2338
          %2595 = vst [vmem:[%s291 + $0x5c8] sm:$0xff] %v2339
          %2596 = vst [vmem:[%s291 + $0x5d0] sm:$0xff] %v2340
          %2597 = vst [vmem:[%s291 + $0x5d8] sm:$0xff] %v2341
          %2598 = vst [vmem:[%s291 + $0x5e0] sm:$0xff] %v2342
          %2599 = vst [vmem:[%s291 + $0x5e8] sm:$0xff] %v2343
          %2600 = vst [vmem:[%s291 + $0x5f0] sm:$0xff] %v2344
          %2601 = vst [vmem:[%s291 + $0x5f8] sm:$0xff] %v2345
          %2602 = vst [vmem:[%s291 + $0x600] sm:$0xff] %v2346
          %2603 = vst [vmem:[%s291 + $0x608] sm:$0xff] %v2347
          %2604 = vst [vmem:[%s291 + $0x610] sm:$0xff] %v2348
          %2605 = vst [vmem:[%s291 + $0x618] sm:$0xff] %v2349
          %2606 = vst [vmem:[%s291 + $0x620] sm:$0xff] %v2350
          %2607 = vst [vmem:[%s291 + $0x628] sm:$0xff] %v2351
          %2608 = vst [vmem:[%s291 + $0x630] sm:$0xff] %v2352
          %2609 = vst [vmem:[%s291 + $0x638] sm:$0xff] %v2353
          %2610 = vst [vmem:[%s291 + $0x640] sm:$0xff] %v2354
          %2611 = vst [vmem:[%s291 + $0x648] sm:$0xff] %v2355
          %2612 = vst [vmem:[%s291 + $0x650] sm:$0xff] %v2356
          %2613 = vst [vmem:[%s291 + $0x658] sm:$0xff] %v2357
          %2614 = vst [vmem:[%s291 + $0x660] sm:$0xff] %v2358
          %2615 = vst [vmem:[%s291 + $0x668] sm:$0xff] %v2359
          %2616 = vst [vmem:[%s291 + $0x670] sm:$0xff] %v2360
          %2617 = vst [vmem:[%s291 + $0x678] sm:$0xff] %v2361
          %2618 = vst [vmem:[%s291 + $0x680] sm:$0xff] %v2362
          %2619 = vst [vmem:[%s291 + $0x688] sm:$0xff] %v2363
          %2620 = vst [vmem:[%s291 + $0x690] sm:$0xff] %v2364
          %2621 = vst [vmem:[%s291 + $0x698] sm:$0xff] %v2365
          %2622 = vst [vmem:[%s291 + $0x6a0] sm:$0xff] %v2366
          %2623 = vst [vmem:[%s291 + $0x6a8] sm:$0xff] %v2367
          %2624 = vst [vmem:[%s291 + $0x6b0] sm:$0xff] %v2368
          %2625 = vst [vmem:[%s291 + $0x6b8] sm:$0xff] %v2369
          %2626 = vst [vmem:[%s291 + $0x6c0] sm:$0xff] %v2370
          %2627 = vst [vmem:[%s291 + $0x6c8] sm:$0xff] %v2371
          %2628 = vst [vmem:[%s291 + $0x6d0] sm:$0xff] %v2372
          %2629 = vst [vmem:[%s291 + $0x6d8] sm:$0xff] %v2373
          %2630 = vst [vmem:[%s291 + $0x6e0] sm:$0xff] %v2374
          %2631 = vst [vmem:[%s291 + $0x6e8] sm:$0xff] %v2375
          %2632 = vst [vmem:[%s291 + $0x6f0] sm:$0xff] %v2376
          %2633 = vst [vmem:[%s291 + $0x6f8] sm:$0xff] %v2377
          %2634 = vst [vmem:[%s291 + $0x700] sm:$0xff] %v2378
          %2635 = vst [vmem:[%s291 + $0x708] sm:$0xff] %v2379
          %2636 = vst [vmem:[%s291 + $0x710] sm:$0xff] %v2380
          %2637 = vst [vmem:[%s291 + $0x718] sm:$0xff] %v2381
          %2638 = vst [vmem:[%s291 + $0x720] sm:$0xff] %v2382
          %2639 = vst [vmem:[%s291 + $0x728] sm:$0xff] %v2383
          %2640 = vst [vmem:[%s291 + $0x730] sm:$0xff] %v2384
          %2641 = vst [vmem:[%s291 + $0x738] sm:$0xff] %v2385
          %2642 = vst [vmem:[%s291 + $0x740] sm:$0xff] %v2386
          %2643 = vst [vmem:[%s291 + $0x748] sm:$0xff] %v2387
          %2644 = vst [vmem:[%s291 + $0x750] sm:$0xff] %v2388
          %2645 = vst [vmem:[%s291 + $0x758] sm:$0xff] %v2389
          %2646 = vst [vmem:[%s291 + $0x760] sm:$0xff] %v2390
          %2647 = vst [vmem:[%s291 + $0x768] sm:$0xff] %v2391
          %2648 = vst [vmem:[%s291 + $0x770] sm:$0xff] %v2392
          %2649 = vst [vmem:[%s291 + $0x778] sm:$0xff] %v2393
          %2650 = vst [vmem:[%s291 + $0x780] sm:$0xff] %v2394
          %2651 = vst [vmem:[%s291 + $0x788] sm:$0xff] %v2395
          %2652 = vst [vmem:[%s291 + $0x790] sm:$0xff] %v2396
          %2653 = vst [vmem:[%s291 + $0x798] sm:$0xff] %v2397
          %2654 = vst [vmem:[%s291 + $0x7a0] sm:$0xff] %v2398
          %2655 = vst [vmem:[%s291 + $0x7a8] sm:$0xff] %v2399
          %2656 = vst [vmem:[%s291 + $0x7b0] sm:$0xff] %v2400
          %2657 = vst [vmem:[%s291 + $0x7b8] sm:$0xff] %v2401
          %2658 = vst [vmem:[%s291 + $0x7c0] sm:$0xff] %v2402
          %2659 = vst [vmem:[%s291 + $0x7c8] sm:$0xff] %v2403
          %2660 = vst [vmem:[%s291 + $0x7d0] sm:$0xff] %v2404
          %2661 = vst [vmem:[%s291 + $0x7d8] sm:$0xff] %v2405
          %2662 = vst [vmem:[%s291 + $0x7e0] sm:$0xff] %v2406
          %2663 = vst [vmem:[%s291 + $0x7e8] sm:$0xff] %v2407
          %2664 = vst [vmem:[%s291 + $0x7f0] sm:$0xff] %v2408
          %2665 = vst [vmem:[%s291 + $0x7f8] sm:$0xff] %v2409
        $region48: #{tpu_custom_call.1} parent=35 // pred_fallthru
          _
        %p2666 = scmp.eq.s32.totalorder %s317, 0
        // Predicated region
        $region49: #{tpu_custom_call.1} parent=35 // pred_check
          %p2667 = pneg %p2666
        $region50: #{tpu_custom_call.1} parent=35 // pred_check_branch
          %2669 = sbr.rel (%p2667) target = $region52
        $region51: #{tpu_custom_call.1} parent=35 // pred_region
          %v2670 = vld [vmem:[%s250] sm:$0xff]
          %v2671 = vld [vmem:[%s250 + $0x8] sm:$0xff]
          %v2672 = vld [vmem:[%s250 + $0x10] sm:$0xff]
          %v2673 = vld [vmem:[%s250 + $0x18] sm:$0xff]
          %v2674 = vld [vmem:[%s250 + $0x20] sm:$0xff]
          %v2675 = vld [vmem:[%s250 + $0x28] sm:$0xff]
          %v2676 = vld [vmem:[%s250 + $0x30] sm:$0xff]
          %v2677 = vld [vmem:[%s250 + $0x38] sm:$0xff]
          %v2678 = vld [vmem:[%s250 + $0x40] sm:$0xff]
          %v2679 = vld [vmem:[%s250 + $0x48] sm:$0xff]
          %v2680 = vld [vmem:[%s250 + $0x50] sm:$0xff]
          %v2681 = vld [vmem:[%s250 + $0x58] sm:$0xff]
          %v2682 = vld [vmem:[%s250 + $0x60] sm:$0xff]
          %v2683 = vld [vmem:[%s250 + $0x68] sm:$0xff]
          %v2684 = vld [vmem:[%s250 + $0x70] sm:$0xff]
          %v2685 = vld [vmem:[%s250 + $0x78] sm:$0xff]
          %v2686 = vld [vmem:[%s250 + $0x80] sm:$0xff]
          %v2687 = vld [vmem:[%s250 + $0x88] sm:$0xff]
          %v2688 = vld [vmem:[%s250 + $0x90] sm:$0xff]
          %v2689 = vld [vmem:[%s250 + $0x98] sm:$0xff]
          %v2690 = vld [vmem:[%s250 + $0xa0] sm:$0xff]
          %v2691 = vld [vmem:[%s250 + $0xa8] sm:$0xff]
          %v2692 = vld [vmem:[%s250 + $0xb0] sm:$0xff]
          %v2693 = vld [vmem:[%s250 + $0xb8] sm:$0xff]
          %v2694 = vld [vmem:[%s250 + $0xc0] sm:$0xff]
          %v2695 = vld [vmem:[%s250 + $0xc8] sm:$0xff]
          %v2696 = vld [vmem:[%s250 + $0xd0] sm:$0xff]
          %v2697 = vld [vmem:[%s250 + $0xd8] sm:$0xff]
          %v2698 = vld [vmem:[%s250 + $0xe0] sm:$0xff]
          %v2699 = vld [vmem:[%s250 + $0xe8] sm:$0xff]
          %v2700 = vld [vmem:[%s250 + $0xf0] sm:$0xff]
          %v2701 = vld [vmem:[%s250 + $0xf8] sm:$0xff]
          %v2702 = vld [vmem:[%s250 + $0x100] sm:$0xff]
          %v2703 = vld [vmem:[%s250 + $0x108] sm:$0xff]
          %v2704 = vld [vmem:[%s250 + $0x110] sm:$0xff]
          %v2705 = vld [vmem:[%s250 + $0x118] sm:$0xff]
          %v2706 = vld [vmem:[%s250 + $0x120] sm:$0xff]
          %v2707 = vld [vmem:[%s250 + $0x128] sm:$0xff]
          %v2708 = vld [vmem:[%s250 + $0x130] sm:$0xff]
          %v2709 = vld [vmem:[%s250 + $0x138] sm:$0xff]
          %v2710 = vld [vmem:[%s250 + $0x140] sm:$0xff]
          %v2711 = vld [vmem:[%s250 + $0x148] sm:$0xff]
          %v2712 = vld [vmem:[%s250 + $0x150] sm:$0xff]
          %v2713 = vld [vmem:[%s250 + $0x158] sm:$0xff]
          %v2714 = vld [vmem:[%s250 + $0x160] sm:$0xff]
          %v2715 = vld [vmem:[%s250 + $0x168] sm:$0xff]
          %v2716 = vld [vmem:[%s250 + $0x170] sm:$0xff]
          %v2717 = vld [vmem:[%s250 + $0x178] sm:$0xff]
          %v2718 = vld [vmem:[%s250 + $0x180] sm:$0xff]
          %v2719 = vld [vmem:[%s250 + $0x188] sm:$0xff]
          %v2720 = vld [vmem:[%s250 + $0x190] sm:$0xff]
          %v2721 = vld [vmem:[%s250 + $0x198] sm:$0xff]
          %v2722 = vld [vmem:[%s250 + $0x1a0] sm:$0xff]
          %v2723 = vld [vmem:[%s250 + $0x1a8] sm:$0xff]
          %v2724 = vld [vmem:[%s250 + $0x1b0] sm:$0xff]
          %v2725 = vld [vmem:[%s250 + $0x1b8] sm:$0xff]
          %v2726 = vld [vmem:[%s250 + $0x1c0] sm:$0xff]
          %v2727 = vld [vmem:[%s250 + $0x1c8] sm:$0xff]
          %v2728 = vld [vmem:[%s250 + $0x1d0] sm:$0xff]
          %v2729 = vld [vmem:[%s250 + $0x1d8] sm:$0xff]
          %v2730 = vld [vmem:[%s250 + $0x1e0] sm:$0xff]
          %v2731 = vld [vmem:[%s250 + $0x1e8] sm:$0xff]
          %v2732 = vld [vmem:[%s250 + $0x1f0] sm:$0xff]
          %v2733 = vld [vmem:[%s250 + $0x1f8] sm:$0xff]
          %v2734 = vld [vmem:[%s250 + $0x200] sm:$0xff]
          %v2735 = vld [vmem:[%s250 + $0x208] sm:$0xff]
          %v2736 = vld [vmem:[%s250 + $0x210] sm:$0xff]
          %v2737 = vld [vmem:[%s250 + $0x218] sm:$0xff]
          %v2738 = vld [vmem:[%s250 + $0x220] sm:$0xff]
          %v2739 = vld [vmem:[%s250 + $0x228] sm:$0xff]
          %v2740 = vld [vmem:[%s250 + $0x230] sm:$0xff]
          %v2741 = vld [vmem:[%s250 + $0x238] sm:$0xff]
          %v2742 = vld [vmem:[%s250 + $0x240] sm:$0xff]
          %v2743 = vld [vmem:[%s250 + $0x248] sm:$0xff]
          %v2744 = vld [vmem:[%s250 + $0x250] sm:$0xff]
          %v2745 = vld [vmem:[%s250 + $0x258] sm:$0xff]
          %v2746 = vld [vmem:[%s250 + $0x260] sm:$0xff]
          %v2747 = vld [vmem:[%s250 + $0x268] sm:$0xff]
          %v2748 = vld [vmem:[%s250 + $0x270] sm:$0xff]
          %v2749 = vld [vmem:[%s250 + $0x278] sm:$0xff]
          %v2750 = vld [vmem:[%s250 + $0x280] sm:$0xff]
          %v2751 = vld [vmem:[%s250 + $0x288] sm:$0xff]
          %v2752 = vld [vmem:[%s250 + $0x290] sm:$0xff]
          %v2753 = vld [vmem:[%s250 + $0x298] sm:$0xff]
          %v2754 = vld [vmem:[%s250 + $0x2a0] sm:$0xff]
          %v2755 = vld [vmem:[%s250 + $0x2a8] sm:$0xff]
          %v2756 = vld [vmem:[%s250 + $0x2b0] sm:$0xff]
          %v2757 = vld [vmem:[%s250 + $0x2b8] sm:$0xff]
          %v2758 = vld [vmem:[%s250 + $0x2c0] sm:$0xff]
          %v2759 = vld [vmem:[%s250 + $0x2c8] sm:$0xff]
          %v2760 = vld [vmem:[%s250 + $0x2d0] sm:$0xff]
          %v2761 = vld [vmem:[%s250 + $0x2d8] sm:$0xff]
          %v2762 = vld [vmem:[%s250 + $0x2e0] sm:$0xff]
          %v2763 = vld [vmem:[%s250 + $0x2e8] sm:$0xff]
          %v2764 = vld [vmem:[%s250 + $0x2f0] sm:$0xff]
          %v2765 = vld [vmem:[%s250 + $0x2f8] sm:$0xff]
          %v2766 = vld [vmem:[%s250 + $0x300] sm:$0xff]
          %v2767 = vld [vmem:[%s250 + $0x308] sm:$0xff]
          %v2768 = vld [vmem:[%s250 + $0x310] sm:$0xff]
          %v2769 = vld [vmem:[%s250 + $0x318] sm:$0xff]
          %v2770 = vld [vmem:[%s250 + $0x320] sm:$0xff]
          %v2771 = vld [vmem:[%s250 + $0x328] sm:$0xff]
          %v2772 = vld [vmem:[%s250 + $0x330] sm:$0xff]
          %v2773 = vld [vmem:[%s250 + $0x338] sm:$0xff]
          %v2774 = vld [vmem:[%s250 + $0x340] sm:$0xff]
          %v2775 = vld [vmem:[%s250 + $0x348] sm:$0xff]
          %v2776 = vld [vmem:[%s250 + $0x350] sm:$0xff]
          %v2777 = vld [vmem:[%s250 + $0x358] sm:$0xff]
          %v2778 = vld [vmem:[%s250 + $0x360] sm:$0xff]
          %v2779 = vld [vmem:[%s250 + $0x368] sm:$0xff]
          %v2780 = vld [vmem:[%s250 + $0x370] sm:$0xff]
          %v2781 = vld [vmem:[%s250 + $0x378] sm:$0xff]
          %v2782 = vld [vmem:[%s250 + $0x380] sm:$0xff]
          %v2783 = vld [vmem:[%s250 + $0x388] sm:$0xff]
          %v2784 = vld [vmem:[%s250 + $0x390] sm:$0xff]
          %v2785 = vld [vmem:[%s250 + $0x398] sm:$0xff]
          %v2786 = vld [vmem:[%s250 + $0x3a0] sm:$0xff]
          %v2787 = vld [vmem:[%s250 + $0x3a8] sm:$0xff]
          %v2788 = vld [vmem:[%s250 + $0x3b0] sm:$0xff]
          %v2789 = vld [vmem:[%s250 + $0x3b8] sm:$0xff]
          %v2790 = vld [vmem:[%s250 + $0x3c0] sm:$0xff]
          %v2791 = vld [vmem:[%s250 + $0x3c8] sm:$0xff]
          %v2792 = vld [vmem:[%s250 + $0x3d0] sm:$0xff]
          %v2793 = vld [vmem:[%s250 + $0x3d8] sm:$0xff]
          %v2794 = vld [vmem:[%s250 + $0x3e0] sm:$0xff]
          %v2795 = vld [vmem:[%s250 + $0x3e8] sm:$0xff]
          %v2796 = vld [vmem:[%s250 + $0x3f0] sm:$0xff]
          %v2797 = vld [vmem:[%s250 + $0x3f8] sm:$0xff]
          %v2798 = vld [vmem:[%s250 + $0x400] sm:$0xff]
          %v2799 = vld [vmem:[%s250 + $0x408] sm:$0xff]
          %v2800 = vld [vmem:[%s250 + $0x410] sm:$0xff]
          %v2801 = vld [vmem:[%s250 + $0x418] sm:$0xff]
          %v2802 = vld [vmem:[%s250 + $0x420] sm:$0xff]
          %v2803 = vld [vmem:[%s250 + $0x428] sm:$0xff]
          %v2804 = vld [vmem:[%s250 + $0x430] sm:$0xff]
          %v2805 = vld [vmem:[%s250 + $0x438] sm:$0xff]
          %v2806 = vld [vmem:[%s250 + $0x440] sm:$0xff]
          %v2807 = vld [vmem:[%s250 + $0x448] sm:$0xff]
          %v2808 = vld [vmem:[%s250 + $0x450] sm:$0xff]
          %v2809 = vld [vmem:[%s250 + $0x458] sm:$0xff]
          %v2810 = vld [vmem:[%s250 + $0x460] sm:$0xff]
          %v2811 = vld [vmem:[%s250 + $0x468] sm:$0xff]
          %v2812 = vld [vmem:[%s250 + $0x470] sm:$0xff]
          %v2813 = vld [vmem:[%s250 + $0x478] sm:$0xff]
          %v2814 = vld [vmem:[%s250 + $0x480] sm:$0xff]
          %v2815 = vld [vmem:[%s250 + $0x488] sm:$0xff]
          %v2816 = vld [vmem:[%s250 + $0x490] sm:$0xff]
          %v2817 = vld [vmem:[%s250 + $0x498] sm:$0xff]
          %v2818 = vld [vmem:[%s250 + $0x4a0] sm:$0xff]
          %v2819 = vld [vmem:[%s250 + $0x4a8] sm:$0xff]
          %v2820 = vld [vmem:[%s250 + $0x4b0] sm:$0xff]
          %v2821 = vld [vmem:[%s250 + $0x4b8] sm:$0xff]
          %v2822 = vld [vmem:[%s250 + $0x4c0] sm:$0xff]
          %v2823 = vld [vmem:[%s250 + $0x4c8] sm:$0xff]
          %v2824 = vld [vmem:[%s250 + $0x4d0] sm:$0xff]
          %v2825 = vld [vmem:[%s250 + $0x4d8] sm:$0xff]
          %v2826 = vld [vmem:[%s250 + $0x4e0] sm:$0xff]
          %v2827 = vld [vmem:[%s250 + $0x4e8] sm:$0xff]
          %v2828 = vld [vmem:[%s250 + $0x4f0] sm:$0xff]
          %v2829 = vld [vmem:[%s250 + $0x4f8] sm:$0xff]
          %v2830 = vld [vmem:[%s250 + $0x500] sm:$0xff]
          %v2831 = vld [vmem:[%s250 + $0x508] sm:$0xff]
          %v2832 = vld [vmem:[%s250 + $0x510] sm:$0xff]
          %v2833 = vld [vmem:[%s250 + $0x518] sm:$0xff]
          %v2834 = vld [vmem:[%s250 + $0x520] sm:$0xff]
          %v2835 = vld [vmem:[%s250 + $0x528] sm:$0xff]
          %v2836 = vld [vmem:[%s250 + $0x530] sm:$0xff]
          %v2837 = vld [vmem:[%s250 + $0x538] sm:$0xff]
          %v2838 = vld [vmem:[%s250 + $0x540] sm:$0xff]
          %v2839 = vld [vmem:[%s250 + $0x548] sm:$0xff]
          %v2840 = vld [vmem:[%s250 + $0x550] sm:$0xff]
          %v2841 = vld [vmem:[%s250 + $0x558] sm:$0xff]
          %v2842 = vld [vmem:[%s250 + $0x560] sm:$0xff]
          %v2843 = vld [vmem:[%s250 + $0x568] sm:$0xff]
          %v2844 = vld [vmem:[%s250 + $0x570] sm:$0xff]
          %v2845 = vld [vmem:[%s250 + $0x578] sm:$0xff]
          %v2846 = vld [vmem:[%s250 + $0x580] sm:$0xff]
          %v2847 = vld [vmem:[%s250 + $0x588] sm:$0xff]
          %v2848 = vld [vmem:[%s250 + $0x590] sm:$0xff]
          %v2849 = vld [vmem:[%s250 + $0x598] sm:$0xff]
          %v2850 = vld [vmem:[%s250 + $0x5a0] sm:$0xff]
          %v2851 = vld [vmem:[%s250 + $0x5a8] sm:$0xff]
          %v2852 = vld [vmem:[%s250 + $0x5b0] sm:$0xff]
          %v2853 = vld [vmem:[%s250 + $0x5b8] sm:$0xff]
          %v2854 = vld [vmem:[%s250 + $0x5c0] sm:$0xff]
          %v2855 = vld [vmem:[%s250 + $0x5c8] sm:$0xff]
          %v2856 = vld [vmem:[%s250 + $0x5d0] sm:$0xff]
          %v2857 = vld [vmem:[%s250 + $0x5d8] sm:$0xff]
          %v2858 = vld [vmem:[%s250 + $0x5e0] sm:$0xff]
          %v2859 = vld [vmem:[%s250 + $0x5e8] sm:$0xff]
          %v2860 = vld [vmem:[%s250 + $0x5f0] sm:$0xff]
          %v2861 = vld [vmem:[%s250 + $0x5f8] sm:$0xff]
          %v2862 = vld [vmem:[%s250 + $0x600] sm:$0xff]
          %v2863 = vld [vmem:[%s250 + $0x608] sm:$0xff]
          %v2864 = vld [vmem:[%s250 + $0x610] sm:$0xff]
          %v2865 = vld [vmem:[%s250 + $0x618] sm:$0xff]
          %v2866 = vld [vmem:[%s250 + $0x620] sm:$0xff]
          %v2867 = vld [vmem:[%s250 + $0x628] sm:$0xff]
          %v2868 = vld [vmem:[%s250 + $0x630] sm:$0xff]
          %v2869 = vld [vmem:[%s250 + $0x638] sm:$0xff]
          %v2870 = vld [vmem:[%s250 + $0x640] sm:$0xff]
          %v2871 = vld [vmem:[%s250 + $0x648] sm:$0xff]
          %v2872 = vld [vmem:[%s250 + $0x650] sm:$0xff]
          %v2873 = vld [vmem:[%s250 + $0x658] sm:$0xff]
          %v2874 = vld [vmem:[%s250 + $0x660] sm:$0xff]
          %v2875 = vld [vmem:[%s250 + $0x668] sm:$0xff]
          %v2876 = vld [vmem:[%s250 + $0x670] sm:$0xff]
          %v2877 = vld [vmem:[%s250 + $0x678] sm:$0xff]
          %v2878 = vld [vmem:[%s250 + $0x680] sm:$0xff]
          %v2879 = vld [vmem:[%s250 + $0x688] sm:$0xff]
          %v2880 = vld [vmem:[%s250 + $0x690] sm:$0xff]
          %v2881 = vld [vmem:[%s250 + $0x698] sm:$0xff]
          %v2882 = vld [vmem:[%s250 + $0x6a0] sm:$0xff]
          %v2883 = vld [vmem:[%s250 + $0x6a8] sm:$0xff]
          %v2884 = vld [vmem:[%s250 + $0x6b0] sm:$0xff]
          %v2885 = vld [vmem:[%s250 + $0x6b8] sm:$0xff]
          %v2886 = vld [vmem:[%s250 + $0x6c0] sm:$0xff]
          %v2887 = vld [vmem:[%s250 + $0x6c8] sm:$0xff]
          %v2888 = vld [vmem:[%s250 + $0x6d0] sm:$0xff]
          %v2889 = vld [vmem:[%s250 + $0x6d8] sm:$0xff]
          %v2890 = vld [vmem:[%s250 + $0x6e0] sm:$0xff]
          %v2891 = vld [vmem:[%s250 + $0x6e8] sm:$0xff]
          %v2892 = vld [vmem:[%s250 + $0x6f0] sm:$0xff]
          %v2893 = vld [vmem:[%s250 + $0x6f8] sm:$0xff]
          %v2894 = vld [vmem:[%s250 + $0x700] sm:$0xff]
          %v2895 = vld [vmem:[%s250 + $0x708] sm:$0xff]
          %v2896 = vld [vmem:[%s250 + $0x710] sm:$0xff]
          %v2897 = vld [vmem:[%s250 + $0x718] sm:$0xff]
          %v2898 = vld [vmem:[%s250 + $0x720] sm:$0xff]
          %v2899 = vld [vmem:[%s250 + $0x728] sm:$0xff]
          %v2900 = vld [vmem:[%s250 + $0x730] sm:$0xff]
          %v2901 = vld [vmem:[%s250 + $0x738] sm:$0xff]
          %v2902 = vld [vmem:[%s250 + $0x740] sm:$0xff]
          %v2903 = vld [vmem:[%s250 + $0x748] sm:$0xff]
          %v2904 = vld [vmem:[%s250 + $0x750] sm:$0xff]
          %v2905 = vld [vmem:[%s250 + $0x758] sm:$0xff]
          %v2906 = vld [vmem:[%s250 + $0x760] sm:$0xff]
          %v2907 = vld [vmem:[%s250 + $0x768] sm:$0xff]
          %v2908 = vld [vmem:[%s250 + $0x770] sm:$0xff]
          %v2909 = vld [vmem:[%s250 + $0x778] sm:$0xff]
          %v2910 = vld [vmem:[%s250 + $0x780] sm:$0xff]
          %v2911 = vld [vmem:[%s250 + $0x788] sm:$0xff]
          %v2912 = vld [vmem:[%s250 + $0x790] sm:$0xff]
          %v2913 = vld [vmem:[%s250 + $0x798] sm:$0xff]
          %v2914 = vld [vmem:[%s250 + $0x7a0] sm:$0xff]
          %v2915 = vld [vmem:[%s250 + $0x7a8] sm:$0xff]
          %v2916 = vld [vmem:[%s250 + $0x7b0] sm:$0xff]
          %v2917 = vld [vmem:[%s250 + $0x7b8] sm:$0xff]
          %v2918 = vld [vmem:[%s250 + $0x7c0] sm:$0xff]
          %v2919 = vld [vmem:[%s250 + $0x7c8] sm:$0xff]
          %v2920 = vld [vmem:[%s250 + $0x7d0] sm:$0xff]
          %v2921 = vld [vmem:[%s250 + $0x7d8] sm:$0xff]
          %v2922 = vld [vmem:[%s250 + $0x7e0] sm:$0xff]
          %v2923 = vld [vmem:[%s250 + $0x7e8] sm:$0xff]
          %v2924 = vld [vmem:[%s250 + $0x7f0] sm:$0xff]
          %v2925 = vld [vmem:[%s250 + $0x7f8] sm:$0xff]
          %2926 = vst [vmem:[%s291] sm:$0xff] %v2670
          %2927 = vst [vmem:[%s291 + $0x8] sm:$0xff] %v2671
          %2928 = vst [vmem:[%s291 + $0x10] sm:$0xff] %v2672
          %2929 = vst [vmem:[%s291 + $0x18] sm:$0xff] %v2673
          %2930 = vst [vmem:[%s291 + $0x20] sm:$0xff] %v2674
          %2931 = vst [vmem:[%s291 + $0x28] sm:$0xff] %v2675
          %2932 = vst [vmem:[%s291 + $0x30] sm:$0xff] %v2676
          %2933 = vst [vmem:[%s291 + $0x38] sm:$0xff] %v2677
          %2934 = vst [vmem:[%s291 + $0x40] sm:$0xff] %v2678
          %2935 = vst [vmem:[%s291 + $0x48] sm:$0xff] %v2679
          %2936 = vst [vmem:[%s291 + $0x50] sm:$0xff] %v2680
          %2937 = vst [vmem:[%s291 + $0x58] sm:$0xff] %v2681
          %2938 = vst [vmem:[%s291 + $0x60] sm:$0xff] %v2682
          %2939 = vst [vmem:[%s291 + $0x68] sm:$0xff] %v2683
          %2940 = vst [vmem:[%s291 + $0x70] sm:$0xff] %v2684
          %2941 = vst [vmem:[%s291 + $0x78] sm:$0xff] %v2685
          %2942 = vst [vmem:[%s291 + $0x80] sm:$0xff] %v2686
          %2943 = vst [vmem:[%s291 + $0x88] sm:$0xff] %v2687
          %2944 = vst [vmem:[%s291 + $0x90] sm:$0xff] %v2688
          %2945 = vst [vmem:[%s291 + $0x98] sm:$0xff] %v2689
          %2946 = vst [vmem:[%s291 + $0xa0] sm:$0xff] %v2690
          %2947 = vst [vmem:[%s291 + $0xa8] sm:$0xff] %v2691
          %2948 = vst [vmem:[%s291 + $0xb0] sm:$0xff] %v2692
          %2949 = vst [vmem:[%s291 + $0xb8] sm:$0xff] %v2693
          %2950 = vst [vmem:[%s291 + $0xc0] sm:$0xff] %v2694
          %2951 = vst [vmem:[%s291 + $0xc8] sm:$0xff] %v2695
          %2952 = vst [vmem:[%s291 + $0xd0] sm:$0xff] %v2696
          %2953 = vst [vmem:[%s291 + $0xd8] sm:$0xff] %v2697
          %2954 = vst [vmem:[%s291 + $0xe0] sm:$0xff] %v2698
          %2955 = vst [vmem:[%s291 + $0xe8] sm:$0xff] %v2699
          %2956 = vst [vmem:[%s291 + $0xf0] sm:$0xff] %v2700
          %2957 = vst [vmem:[%s291 + $0xf8] sm:$0xff] %v2701
          %2958 = vst [vmem:[%s291 + $0x100] sm:$0xff] %v2702
          %2959 = vst [vmem:[%s291 + $0x108] sm:$0xff] %v2703
          %2960 = vst [vmem:[%s291 + $0x110] sm:$0xff] %v2704
          %2961 = vst [vmem:[%s291 + $0x118] sm:$0xff] %v2705
          %2962 = vst [vmem:[%s291 + $0x120] sm:$0xff] %v2706
          %2963 = vst [vmem:[%s291 + $0x128] sm:$0xff] %v2707
          %2964 = vst [vmem:[%s291 + $0x130] sm:$0xff] %v2708
          %2965 = vst [vmem:[%s291 + $0x138] sm:$0xff] %v2709
          %2966 = vst [vmem:[%s291 + $0x140] sm:$0xff] %v2710
          %2967 = vst [vmem:[%s291 + $0x148] sm:$0xff] %v2711
          %2968 = vst [vmem:[%s291 + $0x150] sm:$0xff] %v2712
          %2969 = vst [vmem:[%s291 + $0x158] sm:$0xff] %v2713
          %2970 = vst [vmem:[%s291 + $0x160] sm:$0xff] %v2714
          %2971 = vst [vmem:[%s291 + $0x168] sm:$0xff] %v2715
          %2972 = vst [vmem:[%s291 + $0x170] sm:$0xff] %v2716
          %2973 = vst [vmem:[%s291 + $0x178] sm:$0xff] %v2717
          %2974 = vst [vmem:[%s291 + $0x180] sm:$0xff] %v2718
          %2975 = vst [vmem:[%s291 + $0x188] sm:$0xff] %v2719
          %2976 = vst [vmem:[%s291 + $0x190] sm:$0xff] %v2720
          %2977 = vst [vmem:[%s291 + $0x198] sm:$0xff] %v2721
          %2978 = vst [vmem:[%s291 + $0x1a0] sm:$0xff] %v2722
          %2979 = vst [vmem:[%s291 + $0x1a8] sm:$0xff] %v2723
          %2980 = vst [vmem:[%s291 + $0x1b0] sm:$0xff] %v2724
          %2981 = vst [vmem:[%s291 + $0x1b8] sm:$0xff] %v2725
          %2982 = vst [vmem:[%s291 + $0x1c0] sm:$0xff] %v2726
          %2983 = vst [vmem:[%s291 + $0x1c8] sm:$0xff] %v2727
          %2984 = vst [vmem:[%s291 + $0x1d0] sm:$0xff] %v2728
          %2985 = vst [vmem:[%s291 + $0x1d8] sm:$0xff] %v2729
          %2986 = vst [vmem:[%s291 + $0x1e0] sm:$0xff] %v2730
          %2987 = vst [vmem:[%s291 + $0x1e8] sm:$0xff] %v2731
          %2988 = vst [vmem:[%s291 + $0x1f0] sm:$0xff] %v2732
          %2989 = vst [vmem:[%s291 + $0x1f8] sm:$0xff] %v2733
          %2990 = vst [vmem:[%s291 + $0x200] sm:$0xff] %v2734
          %2991 = vst [vmem:[%s291 + $0x208] sm:$0xff] %v2735
          %2992 = vst [vmem:[%s291 + $0x210] sm:$0xff] %v2736
          %2993 = vst [vmem:[%s291 + $0x218] sm:$0xff] %v2737
          %2994 = vst [vmem:[%s291 + $0x220] sm:$0xff] %v2738
          %2995 = vst [vmem:[%s291 + $0x228] sm:$0xff] %v2739
          %2996 = vst [vmem:[%s291 + $0x230] sm:$0xff] %v2740
          %2997 = vst [vmem:[%s291 + $0x238] sm:$0xff] %v2741
          %2998 = vst [vmem:[%s291 + $0x240] sm:$0xff] %v2742
          %2999 = vst [vmem:[%s291 + $0x248] sm:$0xff] %v2743
          %3000 = vst [vmem:[%s291 + $0x250] sm:$0xff] %v2744
          %3001 = vst [vmem:[%s291 + $0x258] sm:$0xff] %v2745
          %3002 = vst [vmem:[%s291 + $0x260] sm:$0xff] %v2746
          %3003 = vst [vmem:[%s291 + $0x268] sm:$0xff] %v2747
          %3004 = vst [vmem:[%s291 + $0x270] sm:$0xff] %v2748
          %3005 = vst [vmem:[%s291 + $0x278] sm:$0xff] %v2749
          %3006 = vst [vmem:[%s291 + $0x280] sm:$0xff] %v2750
          %3007 = vst [vmem:[%s291 + $0x288] sm:$0xff] %v2751
          %3008 = vst [vmem:[%s291 + $0x290] sm:$0xff] %v2752
          %3009 = vst [vmem:[%s291 + $0x298] sm:$0xff] %v2753
          %3010 = vst [vmem:[%s291 + $0x2a0] sm:$0xff] %v2754
          %3011 = vst [vmem:[%s291 + $0x2a8] sm:$0xff] %v2755
          %3012 = vst [vmem:[%s291 + $0x2b0] sm:$0xff] %v2756
          %3013 = vst [vmem:[%s291 + $0x2b8] sm:$0xff] %v2757
          %3014 = vst [vmem:[%s291 + $0x2c0] sm:$0xff] %v2758
          %3015 = vst [vmem:[%s291 + $0x2c8] sm:$0xff] %v2759
          %3016 = vst [vmem:[%s291 + $0x2d0] sm:$0xff] %v2760
          %3017 = vst [vmem:[%s291 + $0x2d8] sm:$0xff] %v2761
          %3018 = vst [vmem:[%s291 + $0x2e0] sm:$0xff] %v2762
          %3019 = vst [vmem:[%s291 + $0x2e8] sm:$0xff] %v2763
          %3020 = vst [vmem:[%s291 + $0x2f0] sm:$0xff] %v2764
          %3021 = vst [vmem:[%s291 + $0x2f8] sm:$0xff] %v2765
          %3022 = vst [vmem:[%s291 + $0x300] sm:$0xff] %v2766
          %3023 = vst [vmem:[%s291 + $0x308] sm:$0xff] %v2767
          %3024 = vst [vmem:[%s291 + $0x310] sm:$0xff] %v2768
          %3025 = vst [vmem:[%s291 + $0x318] sm:$0xff] %v2769
          %3026 = vst [vmem:[%s291 + $0x320] sm:$0xff] %v2770
          %3027 = vst [vmem:[%s291 + $0x328] sm:$0xff] %v2771
          %3028 = vst [vmem:[%s291 + $0x330] sm:$0xff] %v2772
          %3029 = vst [vmem:[%s291 + $0x338] sm:$0xff] %v2773
          %3030 = vst [vmem:[%s291 + $0x340] sm:$0xff] %v2774
          %3031 = vst [vmem:[%s291 + $0x348] sm:$0xff] %v2775
          %3032 = vst [vmem:[%s291 + $0x350] sm:$0xff] %v2776
          %3033 = vst [vmem:[%s291 + $0x358] sm:$0xff] %v2777
          %3034 = vst [vmem:[%s291 + $0x360] sm:$0xff] %v2778
          %3035 = vst [vmem:[%s291 + $0x368] sm:$0xff] %v2779
          %3036 = vst [vmem:[%s291 + $0x370] sm:$0xff] %v2780
          %3037 = vst [vmem:[%s291 + $0x378] sm:$0xff] %v2781
          %3038 = vst [vmem:[%s291 + $0x380] sm:$0xff] %v2782
          %3039 = vst [vmem:[%s291 + $0x388] sm:$0xff] %v2783
          %3040 = vst [vmem:[%s291 + $0x390] sm:$0xff] %v2784
          %3041 = vst [vmem:[%s291 + $0x398] sm:$0xff] %v2785
          %3042 = vst [vmem:[%s291 + $0x3a0] sm:$0xff] %v2786
          %3043 = vst [vmem:[%s291 + $0x3a8] sm:$0xff] %v2787
          %3044 = vst [vmem:[%s291 + $0x3b0] sm:$0xff] %v2788
          %3045 = vst [vmem:[%s291 + $0x3b8] sm:$0xff] %v2789
          %3046 = vst [vmem:[%s291 + $0x3c0] sm:$0xff] %v2790
          %3047 = vst [vmem:[%s291 + $0x3c8] sm:$0xff] %v2791
          %3048 = vst [vmem:[%s291 + $0x3d0] sm:$0xff] %v2792
          %3049 = vst [vmem:[%s291 + $0x3d8] sm:$0xff] %v2793
          %3050 = vst [vmem:[%s291 + $0x3e0] sm:$0xff] %v2794
          %3051 = vst [vmem:[%s291 + $0x3e8] sm:$0xff] %v2795
          %3052 = vst [vmem:[%s291 + $0x3f0] sm:$0xff] %v2796
          %3053 = vst [vmem:[%s291 + $0x3f8] sm:$0xff] %v2797
          %3054 = vst [vmem:[%s291 + $0x400] sm:$0xff] %v2798
          %3055 = vst [vmem:[%s291 + $0x408] sm:$0xff] %v2799
          %3056 = vst [vmem:[%s291 + $0x410] sm:$0xff] %v2800
          %3057 = vst [vmem:[%s291 + $0x418] sm:$0xff] %v2801
          %3058 = vst [vmem:[%s291 + $0x420] sm:$0xff] %v2802
          %3059 = vst [vmem:[%s291 + $0x428] sm:$0xff] %v2803
          %3060 = vst [vmem:[%s291 + $0x430] sm:$0xff] %v2804
          %3061 = vst [vmem:[%s291 + $0x438] sm:$0xff] %v2805
          %3062 = vst [vmem:[%s291 + $0x440] sm:$0xff] %v2806
          %3063 = vst [vmem:[%s291 + $0x448] sm:$0xff] %v2807
          %3064 = vst [vmem:[%s291 + $0x450] sm:$0xff] %v2808
          %3065 = vst [vmem:[%s291 + $0x458] sm:$0xff] %v2809
          %3066 = vst [vmem:[%s291 + $0x460] sm:$0xff] %v2810
          %3067 = vst [vmem:[%s291 + $0x468] sm:$0xff] %v2811
          %3068 = vst [vmem:[%s291 + $0x470] sm:$0xff] %v2812
          %3069 = vst [vmem:[%s291 + $0x478] sm:$0xff] %v2813
          %3070 = vst [vmem:[%s291 + $0x480] sm:$0xff] %v2814
          %3071 = vst [vmem:[%s291 + $0x488] sm:$0xff] %v2815
          %3072 = vst [vmem:[%s291 + $0x490] sm:$0xff] %v2816
          %3073 = vst [vmem:[%s291 + $0x498] sm:$0xff] %v2817
          %3074 = vst [vmem:[%s291 + $0x4a0] sm:$0xff] %v2818
          %3075 = vst [vmem:[%s291 + $0x4a8] sm:$0xff] %v2819
          %3076 = vst [vmem:[%s291 + $0x4b0] sm:$0xff] %v2820
          %3077 = vst [vmem:[%s291 + $0x4b8] sm:$0xff] %v2821
          %3078 = vst [vmem:[%s291 + $0x4c0] sm:$0xff] %v2822
          %3079 = vst [vmem:[%s291 + $0x4c8] sm:$0xff] %v2823
          %3080 = vst [vmem:[%s291 + $0x4d0] sm:$0xff] %v2824
          %3081 = vst [vmem:[%s291 + $0x4d8] sm:$0xff] %v2825
          %3082 = vst [vmem:[%s291 + $0x4e0] sm:$0xff] %v2826
          %3083 = vst [vmem:[%s291 + $0x4e8] sm:$0xff] %v2827
          %3084 = vst [vmem:[%s291 + $0x4f0] sm:$0xff] %v2828
          %3085 = vst [vmem:[%s291 + $0x4f8] sm:$0xff] %v2829
          %3086 = vst [vmem:[%s291 + $0x500] sm:$0xff] %v2830
          %3087 = vst [vmem:[%s291 + $0x508] sm:$0xff] %v2831
          %3088 = vst [vmem:[%s291 + $0x510] sm:$0xff] %v2832
          %3089 = vst [vmem:[%s291 + $0x518] sm:$0xff] %v2833
          %3090 = vst [vmem:[%s291 + $0x520] sm:$0xff] %v2834
          %3091 = vst [vmem:[%s291 + $0x528] sm:$0xff] %v2835
          %3092 = vst [vmem:[%s291 + $0x530] sm:$0xff] %v2836
          %3093 = vst [vmem:[%s291 + $0x538] sm:$0xff] %v2837
          %3094 = vst [vmem:[%s291 + $0x540] sm:$0xff] %v2838
          %3095 = vst [vmem:[%s291 + $0x548] sm:$0xff] %v2839
          %3096 = vst [vmem:[%s291 + $0x550] sm:$0xff] %v2840
          %3097 = vst [vmem:[%s291 + $0x558] sm:$0xff] %v2841
          %3098 = vst [vmem:[%s291 + $0x560] sm:$0xff] %v2842
          %3099 = vst [vmem:[%s291 + $0x568] sm:$0xff] %v2843
          %3100 = vst [vmem:[%s291 + $0x570] sm:$0xff] %v2844
          %3101 = vst [vmem:[%s291 + $0x578] sm:$0xff] %v2845
          %3102 = vst [vmem:[%s291 + $0x580] sm:$0xff] %v2846
          %3103 = vst [vmem:[%s291 + $0x588] sm:$0xff] %v2847
          %3104 = vst [vmem:[%s291 + $0x590] sm:$0xff] %v2848
          %3105 = vst [vmem:[%s291 + $0x598] sm:$0xff] %v2849
          %3106 = vst [vmem:[%s291 + $0x5a0] sm:$0xff] %v2850
          %3107 = vst [vmem:[%s291 + $0x5a8] sm:$0xff] %v2851
          %3108 = vst [vmem:[%s291 + $0x5b0] sm:$0xff] %v2852
          %3109 = vst [vmem:[%s291 + $0x5b8] sm:$0xff] %v2853
          %3110 = vst [vmem:[%s291 + $0x5c0] sm:$0xff] %v2854
          %3111 = vst [vmem:[%s291 + $0x5c8] sm:$0xff] %v2855
          %3112 = vst [vmem:[%s291 + $0x5d0] sm:$0xff] %v2856
          %3113 = vst [vmem:[%s291 + $0x5d8] sm:$0xff] %v2857
          %3114 = vst [vmem:[%s291 + $0x5e0] sm:$0xff] %v2858
          %3115 = vst [vmem:[%s291 + $0x5e8] sm:$0xff] %v2859
          %3116 = vst [vmem:[%s291 + $0x5f0] sm:$0xff] %v2860
          %3117 = vst [vmem:[%s291 + $0x5f8] sm:$0xff] %v2861
          %3118 = vst [vmem:[%s291 + $0x600] sm:$0xff] %v2862
          %3119 = vst [vmem:[%s291 + $0x608] sm:$0xff] %v2863
          %3120 = vst [vmem:[%s291 + $0x610] sm:$0xff] %v2864
          %3121 = vst [vmem:[%s291 + $0x618] sm:$0xff] %v2865
          %3122 = vst [vmem:[%s291 + $0x620] sm:$0xff] %v2866
          %3123 = vst [vmem:[%s291 + $0x628] sm:$0xff] %v2867
          %3124 = vst [vmem:[%s291 + $0x630] sm:$0xff] %v2868
          %3125 = vst [vmem:[%s291 + $0x638] sm:$0xff] %v2869
          %3126 = vst [vmem:[%s291 + $0x640] sm:$0xff] %v2870
          %3127 = vst [vmem:[%s291 + $0x648] sm:$0xff] %v2871
          %3128 = vst [vmem:[%s291 + $0x650] sm:$0xff] %v2872
          %3129 = vst [vmem:[%s291 + $0x658] sm:$0xff] %v2873
          %3130 = vst [vmem:[%s291 + $0x660] sm:$0xff] %v2874
          %3131 = vst [vmem:[%s291 + $0x668] sm:$0xff] %v2875
          %3132 = vst [vmem:[%s291 + $0x670] sm:$0xff] %v2876
          %3133 = vst [vmem:[%s291 + $0x678] sm:$0xff] %v2877
          %3134 = vst [vmem:[%s291 + $0x680] sm:$0xff] %v2878
          %3135 = vst [vmem:[%s291 + $0x688] sm:$0xff] %v2879
          %3136 = vst [vmem:[%s291 + $0x690] sm:$0xff] %v2880
          %3137 = vst [vmem:[%s291 + $0x698] sm:$0xff] %v2881
          %3138 = vst [vmem:[%s291 + $0x6a0] sm:$0xff] %v2882
          %3139 = vst [vmem:[%s291 + $0x6a8] sm:$0xff] %v2883
          %3140 = vst [vmem:[%s291 + $0x6b0] sm:$0xff] %v2884
          %3141 = vst [vmem:[%s291 + $0x6b8] sm:$0xff] %v2885
          %3142 = vst [vmem:[%s291 + $0x6c0] sm:$0xff] %v2886
          %3143 = vst [vmem:[%s291 + $0x6c8] sm:$0xff] %v2887
          %3144 = vst [vmem:[%s291 + $0x6d0] sm:$0xff] %v2888
          %3145 = vst [vmem:[%s291 + $0x6d8] sm:$0xff] %v2889
          %3146 = vst [vmem:[%s291 + $0x6e0] sm:$0xff] %v2890
          %3147 = vst [vmem:[%s291 + $0x6e8] sm:$0xff] %v2891
          %3148 = vst [vmem:[%s291 + $0x6f0] sm:$0xff] %v2892
          %3149 = vst [vmem:[%s291 + $0x6f8] sm:$0xff] %v2893
          %3150 = vst [vmem:[%s291 + $0x700] sm:$0xff] %v2894
          %3151 = vst [vmem:[%s291 + $0x708] sm:$0xff] %v2895
          %3152 = vst [vmem:[%s291 + $0x710] sm:$0xff] %v2896
          %3153 = vst [vmem:[%s291 + $0x718] sm:$0xff] %v2897
          %3154 = vst [vmem:[%s291 + $0x720] sm:$0xff] %v2898
          %3155 = vst [vmem:[%s291 + $0x728] sm:$0xff] %v2899
          %3156 = vst [vmem:[%s291 + $0x730] sm:$0xff] %v2900
          %3157 = vst [vmem:[%s291 + $0x738] sm:$0xff] %v2901
          %3158 = vst [vmem:[%s291 + $0x740] sm:$0xff] %v2902
          %3159 = vst [vmem:[%s291 + $0x748] sm:$0xff] %v2903
          %3160 = vst [vmem:[%s291 + $0x750] sm:$0xff] %v2904
          %3161 = vst [vmem:[%s291 + $0x758] sm:$0xff] %v2905
          %3162 = vst [vmem:[%s291 + $0x760] sm:$0xff] %v2906
          %3163 = vst [vmem:[%s291 + $0x768] sm:$0xff] %v2907
          %3164 = vst [vmem:[%s291 + $0x770] sm:$0xff] %v2908
          %3165 = vst [vmem:[%s291 + $0x778] sm:$0xff] %v2909
          %3166 = vst [vmem:[%s291 + $0x780] sm:$0xff] %v2910
          %3167 = vst [vmem:[%s291 + $0x788] sm:$0xff] %v2911
          %3168 = vst [vmem:[%s291 + $0x790] sm:$0xff] %v2912
          %3169 = vst [vmem:[%s291 + $0x798] sm:$0xff] %v2913
          %3170 = vst [vmem:[%s291 + $0x7a0] sm:$0xff] %v2914
          %3171 = vst [vmem:[%s291 + $0x7a8] sm:$0xff] %v2915
          %3172 = vst [vmem:[%s291 + $0x7b0] sm:$0xff] %v2916
          %3173 = vst [vmem:[%s291 + $0x7b8] sm:$0xff] %v2917
          %3174 = vst [vmem:[%s291 + $0x7c0] sm:$0xff] %v2918
          %3175 = vst [vmem:[%s291 + $0x7c8] sm:$0xff] %v2919
          %3176 = vst [vmem:[%s291 + $0x7d0] sm:$0xff] %v2920
          %3177 = vst [vmem:[%s291 + $0x7d8] sm:$0xff] %v2921
          %3178 = vst [vmem:[%s291 + $0x7e0] sm:$0xff] %v2922
          %3179 = vst [vmem:[%s291 + $0x7e8] sm:$0xff] %v2923
          %3180 = vst [vmem:[%s291 + $0x7f0] sm:$0xff] %v2924
          %3181 = vst [vmem:[%s291 + $0x7f8] sm:$0xff] %v2925
        $region52: #{tpu_custom_call.1} parent=35 // pred_fallthru
          _
        %s3182 = sand.u32 %s152, 1
        %s3183 = scalar_lea.sflag [#allocation6], %s3182
        %s3184 = sand.u32 %s152, 1
        %s3185 = smul.addr %s3184, 2048
        %s3186 = scalar_lea.vmem [#allocation9], %s3185
        // Predicated region
        $region53: #{tpu_custom_call.1} parent=35 // pred_check
          %p3187 = pneg %p162
        $region54: #{tpu_custom_call.1} parent=35 // pred_check_branch
          %3189 = sbr.rel (%p3187) target = $region56
        $region55: #{tpu_custom_call.1} parent=35 // pred_region
          %s3190 = smul.u32 128, %s32
          %s3192 = ssub.s32 32768, 32768
          %3193 = vsyncadd %s3183, %s3192
          %s3194 = smul.addr %s3190, 2
          %s3195 = smul.addr %s31, 1024
          %s3196 = sadd.s32 %s3194, %s3195
          %s3197 = smul.addr %s3196, 128
          %s3198 = scalar_lea.hbm %s5, %s3197
          %s3199 = sshll.u32 %s3186, 4
          %s3200 = int_to_ptr.vmem [resolvable:$true] %s3199
          %3205 = dma.vmem_to_hbm [thread:$0]  %s3200, 32768, %s3198, %s3183, 256, 256, 16
        $region56: #{tpu_custom_call.1} parent=35 // pred_fallthru
          _
      $region36: #{tpu_custom_call.1} parent=5 // pred_fallthru
        _
      %p3206 = scmp.le.s32.totalorder 2, %s22
      // Predicated region
      $region57: #{tpu_custom_call.1} parent=5 // pred_check
        %p3207 = pneg %p3206
      $region58: #{tpu_custom_call.1} parent=5 // pred_check_branch
        %3209 = sbr.rel (%p3207) target = $region60
      $region59: #{tpu_custom_call.1} parent=5 // pred_region
        %s3210 = ssub.s32 %s22, 2
        // Predicated region
        $region61: #{tpu_custom_call.1} parent=59 // pred_check
          %p3211 = pneg %p168
        $region62: #{tpu_custom_call.1} parent=59 // pred_check_branch
          %3213 = sbr.rel (%p3211) target = $region64
        $region63: #{tpu_custom_call.1} parent=59 // pred_region
          %s3214 = sand.u32 %s153, 1
          %s3215 = scalar_lea.sflag [#allocation6], %s3214
          %s3216 = sand.u32 %s153, 1
          %s3217 = smul.addr %s3216, 2048
          %s3218 = scalar_lea.vmem [#allocation9], %s3217
          %3219 = dma.done %s3215, 32768
        $region64: #{tpu_custom_call.1} parent=59 // pred_fallthru
          _
      $region60: #{tpu_custom_call.1} parent=5 // pred_fallthru
        _
    $region6: #{tpu_custom_call.1} parent=1 // loop_footer
      %s26 = sadd.s32 1, %s22
    $region7: #{tpu_custom_call.1} parent=1 // loop_footer_branch
      %21 = sbr.rel target = $region3
    $region8: #{tpu_custom_call.1} parent=1 // loop_exit
      _
    %3220 = vsyncpa [#allocation5], 1
    %s3221 = scalar_lea.sflag [#allocation5], 1
    %3222 = vsyncpa %s3221, 1
    %3223 = vsyncpa [#allocation8], 1
    %3224 = vsyncpa [#allocation6], 1
    %s3225 = scalar_lea.sflag [#allocation6], 1
    %3226 = vsyncpa %s3225, 1

</llo_original>
